<compile_context>
chip_gen: v5e
topology: v5e:2x2
jax: 0.10.0
libtpu: 0.0.40
codegen_flags: <defaults>
</compile_context>

<pallas_src>
import math

import jax
import jax.numpy as jnp
from jax.experimental import pallas as pl
from jax.experimental.pallas import tpu as pltpu

FC1_DIM = 128        # nn.Linear(hidden_size, 128)
PAD_CLASSES = 128    # fc2 output padded to a full 128-lane block (lane-dense store)
LN_EPS = 1e-12
NEG_INF = -1e9

_VMEM = pl.BlockSpec(memory_space=pltpu.MemorySpace.VMEM)


# -----------------------------------------------------------------------------
# In-kernel math helpers (f32 VPU/EUP work)
# -----------------------------------------------------------------------------
def _layer_norm(x, g, b):
    mean = jnp.mean(x, axis=-1, keepdims=True)
    var = jnp.mean((x - mean) ** 2, axis=-1, keepdims=True)
    return (x - mean) * jax.lax.rsqrt(var + LN_EPS) * g + b


def _erf(x):
    # Abramowitz & Stegun 7.1.26 (|err| < 1.5e-7): exact-erf GELU at f32 precision,
    # built from exp/mul/add only so it lowers cleanly on the TPU VPU/EUP.
    a1, a2, a3, a4, a5 = 0.254829592, -0.284496736, 1.421413741, -1.453152027, 1.061405429
    p = 0.3275911
    sgn = jnp.where(x >= 0.0, 1.0, -1.0)
    ax = jnp.abs(x)
    t = 1.0 / (1.0 + p * ax)
    poly = ((((a5 * t + a4) * t + a3) * t + a2) * t + a1) * t
    return sgn * (1.0 - poly * jnp.exp(-ax * ax))


def _gelu_exact(x):
    return 0.5 * x * (1.0 + _erf(x * 0.7071067811865476))


# -----------------------------------------------------------------------------
# Fused BERT encoder: grid axis = layer; weights picked by index_map; activation
# carried across layers in the resident (revisited) output block.
# -----------------------------------------------------------------------------
def _encoder_kernel(BS, H, nH):
    d = H // nH
    scale = 1.0 / math.sqrt(d)

    def kernel(x_ref, bias_ref, embg_ref, embb_ref,
               wqkv_ref, bqkv_ref, wo_ref, bo_ref, ln1g_ref, ln1b_ref,
               wi_ref, bi_ref, wf_ref, bf_ref, ln2g_ref, ln2b_ref,
               o_ref, qkv_s, ctx_s):
        layer = pl.program_id(0)

        @pl.when(layer == 0)
        def _():
            # Embeddings LayerNorm fused into the first grid step (seeds the
            # resident activation).
            o_ref[...] = _layer_norm(x_ref[...].astype(jnp.float32),
                                     embg_ref[...], embb_ref[...])

        x = o_ref[...]                          # [B*S, H] f32, resident in VMEM

        # --- fused QKV projection (bf16 operands, f32 accumulation) ---
        qkv_s[...] = (jnp.dot(x.astype(jnp.bfloat16), wqkv_ref[...],
                              preferred_element_type=jnp.float32) + bqkv_ref[...])

        # --- self-attention: single [BS, BS] score matmul per head; batches are
        #     separated by the block-diagonal additive bias (cross-batch / padded
        #     keys are already -1e9 in bias_ref) ---
        bias = bias_ref[...]
        for h in range(nH):                     # tiny static loop (nH = 4)
            q = qkv_s[:, h * d:(h + 1) * d].astype(jnp.bfloat16)
            k = qkv_s[:, H + h * d:H + (h + 1) * d].astype(jnp.bfloat16)
            v = qkv_s[:, 2 * H + h * d:2 * H + (h + 1) * d].astype(jnp.bfloat16)
            s = jax.lax.dot_general(q, k, (((1,), (1,)), ((), ())),
                                    preferred_element_type=jnp.float32) * scale
            s = s + bias
            s = s - jnp.max(s, axis=-1, keepdims=True)
            p = jnp.exp(s)
            p = p * pl.reciprocal(jnp.sum(p, axis=-1, keepdims=True), approx=True)
            ctx_s[:, h * d:(h + 1) * d] = jnp.dot(
                p.astype(jnp.bfloat16), v, preferred_element_type=jnp.float32)

        # --- output projection + residual + LayerNorm ---
        attn = (jnp.dot(ctx_s[...].astype(jnp.bfloat16), wo_ref[...],
                        preferred_element_type=jnp.float32) + bo_ref[...])
        x1 = _layer_norm(x + attn, ln1g_ref[...], ln1b_ref[...])

        # --- FFN (exact-erf GELU) + residual + LayerNorm ---
        hmid = (jnp.dot(x1.astype(jnp.bfloat16), wi_ref[...],
                        preferred_element_type=jnp.float32) + bi_ref[...])
        hmid = _gelu_exact(hmid)
        ffn = (jnp.dot(hmid.astype(jnp.bfloat16), wf_ref[...],
                       preferred_element_type=jnp.float32) + bf_ref[...])
        o_ref[...] = _layer_norm(x1 + ffn, ln2g_ref[...], ln2b_ref[...])

    return kernel


def pallas_encoder(x2, attn_bias, params, cfg):
    BS, H = x2.shape
    nH, I, L = cfg["heads"], cfg["inter"], cfg["layers"]

    def w_spec(d0, d1):     # stacked per-layer weight: pick layer l, full last two dims
        return pl.BlockSpec((None, d0, d1), lambda l: (l, 0, 0))

    def full_spec(shape):   # same whole block every layer (stays resident in VMEM)
        return pl.BlockSpec(shape, lambda l: (0,) * len(shape))

    return pl.pallas_call(
        _encoder_kernel(BS, H, nH),
        out_shape=jax.ShapeDtypeStruct((BS, H), jnp.float32),
        grid=(L,),
        in_specs=[
            full_spec((BS, H)), full_spec((BS, BS)),
            full_spec((1, H)), full_spec((1, H)),
            w_spec(H, 3 * H), w_spec(1, 3 * H),
            w_spec(H, H), w_spec(1, H),
            w_spec(1, H), w_spec(1, H),
            w_spec(H, I), w_spec(1, I),
            w_spec(I, H), w_spec(1, H),
            w_spec(1, H), w_spec(1, H),
        ],
        out_specs=full_spec((BS, H)),
        scratch_shapes=[pltpu.VMEM((BS, 3 * H), jnp.float32),   # qkv
                        pltpu.VMEM((BS, H), jnp.float32)],      # attention context
        compiler_params=pltpu.CompilerParams(dimension_semantics=("arbitrary",)),
    )(x2, attn_bias, params["emb_ln_g"], params["emb_ln_b"],
      params["wqkv"], params["bqkv"], params["wo"], params["bo"],
      params["ln1_g"], params["ln1_b"], params["wi"], params["bi"],
      params["wf"], params["bf"], params["ln2_g"], params["ln2_b"])


# -----------------------------------------------------------------------------
# Fused classification head (pooler tanh -> fc1 relu -> fc2, lane-dense output)
# -----------------------------------------------------------------------------
def _head_kernel(cls_ref, pw_ref, pb_ref, w1_ref, b1_ref, w2_ref, b2_ref, o_ref):
    cls = cls_ref[...].astype(jnp.bfloat16)
    pooled = jnp.tanh(jnp.dot(cls, pw_ref[...],
                              preferred_element_type=jnp.float32) + pb_ref[...])
    inter = jnp.maximum(jnp.dot(pooled.astype(jnp.bfloat16), w1_ref[...],
                                preferred_element_type=jnp.float32) + b1_ref[...], 0.0)
    o_ref[...] = (jnp.dot(inter.astype(jnp.bfloat16), w2_ref[...],
                          preferred_element_type=jnp.float32) + b2_ref[...])


def pallas_head(cls, params):
    B = cls.shape[0]
    return pl.pallas_call(
        _head_kernel,
        out_shape=jax.ShapeDtypeStruct((B, PAD_CLASSES), jnp.float32),
        in_specs=[_VMEM] * 7,
        out_specs=_VMEM,
    )(cls, params["pool_w"], params["pool_b"], params["fc1_w"], params["fc1_b"],
      params["fc2_w_pad"], params["fc2_b_pad"])


# -----------------------------------------------------------------------------
# Additive attention bias [B*S, B*S]: 0 where (same batch AND key valid), else -1e9.
# Built once in plain JAX; merges the batch dim into one score matmul per head.
# -----------------------------------------------------------------------------
def build_attn_bias(attention_mask):
    B, S = attention_mask.shape
    key_ok = attention_mask.reshape(-1).astype(jnp.float32)            # [B*S]
    bid = jnp.repeat(jnp.arange(B), S)                                  # [B*S]
    same = (bid[:, None] == bid[None, :]).astype(jnp.float32)           # [BS, BS]
    return (1.0 - same * key_ok[None, :]) * NEG_INF


# -----------------------------------------------------------------------------
# Parameters (deterministic synthetic init; MXU weights stored in bf16)
# -----------------------------------------------------------------------------
def init_params(key, cfg):
    H, I, L, nc = cfg["hidden"], cfg["inter"], cfg["layers"], cfg["num_classes"]
    ks = jax.random.split(key, 10)
    std = 0.02

    def nrm(k, shape, dtype=jnp.float32):
        return (jax.random.normal(k, shape, jnp.float32) * std).astype(dtype)

    params = {
        "word_emb": nrm(ks[0], (cfg["vocab"], H)),
        "pos_emb": nrm(ks[1], (cfg["max_pos"], H)),
        "type_emb": nrm(ks[2], (cfg["type_vocab"], H)),
        "emb_ln_g": jnp.ones((1, H), jnp.float32),
        "emb_ln_b": jnp.zeros((1, H), jnp.float32),
        # stacked encoder weights, leading [L] axis; MXU weights in bf16
        "wqkv": nrm(ks[3], (L, H, 3 * H), jnp.bfloat16),
        "bqkv": jnp.zeros((L, 1, 3 * H), jnp.float32),
        "wo": nrm(ks[4], (L, H, H), jnp.bfloat16),
        "bo": jnp.zeros((L, 1, H), jnp.float32),
        "ln1_g": jnp.ones((L, 1, H), jnp.float32),
        "ln1_b": jnp.zeros((L, 1, H), jnp.float32),
        "wi": nrm(ks[5], (L, H, I), jnp.bfloat16),
        "bi": jnp.zeros((L, 1, I), jnp.float32),
        "wf": nrm(ks[6], (L, I, H), jnp.bfloat16),
        "bf": jnp.zeros((L, 1, H), jnp.float32),
        "ln2_g": jnp.ones((L, 1, H), jnp.float32),
        "ln2_b": jnp.zeros((L, 1, H), jnp.float32),
        # pooler + classification head
        "pool_w": nrm(ks[7], (H, H), jnp.bfloat16),
        "pool_b": jnp.zeros((1, H), jnp.float32),
        "fc1_w": nrm(ks[8], (H, FC1_DIM), jnp.bfloat16),
        "fc1_b": jnp.zeros((1, FC1_DIM), jnp.float32),
    }
    fc2_w = jax.random.normal(ks[9], (FC1_DIM, nc), jnp.float32) * std
    params["fc2_w_pad"] = (jnp.zeros((FC1_DIM, PAD_CLASSES), jnp.float32)
                           .at[:, :nc].set(fc2_w).astype(jnp.bfloat16))
    params["fc2_b_pad"] = jnp.zeros((1, PAD_CLASSES), jnp.float32)
    return params


# -----------------------------------------------------------------------------
# Forward pass (mirrors AIGTClassifier.forward; dropout is identity at inference)
# -----------------------------------------------------------------------------
def aigt_classifier_forward(params, input_ids, attention_mask, cfg):
    B, S = input_ids.shape
    H = cfg["hidden"]

    # TODO(synk): embedding-table gathers (word/pos/type) stay in plain JAX glue.
    token_type_ids = jnp.zeros((B, S), jnp.int32)
    x = (params["word_emb"][input_ids]
         + params["pos_emb"][jnp.arange(S)][None, :, :]
         + params["type_emb"][token_type_ids])
    x2 = x.reshape(B * S, H)

    bias = build_attn_bias(attention_mask)          # [B*S, B*S] additive mask

    # BERT encoder (embeddings LN fused at layer 0): one pallas_call over layers.
    x2 = pallas_encoder(x2, bias, params, cfg)

    # pooler (tanh on [CLS]) + fc1/relu + fc2, fused; slice padded classes.
    cls = x2.reshape(B, S, H)[:, 0, :]
    logits_pad = pallas_head(cls, params)
    return logits_pad[:, :cfg["num_classes"]]


# -----------------------------------------------------------------------------
if __name__ == "__main__":
    cfg = dict(vocab=128, hidden=128, heads=4, layers=2, inter=512,
               max_pos=64, type_vocab=2, num_classes=5)  # num_classes = len(label_to_index)

    key = jax.random.PRNGKey(0)
    k_params, k_ids = jax.random.split(key)
    params = init_params(k_params, cfg)

    B, S = 2, 16
    input_ids = jax.random.randint(k_ids, (B, S), 0, cfg["vocab"], dtype=jnp.int32)
    attention_mask = jnp.concatenate(
        [jnp.ones((1, S), jnp.int32),
         jnp.concatenate([jnp.ones((1, 10), jnp.int32),
                          jnp.zeros((1, S - 10), jnp.int32)], axis=1)], axis=0)

    fwd = jax.jit(lambda p, ids, m: aigt_classifier_forward(p, ids, m, cfg))
    logits = fwd(params, input_ids, attention_mask)
    jax.block_until_ready(logits)
    assert logits.shape == (B, cfg["num_classes"])
    assert bool(jnp.all(jnp.isfinite(logits)))
    print("KERNEL_OK")
</pallas_src>

<mosaic_0001>
module attributes {stable_mosaic.version = 11 : i64} {
  func.func @_head_kernel(%arg0: memref<2x128xf32, #tpu.memory_space<vmem>>, %arg1: memref<128x128xbf16, #tpu.memory_space<vmem>>, %arg2: memref<1x128xf32, #tpu.memory_space<vmem>>, %arg3: memref<128x128xbf16, #tpu.memory_space<vmem>>, %arg4: memref<1x128xf32, #tpu.memory_space<vmem>>, %arg5: memref<128x128xbf16, #tpu.memory_space<vmem>>, %arg6: memref<1x128xf32, #tpu.memory_space<vmem>>, %arg7: memref<2x128xf32, #tpu.memory_space<vmem>>) attributes {dimension_semantics = [], scalar_prefetch = 0 : i64, scratch_operands = 0 : i64, tpu.core_type = #tpu.core_type<tc>} {
    %c0 = arith.constant 0 : index
    %c0_0 = arith.constant 0 : index
    %0 = vector.load %arg0[%c0, %c0_0] : memref<2x128xf32, #tpu.memory_space<vmem>>, vector<2x128xf32>
    %1 = arith.truncf %0 : vector<2x128xf32> to vector<2x128xbf16>
    %c0_1 = arith.constant 0 : index
    %c0_2 = arith.constant 0 : index
    %2 = vector.load %arg1[%c0_1, %c0_2] : memref<128x128xbf16, #tpu.memory_space<vmem>>, vector<128x128xbf16>
    %cst = arith.constant dense<0.000000e+00> : vector<2x128xf32>
    %3 = tpu.matmul %1, %2, %cst {dimension_numbers = #tpu.dot_dimension_numbers<[1], [0], [0], [1], [0, 0, 1, 1], [], []>} : vector<2x128xbf16>, vector<128x128xbf16>, vector<2x128xf32> -> vector<2x128xf32>
    %c0_3 = arith.constant 0 : index
    %c0_4 = arith.constant 0 : index
    %4 = vector.load %arg2[%c0_3, %c0_4] : memref<1x128xf32, #tpu.memory_space<vmem>>, vector<1x128xf32>
    %5 = vector.broadcast %4 : vector<1x128xf32> to vector<2x128xf32>
    %6 = arith.addf %3, %5 : vector<2x128xf32>
    %7 = math.tanh %6 : vector<2x128xf32>
    %8 = arith.truncf %7 : vector<2x128xf32> to vector<2x128xbf16>
    %c0_5 = arith.constant 0 : index
    %c0_6 = arith.constant 0 : index
    %9 = vector.load %arg3[%c0_5, %c0_6] : memref<128x128xbf16, #tpu.memory_space<vmem>>, vector<128x128xbf16>
    %cst_7 = arith.constant dense<0.000000e+00> : vector<2x128xf32>
    %10 = tpu.matmul %8, %9, %cst_7 {dimension_numbers = #tpu.dot_dimension_numbers<[1], [0], [0], [1], [0, 0, 1, 1], [], []>} : vector<2x128xbf16>, vector<128x128xbf16>, vector<2x128xf32> -> vector<2x128xf32>
    %c0_8 = arith.constant 0 : index
    %c0_9 = arith.constant 0 : index
    %11 = vector.load %arg4[%c0_8, %c0_9] : memref<1x128xf32, #tpu.memory_space<vmem>>, vector<1x128xf32>
    %12 = vector.broadcast %11 : vector<1x128xf32> to vector<2x128xf32>
    %13 = arith.addf %10, %12 : vector<2x128xf32>
    %cst_10 = arith.constant 0.000000e+00 : f32
    %14 = vector.broadcast %cst_10 : f32 to vector<2x128xf32>
    %15 = arith.maximumf %13, %14 : vector<2x128xf32>
    %16 = arith.truncf %15 : vector<2x128xf32> to vector<2x128xbf16>
    %c0_11 = arith.constant 0 : index
    %c0_12 = arith.constant 0 : index
    %17 = vector.load %arg5[%c0_11, %c0_12] : memref<128x128xbf16, #tpu.memory_space<vmem>>, vector<128x128xbf16>
    %cst_13 = arith.constant dense<0.000000e+00> : vector<2x128xf32>
    %18 = tpu.matmul %16, %17, %cst_13 {dimension_numbers = #tpu.dot_dimension_numbers<[1], [0], [0], [1], [0, 0, 1, 1], [], []>} : vector<2x128xbf16>, vector<128x128xbf16>, vector<2x128xf32> -> vector<2x128xf32>
    %c0_14 = arith.constant 0 : index
    %c0_15 = arith.constant 0 : index
    %19 = vector.load %arg6[%c0_14, %c0_15] : memref<1x128xf32, #tpu.memory_space<vmem>>, vector<1x128xf32>
    %20 = vector.broadcast %19 : vector<1x128xf32> to vector<2x128xf32>
    %21 = arith.addf %18, %20 : vector<2x128xf32>
    %c0_16 = arith.constant 0 : index
    %c0_17 = arith.constant 0 : index
    %22 = vector.load %arg7[%c0_16, %c0_17] : memref<2x128xf32, #tpu.memory_space<vmem>>, vector<2x128xf32>
    tpu.vector_store %arg7[%c0_16, %c0_17], %21 {strides = array<i32>} : memref<2x128xf32, #tpu.memory_space<vmem>>, vector<2x128xf32>,
    return
  }
}

module attributes {stable_mosaic.version = 11 : i64} {
  func.func @kernel(%arg0: i32, %arg1: memref<32x128xf32, #tpu.memory_space<vmem>>, %arg2: memref<32x32xf32, #tpu.memory_space<vmem>>, %arg3: memref<1x128xf32, #tpu.memory_space<vmem>>, %arg4: memref<1x128xf32, #tpu.memory_space<vmem>>, %arg5: memref<1x128x384xbf16, #tpu.memory_space<vmem>>, %arg6: memref<1x1x384xf32, #tpu.memory_space<vmem>>, %arg7: memref<1x128x128xbf16, #tpu.memory_space<vmem>>, %arg8: memref<1x1x128xf32, #tpu.memory_space<vmem>>, %arg9: memref<1x1x128xf32, #tpu.memory_space<vmem>>, %arg10: memref<1x1x128xf32, #tpu.memory_space<vmem>>, %arg11: memref<1x128x512xbf16, #tpu.memory_space<vmem>>, %arg12: memref<1x1x512xf32, #tpu.memory_space<vmem>>, %arg13: memref<1x512x128xbf16, #tpu.memory_space<vmem>>, %arg14: memref<1x1x128xf32, #tpu.memory_space<vmem>>, %arg15: memref<1x1x128xf32, #tpu.memory_space<vmem>>, %arg16: memref<1x1x128xf32, #tpu.memory_space<vmem>>, %arg17: memref<32x128xf32, #tpu.memory_space<vmem>>, %arg18: memref<32x384xf32, #tpu.memory_space<vmem>>, %arg19: memref<32x128xf32, #tpu.memory_space<vmem>>) attributes {dimension_semantics = [#tpu.dimension_semantics<arbitrary>], iteration_bounds = array<i64: 2>, scalar_prefetch = 0 : i64, scratch_operands = 2 : i64, tpu.core_type = #tpu.core_type<tc>, window_params = [{pipeline_mode = #tpu.pipeline_mode<synchronous>, transform_indices = @transform_0, window_bounds = array<i64: 32, 128>}, {pipeline_mode = #tpu.pipeline_mode<synchronous>, transform_indices = @transform_1, window_bounds = array<i64: 32, 32>}, {pipeline_mode = #tpu.pipeline_mode<synchronous>, transform_indices = @transform_2, window_bounds = array<i64: 1, 128>}, {pipeline_mode = #tpu.pipeline_mode<synchronous>, transform_indices = @transform_3, window_bounds = array<i64: 1, 128>}, {transform_indices = @transform_4, window_bounds = array<i64: 1, 128, 384>}, {transform_indices = @transform_5, window_bounds = array<i64: 1, 1, 384>}, {transform_indices = @transform_6, window_bounds = array<i64: 1, 128, 128>}, {transform_indices = @transform_7, window_bounds = array<i64: 1, 1, 128>}, {transform_indices = @transform_8, window_bounds = array<i64: 1, 1, 128>}, {transform_indices = @transform_9, window_bounds = array<i64: 1, 1, 128>}, {transform_indices = @transform_10, window_bounds = array<i64: 1, 128, 512>}, {transform_indices = @transform_11, window_bounds = array<i64: 1, 1, 512>}, {transform_indices = @transform_12, window_bounds = array<i64: 1, 512, 128>}, {transform_indices = @transform_13, window_bounds = array<i64: 1, 1, 128>}, {transform_indices = @transform_14, window_bounds = array<i64: 1, 1, 128>}, {transform_indices = @transform_15, window_bounds = array<i64: 1, 1, 128>}, {pipeline_mode = #tpu.pipeline_mode<synchronous>, transform_indices = @transform_16, window_bounds = array<i64: 32, 128>}]} {
    %c0_i32 = arith.constant 0 : i32
    %0 = arith.cmpi eq, %arg0, %c0_i32 : i32
    %1 = arith.extui %0 : i1 to i32
    %c0_i32_0 = arith.constant 0 : i32
    %2 = arith.cmpi ne, %1, %c0_i32_0 : i32
    scf.if %2 {
      %c0_116 = arith.constant 0 : index
      %c0_117 = arith.constant 0 : index
      %227 = vector.load %arg1[%c0_116, %c0_117] : memref<32x128xf32, #tpu.memory_space<vmem>>, vector<32x128xf32>
      %c0_118 = arith.constant 0 : index
      %c0_119 = arith.constant 0 : index
      %228 = vector.load %arg3[%c0_118, %c0_119] : memref<1x128xf32, #tpu.memory_space<vmem>>, vector<1x128xf32>
      %c0_120 = arith.constant 0 : index
      %c0_121 = arith.constant 0 : index
      %229 = vector.load %arg4[%c0_120, %c0_121] : memref<1x128xf32, #tpu.memory_space<vmem>>, vector<1x128xf32>
      %cst_122 = arith.constant dense<0.000000e+00> : vector<32xf32>
      %230 = vector.multi_reduction <add>, %227, %cst_122 [1] : vector<32x128xf32> to vector<32xf32>
      %231 = vector.shape_cast %230 : vector<32xf32> to vector<32x1xf32>
      %cst_123 = arith.constant 1.280000e+02 : f32
      %232 = vector.broadcast %cst_123 : f32 to vector<32x1xf32>
      %233 = arith.divf %231, %232 : vector<32x1xf32>
      %234 = vector.broadcast %233 : vector<32x1xf32> to vector<32x128xf32>
      %235 = arith.subf %227, %234 : vector<32x128xf32>
      %236 = arith.mulf %235, %235 : vector<32x128xf32>
      %cst_124 = arith.constant dense<0.000000e+00> : vector<32xf32>
      %237 = vector.multi_reduction <add>, %236, %cst_124 [1] : vector<32x128xf32> to vector<32xf32>
      %238 = vector.shape_cast %237 : vector<32xf32> to vector<32x1xf32>
      %cst_125 = arith.constant 1.280000e+02 : f32
      %239 = vector.broadcast %cst_125 : f32 to vector<32x1xf32>
      %240 = arith.divf %238, %239 : vector<32x1xf32>
      %241 = vector.broadcast %233 : vector<32x1xf32> to vector<32x128xf32>
      %242 = arith.subf %227, %241 : vector<32x128xf32>
      %cst_126 = arith.constant 9.99999996E-13 : f32
      %243 = vector.broadcast %cst_126 : f32 to vector<32x1xf32>
      %244 = arith.addf %240, %243 : vector<32x1xf32>
      %245 = math.rsqrt %244 : vector<32x1xf32>
      %246 = vector.broadcast %245 : vector<32x1xf32> to vector<32x128xf32>
      %247 = arith.mulf %242, %246 : vector<32x128xf32>
      %248 = vector.broadcast %228 : vector<1x128xf32> to vector<32x128xf32>
      %249 = arith.mulf %247, %248 : vector<32x128xf32>
      %250 = vector.broadcast %229 : vector<1x128xf32> to vector<32x128xf32>
      %251 = arith.addf %249, %250 : vector<32x128xf32>
      %c0_127 = arith.constant 0 : index
      %c0_128 = arith.constant 0 : index
      %252 = vector.load %arg17[%c0_127, %c0_128] : memref<32x128xf32, #tpu.memory_space<vmem>>, vector<32x128xf32>
      tpu.vector_store %arg17[%c0_127, %c0_128], %251 {strides = array<i32>} : memref<32x128xf32, #tpu.memory_space<vmem>>, vector<32x128xf32>,
    } else {
    }
    %c0 = arith.constant 0 : index
    %c0_1 = arith.constant 0 : index
    %3 = vector.load %arg17[%c0, %c0_1] : memref<32x128xf32, #tpu.memory_space<vmem>>, vector<32x128xf32>
    %4 = arith.truncf %3 : vector<32x128xf32> to vector<32x128xbf16>
    %c0_2 = arith.constant 0 : index
    %c0_3 = arith.constant 0 : index
    %c0_4 = arith.constant 0 : index
    %5 = vector.load %arg5[%c0_2, %c0_3, %c0_4] : memref<1x128x384xbf16, #tpu.memory_space<vmem>>, vector<1x128x384xbf16>
    %6 = vector.shape_cast %5 : vector<1x128x384xbf16> to vector<128x384xbf16>
    %cst = arith.constant dense<0.000000e+00> : vector<32x384xf32>
    %7 = tpu.matmul %4, %6, %cst {dimension_numbers = #tpu.dot_dimension_numbers<[1], [0], [0], [1], [0, 0, 1, 1], [], []>} : vector<32x128xbf16>, vector<128x384xbf16>, vector<32x384xf32> -> vector<32x384xf32>
    %c0_5 = arith.constant 0 : index
    %c0_6 = arith.constant 0 : index
    %c0_7 = arith.constant 0 : index
    %8 = vector.load %arg6[%c0_5, %c0_6, %c0_7] : memref<1x1x384xf32, #tpu.memory_space<vmem>>, vector<1x1x384xf32>
    %9 = vector.shape_cast %8 : vector<1x1x384xf32> to vector<1x384xf32>
    %10 = vector.broadcast %9 : vector<1x384xf32> to vector<32x384xf32>
    %11 = arith.addf %7, %10 : vector<32x384xf32>
    %c0_8 = arith.constant 0 : index
    %c0_9 = arith.constant 0 : index
    %12 = vector.load %arg18[%c0_8, %c0_9] : memref<32x384xf32, #tpu.memory_space<vmem>>, vector<32x384xf32>
    tpu.vector_store %arg18[%c0_8, %c0_9], %11 {strides = array<i32>} : memref<32x384xf32, #tpu.memory_space<vmem>>, vector<32x384xf32>,
    %c0_10 = arith.constant 0 : index
    %c0_11 = arith.constant 0 : index
    %13 = vector.load %arg2[%c0_10, %c0_11] : memref<32x32xf32, #tpu.memory_space<vmem>>, vector<32x32xf32>
    %c0_12 = arith.constant 0 : index
    %c0_13 = arith.constant 0 : index
    %14 = vector.load %arg18[%c0_12, %c0_13] : memref<32x384xf32, #tpu.memory_space<vmem>>, vector<32x32xf32>
    %15 = arith.truncf %14 : vector<32x32xf32> to vector<32x32xbf16>
    %c0_14 = arith.constant 0 : index
    %c128 = arith.constant 128 : index
    %16 = vector.load %arg18[%c0_14, %c128] : memref<32x384xf32, #tpu.memory_space<vmem>>, vector<32x32xf32>
    %17 = arith.truncf %16 : vector<32x32xf32> to vector<32x32xbf16>
    %c0_15 = arith.constant 0 : index
    %c256 = arith.constant 256 : index
    %18 = vector.load %arg18[%c0_15, %c256] : memref<32x384xf32, #tpu.memory_space<vmem>>, vector<32x32xf32>
    %19 = arith.truncf %18 : vector<32x32xf32> to vector<32x32xbf16>
    %cst_16 = arith.constant dense<0.000000e+00> : vector<32x32xf32>
    %20 = tpu.matmul %15, %17, %cst_16 {dimension_numbers = #tpu.dot_dimension_numbers<[1], [1], [0], [0], [0, 0, 1, 0], [], []>} : vector<32x32xbf16>, vector<32x32xbf16>, vector<32x32xf32> -> vector<32x32xf32>
    %cst_17 = arith.constant 0.176776692 : f32
    %21 = vector.broadcast %cst_17 : f32 to vector<32x32xf32>
    %22 = arith.mulf %20, %21 : vector<32x32xf32>
    %23 = arith.addf %22, %13 : vector<32x32xf32>
    %cst_18 = arith.constant dense<0xFF800000> : vector<32xf32>
    %24 = vector.multi_reduction <maximumf>, %23, %cst_18 [1] : vector<32x32xf32> to vector<32xf32>
    %25 = vector.shape_cast %24 : vector<32xf32> to vector<32x1xf32>
    %26 = vector.broadcast %25 : vector<32x1xf32> to vector<32x32xf32>
    %27 = arith.subf %23, %26 : vector<32x32xf32>
    %28 = math.exp %27 : vector<32x32xf32>
    %cst_19 = arith.constant dense<0.000000e+00> : vector<32xf32>
    %29 = vector.multi_reduction <add>, %28, %cst_19 [1] : vector<32x32xf32> to vector<32xf32>
    %30 = vector.shape_cast %29 : vector<32xf32> to vector<32x1xf32>
    %31 = tpu.reciprocal %30 {approx = true} : vector<32x1xf32> -> vector<32x1xf32>
    %32 = vector.broadcast %31 : vector<32x1xf32> to vector<32x32xf32>
    %33 = arith.mulf %28, %32 : vector<32x32xf32>
    %34 = arith.truncf %33 : vector<32x32xf32> to vector<32x32xbf16>
    %cst_20 = arith.constant dense<0.000000e+00> : vector<32x32xf32>
    %35 = tpu.matmul %34, %19, %cst_20 {dimension_numbers = #tpu.dot_dimension_numbers<[1], [0], [0], [1], [0, 0, 1, 1], [], []>} : vector<32x32xbf16>, vector<32x32xbf16>, vector<32x32xf32> -> vector<32x32xf32>
    %c0_21 = arith.constant 0 : index
    %c0_22 = arith.constant 0 : index
    %36 = vector.load %arg19[%c0_21, %c0_22] : memref<32x128xf32, #tpu.memory_space<vmem>>, vector<32x32xf32>
    tpu.vector_store %arg19[%c0_21, %c0_22], %35 {strides = array<i32>} : memref<32x128xf32, #tpu.memory_space<vmem>>, vector<32x32xf32>,
    %c0_23 = arith.constant 0 : index
    %c32 = arith.constant 32 : index
    %37 = vector.load %arg18[%c0_23, %c32] : memref<32x384xf32, #tpu.memory_space<vmem>>, vector<32x32xf32>
    %38 = arith.truncf %37 : vector<32x32xf32> to vector<32x32xbf16>
    %c0_24 = arith.constant 0 : index
    %c160 = arith.constant 160 : index
    %39 = vector.load %arg18[%c0_24, %c160] : memref<32x384xf32, #tpu.memory_space<vmem>>, vector<32x32xf32>
    %40 = arith.truncf %39 : vector<32x32xf32> to vector<32x32xbf16>
    %c0_25 = arith.constant 0 : index
    %c288 = arith.constant 288 : index
    %41 = vector.load %arg18[%c0_25, %c288] : memref<32x384xf32, #tpu.memory_space<vmem>>, vector<32x32xf32>
    %42 = arith.truncf %41 : vector<32x32xf32> to vector<32x32xbf16>
    %cst_26 = arith.constant dense<0.000000e+00> : vector<32x32xf32>
    %43 = tpu.matmul %38, %40, %cst_26 {dimension_numbers = #tpu.dot_dimension_numbers<[1], [1], [0], [0], [0, 0, 1, 0], [], []>} : vector<32x32xbf16>, vector<32x32xbf16>, vector<32x32xf32> -> vector<32x32xf32>
    %cst_27 = arith.constant 0.176776692 : f32
    %44 = vector.broadcast %cst_27 : f32 to vector<32x32xf32>
    %45 = arith.mulf %43, %44 : vector<32x32xf32>
    %46 = arith.addf %45, %13 : vector<32x32xf32>
    %cst_28 = arith.constant dense<0xFF800000> : vector<32xf32>
    %47 = vector.multi_reduction <maximumf>, %46, %cst_28 [1] : vector<32x32xf32> to vector<32xf32>
    %48 = vector.shape_cast %47 : vector<32xf32> to vector<32x1xf32>
    %49 = vector.broadcast %48 : vector<32x1xf32> to vector<32x32xf32>
    %50 = arith.subf %46, %49 : vector<32x32xf32>
    %51 = math.exp %50 : vector<32x32xf32>
    %cst_29 = arith.constant dense<0.000000e+00> : vector<32xf32>
    %52 = vector.multi_reduction <add>, %51, %cst_29 [1] : vector<32x32xf32> to vector<32xf32>
    %53 = vector.shape_cast %52 : vector<32xf32> to vector<32x1xf32>
    %54 = tpu.reciprocal %53 {approx = true} : vector<32x1xf32> -> vector<32x1xf32>
    %55 = vector.broadcast %54 : vector<32x1xf32> to vector<32x32xf32>
    %56 = arith.mulf %51, %55 : vector<32x32xf32>
    %57 = arith.truncf %56 : vector<32x32xf32> to vector<32x32xbf16>
    %cst_30 = arith.constant dense<0.000000e+00> : vector<32x32xf32>
    %58 = tpu.matmul %57, %42, %cst_30 {dimension_numbers = #tpu.dot_dimension_numbers<[1], [0], [0], [1], [0, 0, 1, 1], [], []>} : vector<32x32xbf16>, vector<32x32xbf16>, vector<32x32xf32> -> vector<32x32xf32>
    %c0_31 = arith.constant 0 : index
    %c32_32 = arith.constant 32 : index
    %59 = vector.load %arg19[%c0_31, %c32_32] : memref<32x128xf32, #tpu.memory_space<vmem>>, vector<32x32xf32>
    tpu.vector_store %arg19[%c0_31, %c32_32], %58 {strides = array<i32>} : memref<32x128xf32, #tpu.memory_space<vmem>>, vector<32x32xf32>,
    %c0_33 = arith.constant 0 : index
    %c64 = arith.constant 64 : index
    %60 = vector.load %arg18[%c0_33, %c64] : memref<32x384xf32, #tpu.memory_space<vmem>>, vector<32x32xf32>
    %61 = arith.truncf %60 : vector<32x32xf32> to vector<32x32xbf16>
    %c0_34 = arith.constant 0 : index
    %c192 = arith.constant 192 : index
    %62 = vector.load %arg18[%c0_34, %c192] : memref<32x384xf32, #tpu.memory_space<vmem>>, vector<32x32xf32>
    %63 = arith.truncf %62 : vector<32x32xf32> to vector<32x32xbf16>
    %c0_35 = arith.constant 0 : index
    %c320 = arith.constant 320 : index
    %64 = vector.load %arg18[%c0_35, %c320] : memref<32x384xf32, #tpu.memory_space<vmem>>, vector<32x32xf32>
    %65 = arith.truncf %64 : vector<32x32xf32> to vector<32x32xbf16>
    %cst_36 = arith.constant dense<0.000000e+00> : vector<32x32xf32>
    %66 = tpu.matmul %61, %63, %cst_36 {dimension_numbers = #tpu.dot_dimension_numbers<[1], [1], [0], [0], [0, 0, 1, 0], [], []>} : vector<32x32xbf16>, vector<32x32xbf16>, vector<32x32xf32> -> vector<32x32xf32>
    %cst_37 = arith.constant 0.176776692 : f32
    %67 = vector.broadcast %cst_37 : f32 to vector<32x32xf32>
    %68 = arith.mulf %66, %67 : vector<32x32xf32>
    %69 = arith.addf %68, %13 : vector<32x32xf32>
    %cst_38 = arith.constant dense<0xFF800000> : vector<32xf32>
    %70 = vector.multi_reduction <maximumf>, %69, %cst_38 [1] : vector<32x32xf32> to vector<32xf32>
    %71 = vector.shape_cast %70 : vector<32xf32> to vector<32x1xf32>
    %72 = vector.broadcast %71 : vector<32x1xf32> to vector<32x32xf32>
    %73 = arith.subf %69, %72 : vector<32x32xf32>
    %74 = math.exp %73 : vector<32x32xf32>
    %cst_39 = arith.constant dense<0.000000e+00> : vector<32xf32>
    %75 = vector.multi_reduction <add>, %74, %cst_39 [1] : vector<32x32xf32> to vector<32xf32>
    %76 = vector.shape_cast %75 : vector<32xf32> to vector<32x1xf32>
    %77 = tpu.reciprocal %76 {approx = true} : vector<32x1xf32> -> vector<32x1xf32>
    %78 = vector.broadcast %77 : vector<32x1xf32> to vector<32x32xf32>
    %79 = arith.mulf %74, %78 : vector<32x32xf32>
    %80 = arith.truncf %79 : vector<32x32xf32> to vector<32x32xbf16>
    %cst_40 = arith.constant dense<0.000000e+00> : vector<32x32xf32>
    %81 = tpu.matmul %80, %65, %cst_40 {dimension_numbers = #tpu.dot_dimension_numbers<[1], [0], [0], [1], [0, 0, 1, 1], [], []>} : vector<32x32xbf16>, vector<32x32xbf16>, vector<32x32xf32> -> vector<32x32xf32>
    %c0_41 = arith.constant 0 : index
    %c64_42 = arith.constant 64 : index
    %82 = vector.load %arg19[%c0_41, %c64_42] : memref<32x128xf32, #tpu.memory_space<vmem>>, vector<32x32xf32>
    tpu.vector_store %arg19[%c0_41, %c64_42], %81 {strides = array<i32>} : memref<32x128xf32, #tpu.memory_space<vmem>>, vector<32x32xf32>,
    %c0_43 = arith.constant 0 : index
    %c96 = arith.constant 96 : index
    %83 = vector.load %arg18[%c0_43, %c96] : memref<32x384xf32, #tpu.memory_space<vmem>>, vector<32x32xf32>
    %84 = arith.truncf %83 : vector<32x32xf32> to vector<32x32xbf16>
    %c0_44 = arith.constant 0 : index
    %c224 = arith.constant 224 : index
    %85 = vector.load %arg18[%c0_44, %c224] : memref<32x384xf32, #tpu.memory_space<vmem>>, vector<32x32xf32>
    %86 = arith.truncf %85 : vector<32x32xf32> to vector<32x32xbf16>
    %c0_45 = arith.constant 0 : index
    %c352 = arith.constant 352 : index
    %87 = vector.load %arg18[%c0_45, %c352] : memref<32x384xf32, #tpu.memory_space<vmem>>, vector<32x32xf32>
    %88 = arith.truncf %87 : vector<32x32xf32> to vector<32x32xbf16>
    %cst_46 = arith.constant dense<0.000000e+00> : vector<32x32xf32>
    %89 = tpu.matmul %84, %86, %cst_46 {dimension_numbers = #tpu.dot_dimension_numbers<[1], [1], [0], [0], [0, 0, 1, 0], [], []>} : vector<32x32xbf16>, vector<32x32xbf16>, vector<32x32xf32> -> vector<32x32xf32>
    %cst_47 = arith.constant 0.176776692 : f32
    %90 = vector.broadcast %cst_47 : f32 to vector<32x32xf32>
    %91 = arith.mulf %89, %90 : vector<32x32xf32>
    %92 = arith.addf %91, %13 : vector<32x32xf32>
    %cst_48 = arith.constant dense<0xFF800000> : vector<32xf32>
    %93 = vector.multi_reduction <maximumf>, %92, %cst_48 [1] : vector<32x32xf32> to vector<32xf32>
    %94 = vector.shape_cast %93 : vector<32xf32> to vector<32x1xf32>
    %95 = vector.broadcast %94 : vector<32x1xf32> to vector<32x32xf32>
    %96 = arith.subf %92, %95 : vector<32x32xf32>
    %97 = math.exp %96 : vector<32x32xf32>
    %cst_49 = arith.constant dense<0.000000e+00> : vector<32xf32>
    %98 = vector.multi_reduction <add>, %97, %cst_49 [1] : vector<32x32xf32> to vector<32xf32>
    %99 = vector.shape_cast %98 : vector<32xf32> to vector<32x1xf32>
    %100 = tpu.reciprocal %99 {approx = true} : vector<32x1xf32> -> vector<32x1xf32>
    %101 = vector.broadcast %100 : vector<32x1xf32> to vector<32x32xf32>
    %102 = arith.mulf %97, %101 : vector<32x32xf32>
    %103 = arith.truncf %102 : vector<32x32xf32> to vector<32x32xbf16>
    %cst_50 = arith.constant dense<0.000000e+00> : vector<32x32xf32>
    %104 = tpu.matmul %103, %88, %cst_50 {dimension_numbers = #tpu.dot_dimension_numbers<[1], [0], [0], [1], [0, 0, 1, 1], [], []>} : vector<32x32xbf16>, vector<32x32xbf16>, vector<32x32xf32> -> vector<32x32xf32>
    %c0_51 = arith.constant 0 : index
    %c96_52 = arith.constant 96 : index
    %105 = vector.load %arg19[%c0_51, %c96_52] : memref<32x128xf32, #tpu.memory_space<vmem>>, vector<32x32xf32>
    tpu.vector_store %arg19[%c0_51, %c96_52], %104 {strides = array<i32>} : memref<32x128xf32, #tpu.memory_space<vmem>>, vector<32x32xf32>,
    %c0_53 = arith.constant 0 : index
    %c0_54 = arith.constant 0 : index
    %106 = vector.load %arg19[%c0_53, %c0_54] : memref<32x128xf32, #tpu.memory_space<vmem>>, vector<32x128xf32>
    %107 = arith.truncf %106 : vector<32x128xf32> to vector<32x128xbf16>
    %c0_55 = arith.constant 0 : index
    %c0_56 = arith.constant 0 : index
    %c0_57 = arith.constant 0 : index
    %108 = vector.load %arg7[%c0_55, %c0_56, %c0_57] : memref<1x128x128xbf16, #tpu.memory_space<vmem>>, vector<1x128x128xbf16>
    %109 = vector.shape_cast %108 : vector<1x128x128xbf16> to vector<128x128xbf16>
    %cst_58 = arith.constant dense<0.000000e+00> : vector<32x128xf32>
    %110 = tpu.matmul %107, %109, %cst_58 {dimension_numbers = #tpu.dot_dimension_numbers<[1], [0], [0], [1], [0, 0, 1, 1], [], []>} : vector<32x128xbf16>, vector<128x128xbf16>, vector<32x128xf32> -> vector<32x128xf32>
    %c0_59 = arith.constant 0 : index
    %c0_60 = arith.constant 0 : index
    %c0_61 = arith.constant 0 : index
    %111 = vector.load %arg8[%c0_59, %c0_60, %c0_61] : memref<1x1x128xf32, #tpu.memory_space<vmem>>, vector<1x1x128xf32>
    %112 = vector.shape_cast %111 : vector<1x1x128xf32> to vector<1x128xf32>
    %113 = vector.broadcast %112 : vector<1x128xf32> to vector<32x128xf32>
    %114 = arith.addf %110, %113 : vector<32x128xf32>
    %115 = arith.addf %3, %114 : vector<32x128xf32>
    %c0_62 = arith.constant 0 : index
    %c0_63 = arith.constant 0 : index
    %c0_64 = arith.constant 0 : index
    %116 = vector.load %arg9[%c0_62, %c0_63, %c0_64] : memref<1x1x128xf32, #tpu.memory_space<vmem>>, vector<1x1x128xf32>
    %117 = vector.shape_cast %116 : vector<1x1x128xf32> to vector<1x128xf32>
    %c0_65 = arith.constant 0 : index
    %c0_66 = arith.constant 0 : index
    %c0_67 = arith.constant 0 : index
    %118 = vector.load %arg10[%c0_65, %c0_66, %c0_67] : memref<1x1x128xf32, #tpu.memory_space<vmem>>, vector<1x1x128xf32>
    %119 = vector.shape_cast %118 : vector<1x1x128xf32> to vector<1x128xf32>
    %cst_68 = arith.constant dense<0.000000e+00> : vector<32xf32>
    %120 = vector.multi_reduction <add>, %115, %cst_68 [1] : vector<32x128xf32> to vector<32xf32>
    %121 = vector.shape_cast %120 : vector<32xf32> to vector<32x1xf32>
    %cst_69 = arith.constant 1.280000e+02 : f32
    %122 = vector.broadcast %cst_69 : f32 to vector<32x1xf32>
    %123 = arith.divf %121, %122 : vector<32x1xf32>
    %124 = vector.broadcast %123 : vector<32x1xf32> to vector<32x128xf32>
    %125 = arith.subf %115, %124 : vector<32x128xf32>
    %126 = arith.mulf %125, %125 : vector<32x128xf32>
    %cst_70 = arith.constant dense<0.000000e+00> : vector<32xf32>
    %127 = vector.multi_reduction <add>, %126, %cst_70 [1] : vector<32x128xf32> to vector<32xf32>
    %128 = vector.shape_cast %127 : vector<32xf32> to vector<32x1xf32>
    %cst_71 = arith.constant 1.280000e+02 : f32
    %129 = vector.broadcast %cst_71 : f32 to vector<32x1xf32>
    %130 = arith.divf %128, %129 : vector<32x1xf32>
    %131 = vector.broadcast %123 : vector<32x1xf32> to vector<32x128xf32>
    %132 = arith.subf %115, %131 : vector<32x128xf32>
    %cst_72 = arith.constant 9.99999996E-13 : f32
    %133 = vector.broadcast %cst_72 : f32 to vector<32x1xf32>
    %134 = arith.addf %130, %133 : vector<32x1xf32>
    %135 = math.rsqrt %134 : vector<32x1xf32>
    %136 = vector.broadcast %135 : vector<32x1xf32> to vector<32x128xf32>
    %137 = arith.mulf %132, %136 : vector<32x128xf32>
    %138 = vector.broadcast %117 : vector<1x128xf32> to vector<32x128xf32>
    %139 = arith.mulf %137, %138 : vector<32x128xf32>
    %140 = vector.broadcast %119 : vector<1x128xf32> to vector<32x128xf32>
    %141 = arith.addf %139, %140 : vector<32x128xf32>
    %142 = arith.truncf %141 : vector<32x128xf32> to vector<32x128xbf16>
    %c0_73 = arith.constant 0 : index
    %c0_74 = arith.constant 0 : index
    %c0_75 = arith.constant 0 : index
    %143 = vector.load %arg11[%c0_73, %c0_74, %c0_75] : memref<1x128x512xbf16, #tpu.memory_space<vmem>>, vector<1x128x512xbf16>
    %144 = vector.shape_cast %143 : vector<1x128x512xbf16> to vector<128x512xbf16>
    %cst_76 = arith.constant dense<0.000000e+00> : vector<32x512xf32>
    %145 = tpu.matmul %142, %144, %cst_76 {dimension_numbers = #tpu.dot_dimension_numbers<[1], [0], [0], [1], [0, 0, 1, 1], [], []>} : vector<32x128xbf16>, vector<128x512xbf16>, vector<32x512xf32> -> vector<32x512xf32>
    %c0_77 = arith.constant 0 : index
    %c0_78 = arith.constant 0 : index
    %c0_79 = arith.constant 0 : index
    %146 = vector.load %arg12[%c0_77, %c0_78, %c0_79] : memref<1x1x512xf32, #tpu.memory_space<vmem>>, vector<1x1x512xf32>
    %147 = vector.shape_cast %146 : vector<1x1x512xf32> to vector<1x512xf32>
    %148 = vector.broadcast %147 : vector<1x512xf32> to vector<32x512xf32>
    %149 = arith.addf %145, %148 : vector<32x512xf32>
    %cst_80 = arith.constant 5.000000e-01 : f32
    %150 = vector.broadcast %cst_80 : f32 to vector<32x512xf32>
    %151 = arith.mulf %150, %149 : vector<32x512xf32>
    %cst_81 = arith.constant 0.707106769 : f32
    %152 = vector.broadcast %cst_81 : f32 to vector<32x512xf32>
    %153 = arith.mulf %149, %152 : vector<32x512xf32>
    %cst_82 = arith.constant 0.000000e+00 : f32
    %154 = vector.broadcast %cst_82 : f32 to vector<32x512xf32>
    %155 = arith.cmpf oge, %153, %154 : vector<32x512xf32>
    %cst_83 = arith.constant 1.000000e+00 : f32
    %cst_84 = arith.constant -1.000000e+00 : f32
    %156 = vector.broadcast %cst_83 : f32 to vector<32x512xf32>
    %157 = vector.broadcast %cst_84 : f32 to vector<32x512xf32>
    %158 = arith.select %155, %156, %157 : vector<32x512xi1>, vector<32x512xf32>
    %159 = math.absf %153 : vector<32x512xf32>
    %cst_85 = arith.constant 0.327591091 : f32
    %160 = vector.broadcast %cst_85 : f32 to vector<32x512xf32>
    %161 = arith.mulf %160, %159 : vector<32x512xf32>
    %cst_86 = arith.constant 1.000000e+00 : f32
    %162 = vector.broadcast %cst_86 : f32 to vector<32x512xf32>
    %163 = arith.addf %162, %161 : vector<32x512xf32>
    %cst_87 = arith.constant 1.000000e+00 : f32
    %164 = vector.broadcast %cst_87 : f32 to vector<32x512xf32>
    %165 = arith.divf %164, %163 : vector<32x512xf32>
    %cst_88 = arith.constant 1.06140542 : f32
    %166 = vector.broadcast %cst_88 : f32 to vector<32x512xf32>
    %167 = arith.mulf %166, %165 : vector<32x512xf32>
    %cst_89 = arith.constant -1.45315206 : f32
    %168 = vector.broadcast %cst_89 : f32 to vector<32x512xf32>
    %169 = arith.addf %167, %168 : vector<32x512xf32>
    %170 = arith.mulf %169, %165 : vector<32x512xf32>
    %cst_90 = arith.constant 1.42141378 : f32
    %171 = vector.broadcast %cst_90 : f32 to vector<32x512xf32>
    %172 = arith.addf %170, %171 : vector<32x512xf32>
    %173 = arith.mulf %172, %165 : vector<32x512xf32>
    %cst_91 = arith.constant -0.284496725 : f32
    %174 = vector.broadcast %cst_91 : f32 to vector<32x512xf32>
    %175 = arith.addf %173, %174 : vector<32x512xf32>
    %176 = arith.mulf %175, %165 : vector<32x512xf32>
    %cst_92 = arith.constant 0.254829586 : f32
    %177 = vector.broadcast %cst_92 : f32 to vector<32x512xf32>
    %178 = arith.addf %176, %177 : vector<32x512xf32>
    %179 = arith.mulf %178, %165 : vector<32x512xf32>
    %cst_93 = arith.constant 0.000000e+00 : f32
    %180 = vector.broadcast %cst_93 : f32 to vector<32x512xf32>
    %181 = arith.subf %180, %159 : vector<32x512xf32>
    %182 = arith.mulf %181, %159 : vector<32x512xf32>
    %183 = math.exp %182 : vector<32x512xf32>
    %184 = arith.mulf %179, %183 : vector<32x512xf32>
    %cst_94 = arith.constant 1.000000e+00 : f32
    %185 = vector.broadcast %cst_94 : f32 to vector<32x512xf32>
    %186 = arith.subf %185, %184 : vector<32x512xf32>
    %187 = arith.mulf %158, %186 : vector<32x512xf32>
    %cst_95 = arith.constant 1.000000e+00 : f32
    %188 = vector.broadcast %cst_95 : f32 to vector<32x512xf32>
    %189 = arith.addf %188, %187 : vector<32x512xf32>
    %190 = arith.mulf %151, %189 : vector<32x512xf32>
    %191 = arith.truncf %190 : vector<32x512xf32> to vector<32x512xbf16>
    %c0_96 = arith.constant 0 : index
    %c0_97 = arith.constant 0 : index
    %c0_98 = arith.constant 0 : index
    %192 = vector.load %arg13[%c0_96, %c0_97, %c0_98] : memref<1x512x128xbf16, #tpu.memory_space<vmem>>, vector<1x512x128xbf16>
    %193 = vector.shape_cast %192 : vector<1x512x128xbf16> to vector<512x128xbf16>
    %cst_99 = arith.constant dense<0.000000e+00> : vector<32x128xf32>
    %194 = tpu.matmul %191, %193, %cst_99 {dimension_numbers = #tpu.dot_dimension_numbers<[1], [0], [0], [1], [0, 0, 1, 1], [], []>} : vector<32x512xbf16>, vector<512x128xbf16>, vector<32x128xf32> -> vector<32x128xf32>
    %c0_100 = arith.constant 0 : index
    %c0_101 = arith.constant 0 : index
    %c0_102 = arith.constant 0 : index
    %195 = vector.load %arg14[%c0_100, %c0_101, %c0_102] : memref<1x1x128xf32, #tpu.memory_space<vmem>>, vector<1x1x128xf32>
    %196 = vector.shape_cast %195 : vector<1x1x128xf32> to vector<1x128xf32>
    %197 = vector.broadcast %196 : vector<1x128xf32> to vector<32x128xf32>
    %198 = arith.addf %194, %197 : vector<32x128xf32>
    %199 = arith.addf %141, %198 : vector<32x128xf32>
    %c0_103 = arith.constant 0 : index
    %c0_104 = arith.constant 0 : index
    %c0_105 = arith.constant 0 : index
    %200 = vector.load %arg15[%c0_103, %c0_104, %c0_105] : memref<1x1x128xf32, #tpu.memory_space<vmem>>, vector<1x1x128xf32>
    %201 = vector.shape_cast %200 : vector<1x1x128xf32> to vector<1x128xf32>
    %c0_106 = arith.constant 0 : index
    %c0_107 = arith.constant 0 : index
    %c0_108 = arith.constant 0 : index
    %202 = vector.load %arg16[%c0_106, %c0_107, %c0_108] : memref<1x1x128xf32, #tpu.memory_space<vmem>>, vector<1x1x128xf32>
    %203 = vector.shape_cast %202 : vector<1x1x128xf32> to vector<1x128xf32>
    %cst_109 = arith.constant dense<0.000000e+00> : vector<32xf32>
    %204 = vector.multi_reduction <add>, %199, %cst_109 [1] : vector<32x128xf32> to vector<32xf32>
    %205 = vector.shape_cast %204 : vector<32xf32> to vector<32x1xf32>
    %cst_110 = arith.constant 1.280000e+02 : f32
    %206 = vector.broadcast %cst_110 : f32 to vector<32x1xf32>
    %207 = arith.divf %205, %206 : vector<32x1xf32>
    %208 = vector.broadcast %207 : vector<32x1xf32> to vector<32x128xf32>
    %209 = arith.subf %199, %208 : vector<32x128xf32>
    %210 = arith.mulf %209, %209 : vector<32x128xf32>
    %cst_111 = arith.constant dense<0.000000e+00> : vector<32xf32>
    %211 = vector.multi_reduction <add>, %210, %cst_111 [1] : vector<32x128xf32> to vector<32xf32>
    %212 = vector.shape_cast %211 : vector<32xf32> to vector<32x1xf32>
    %cst_112 = arith.constant 1.280000e+02 : f32
    %213 = vector.broadcast %cst_112 : f32 to vector<32x1xf32>
    %214 = arith.divf %212, %213 : vector<32x1xf32>
    %215 = vector.broadcast %207 : vector<32x1xf32> to vector<32x128xf32>
    %216 = arith.subf %199, %215 : vector<32x128xf32>
    %cst_113 = arith.constant 9.99999996E-13 : f32
    %217 = vector.broadcast %cst_113 : f32 to vector<32x1xf32>
    %218 = arith.addf %214, %217 : vector<32x1xf32>
    %219 = math.rsqrt %218 : vector<32x1xf32>
    %220 = vector.broadcast %219 : vector<32x1xf32> to vector<32x128xf32>
    %221 = arith.mulf %216, %220 : vector<32x128xf32>
    %222 = vector.broadcast %201 : vector<1x128xf32> to vector<32x128xf32>
    %223 = arith.mulf %221, %222 : vector<32x128xf32>
    %224 = vector.broadcast %203 : vector<1x128xf32> to vector<32x128xf32>
    %225 = arith.addf %223, %224 : vector<32x128xf32>
    %c0_114 = arith.constant 0 : index
    %c0_115 = arith.constant 0 : index
    %226 = vector.load %arg17[%c0_114, %c0_115] : memref<32x128xf32, #tpu.memory_space<vmem>>, vector<32x128xf32>
    tpu.vector_store %arg17[%c0_114, %c0_115], %225 {strides = array<i32>} : memref<32x128xf32, #tpu.memory_space<vmem>>, vector<32x128xf32>,
    return
  }
  func.func @transform_0(%arg0: i32) -> (i32, i32) {
    %c0_i32 = arith.constant 0 : i32
    %c0_i32_0 = arith.constant 0 : i32
    %c0_i32_1 = arith.constant 0 : i32
    return %c0_i32, %c0_i32_0 : i32, i32
  }
  func.func @transform_1(%arg0: i32) -> (i32, i32) {
    %c0_i32 = arith.constant 0 : i32
    %c0_i32_0 = arith.constant 0 : i32
    %c0_i32_1 = arith.constant 0 : i32
    return %c0_i32, %c0_i32_0 : i32, i32
  }
  func.func @transform_2(%arg0: i32) -> (i32, i32) {
    %c0_i32 = arith.constant 0 : i32
    %c0_i32_0 = arith.constant 0 : i32
    %c0_i32_1 = arith.constant 0 : i32
    return %c0_i32, %c0_i32_0 : i32, i32
  }
  func.func @transform_3(%arg0: i32) -> (i32, i32) {
    %c0_i32 = arith.constant 0 : i32
    %c0_i32_0 = arith.constant 0 : i32
    %c0_i32_1 = arith.constant 0 : i32
    return %c0_i32, %c0_i32_0 : i32, i32
  }
  func.func @transform_4(%arg0: i32) -> (i32, i32, i32) {
    %c0_i32 = arith.constant 0 : i32
    %c0_i32_0 = arith.constant 0 : i32
    %c0_i32_1 = arith.constant 0 : i32
    return %arg0, %c0_i32, %c0_i32_0 : i32, i32, i32
  }
  func.func @transform_5(%arg0: i32) -> (i32, i32, i32) {
    %c0_i32 = arith.constant 0 : i32
    %c0_i32_0 = arith.constant 0 : i32
    %c0_i32_1 = arith.constant 0 : i32
    return %arg0, %c0_i32, %c0_i32_0 : i32, i32, i32
  }
  func.func @transform_6(%arg0: i32) -> (i32, i32, i32) {
    %c0_i32 = arith.constant 0 : i32
    %c0_i32_0 = arith.constant 0 : i32
    %c0_i32_1 = arith.constant 0 : i32
    return %arg0, %c0_i32, %c0_i32_0 : i32, i32, i32
  }
  func.func @transform_7(%arg0: i32) -> (i32, i32, i32) {
    %c0_i32 = arith.constant 0 : i32
    %c0_i32_0 = arith.constant 0 : i32
    %c0_i32_1 = arith.constant 0 : i32
    return %arg0, %c0_i32, %c0_i32_0 : i32, i32, i32
  }
  func.func @transform_8(%arg0: i32) -> (i32, i32, i32) {
    %c0_i32 = arith.constant 0 : i32
    %c0_i32_0 = arith.constant 0 : i32
    %c0_i32_1 = arith.constant 0 : i32
    return %arg0, %c0_i32, %c0_i32_0 : i32, i32, i32
  }
  func.func @transform_9(%arg0: i32) -> (i32, i32, i32) {
    %c0_i32 = arith.constant 0 : i32
    %c0_i32_0 = arith.constant 0 : i32
    %c0_i32_1 = arith.constant 0 : i32
    return %arg0, %c0_i32, %c0_i32_0 : i32, i32, i32
  }
  func.func @transform_10(%arg0: i32) -> (i32, i32, i32) {
    %c0_i32 = arith.constant 0 : i32
    %c0_i32_0 = arith.constant 0 : i32
    %c0_i32_1 = arith.constant 0 : i32
    return %arg0, %c0_i32, %c0_i32_0 : i32, i32, i32
  }
  func.func @transform_11(%arg0: i32) -> (i32, i32, i32) {
    %c0_i32 = arith.constant 0 : i32
    %c0_i32_0 = arith.constant 0 : i32
    %c0_i32_1 = arith.constant 0 : i32
    return %arg0, %c0_i32, %c0_i32_0 : i32, i32, i32
  }
  func.func @transform_12(%arg0: i32) -> (i32, i32, i32) {
    %c0_i32 = arith.constant 0 : i32
    %c0_i32_0 = arith.constant 0 : i32
    %c0_i32_1 = arith.constant 0 : i32
    return %arg0, %c0_i32, %c0_i32_0 : i32, i32, i32
  }
  func.func @transform_13(%arg0: i32) -> (i32, i32, i32) {
    %c0_i32 = arith.constant 0 : i32
    %c0_i32_0 = arith.constant 0 : i32
    %c0_i32_1 = arith.constant 0 : i32
    return %arg0, %c0_i32, %c0_i32_0 : i32, i32, i32
  }
  func.func @transform_14(%arg0: i32) -> (i32, i32, i32) {
    %c0_i32 = arith.constant 0 : i32
    %c0_i32_0 = arith.constant 0 : i32
    %c0_i32_1 = arith.constant 0 : i32
    return %arg0, %c0_i32, %c0_i32_0 : i32, i32, i32
  }
  func.func @transform_15(%arg0: i32) -> (i32, i32, i32) {
    %c0_i32 = arith.constant 0 : i32
    %c0_i32_0 = arith.constant 0 : i32
    %c0_i32_1 = arith.constant 0 : i32
    return %arg0, %c0_i32, %c0_i32_0 : i32, i32, i32
  }
  func.func @transform_16(%arg0: i32) -> (i32, i32) {
    %c0_i32 = arith.constant 0 : i32
    %c0_i32_0 = arith.constant 0 : i32
    %c0_i32_1 = arith.constant 0 : i32
    return %c0_i32, %c0_i32_0 : i32, i32
  }
}

</mosaic_0001>

<llo_original>
// kernel: _lambda_.3
$region0: #{_lambda_.3}
  #allocation0 [shape = 'u32[]', space=smem, size = 0x4, offset = 0x4, fixed_abs, tag = 'smem constant byte address 0x4 - core index']
  #allocation1 [shape = 'u32[72,128]{1,0:T(1,128)}', space=vmem, size = 0x9000, scoped, tag = 'internal scratch']
  %s0 = inlined_call_operand.vmem [shape: f32[2,128], index: 0, kind: input, shape index: {}]
  %s1 = inlined_call_operand.vmem [shape: bf16[128,128], index: 1, kind: input, shape index: {}]
  %s2 = inlined_call_operand.vmem [shape: f32[1,128], index: 2, kind: input, shape index: {}]
  %s3 = inlined_call_operand.vmem [shape: bf16[128,128], index: 3, kind: input, shape index: {}]
  %s4 = inlined_call_operand.vmem [shape: f32[1,128], index: 4, kind: input, shape index: {}]
  %s5 = inlined_call_operand.vmem [shape: bf16[128,128], index: 5, kind: input, shape index: {}]
  %s6 = inlined_call_operand.vmem [shape: f32[1,128], index: 6, kind: input, shape index: {}]
  %s7 = inlined_call_operand.hbm [shape: f32[2,128], index: 7, kind: output, shape index: {}]
  %s8 = sld [smem:[#allocation0]]
  $region38: #{_lambda_.3} parent=0
    _
  %s10 = ssub.s32 1, %s8
  %s11 = scalar_select 0, %s10, %s8
  $region1: #{_lambda_.3} parent=0
    #allocation2 [shape = 'u8[1024]{0}', space=vmem, size = 0x400, scoped, tag = 'output window, operand 0, single buffered']
    #allocation3 [shape = 's32[1]{0}', space=sflag, size = 0x4, scoped, tag = 'scoped memory for _lambda_.3']
    %12 = vsyncpa [#allocation3], 0
    // Predicated region
    $region2: #{_lambda_.3} parent=1 // pred_check
      _
    $region3: #{_lambda_.3} parent=1 // pred_check_branch
      %14 = sbr.rel (0) target = $region5
    $region4: #{_lambda_.3} parent=1 // pred_region
      _
    $region5: #{_lambda_.3} parent=1 // pred_fallthru
      _
    // Predicated region
    $region6: #{_lambda_.3} parent=1 // pred_check
      _
    $region7: #{_lambda_.3} parent=1 // pred_check_branch
      %16 = sbr.rel (0) target = $region9
    $region8: #{_lambda_.3} parent=1 // pred_region
      _
    $region9: #{_lambda_.3} parent=1 // pred_fallthru
      _
    // Predicated region
    $region10: #{_lambda_.3} parent=1 // pred_check
      _
    $region11: #{_lambda_.3} parent=1 // pred_check_branch
      %18 = sbr.rel (0) target = $region13
    $region12: #{_lambda_.3} parent=1 // pred_region
      _
    $region13: #{_lambda_.3} parent=1 // pred_fallthru
      _
    // Predicated region
    $region14: #{_lambda_.3} parent=1 // pred_check
      _
    $region15: #{_lambda_.3} parent=1 // pred_check_branch
      %20 = sbr.rel (0) target = $region17
    $region16: #{_lambda_.3} parent=1 // pred_region
      _
    $region17: #{_lambda_.3} parent=1 // pred_fallthru
      _
    // Predicated region
    $region18: #{_lambda_.3} parent=1 // pred_check
      _
    $region19: #{_lambda_.3} parent=1 // pred_check_branch
      %22 = sbr.rel (0) target = $region21
    $region20: #{_lambda_.3} parent=1 // pred_region
      _
    $region21: #{_lambda_.3} parent=1 // pred_fallthru
      _
    // Predicated region
    $region22: #{_lambda_.3} parent=1 // pred_check
      _
    $region23: #{_lambda_.3} parent=1 // pred_check_branch
      %24 = sbr.rel (0) target = $region25
    $region24: #{_lambda_.3} parent=1 // pred_region
      _
    $region25: #{_lambda_.3} parent=1 // pred_fallthru
      _
    // Predicated region
    $region26: #{_lambda_.3} parent=1 // pred_check
      _
    $region27: #{_lambda_.3} parent=1 // pred_check_branch
      %26 = sbr.rel (0) target = $region29
    $region28: #{_lambda_.3} parent=1 // pred_region
      _
    $region29: #{_lambda_.3} parent=1 // pred_fallthru
      _
    %v27 = vld [vmem:[%s0] sm:$0x3]
    %v28 = vpack.c.bf16 %v27, %v27
    %v29 = vld [vmem:[%s1] sm:$0xf]
    %v30 = vld [vmem:[%s1 + $0x4] sm:$0xf]
    %v31 = vld [vmem:[%s1 + $0x8] sm:$0xf]
    %v32 = vld [vmem:[%s1 + $0xc] sm:$0xf]
    %v33 = vld [vmem:[%s1 + $0x10] sm:$0xf]
    %v34 = vld [vmem:[%s1 + $0x14] sm:$0xf]
    %v35 = vld [vmem:[%s1 + $0x18] sm:$0xf]
    %v36 = vld [vmem:[%s1 + $0x1c] sm:$0xf]
    %v37 = vld [vmem:[%s1 + $0x20] sm:$0xf]
    %v38 = vld [vmem:[%s1 + $0x24] sm:$0xf]
    %v39 = vld [vmem:[%s1 + $0x28] sm:$0xf]
    %v40 = vld [vmem:[%s1 + $0x2c] sm:$0xf]
    %v41 = vld [vmem:[%s1 + $0x30] sm:$0xf]
    %v42 = vld [vmem:[%s1 + $0x34] sm:$0xf]
    %v43 = vld [vmem:[%s1 + $0x38] sm:$0xf]
    %v44 = vld [vmem:[%s1 + $0x3c] sm:$0xf]
    %v45 = vld [vmem:[%s2] sm:$0x1]
    %v47 = vperm.slane %v45, 0
    %v65 = vunpack.c.l.b16 %v29
    %v66 = vunpack.c.l.b16 %v30
    %v67 = vunpack.c.l.b16 %v31
    %v68 = vunpack.c.l.b16 %v32
    %v69 = vunpack.c.l.b16 %v33
    %v70 = vunpack.c.l.b16 %v34
    %v71 = vunpack.c.l.b16 %v35
    %v72 = vunpack.c.l.b16 %v36
    %v73 = vunpack.c.l.b16 %v37
    %v74 = vunpack.c.l.b16 %v38
    %v75 = vunpack.c.l.b16 %v39
    %v76 = vunpack.c.l.b16 %v40
    %v77 = vunpack.c.l.b16 %v41
    %v78 = vunpack.c.l.b16 %v42
    %v79 = vunpack.c.l.b16 %v43
    %v80 = vunpack.c.l.b16 %v44
    %v81 = vpack.c.b16 %v66, %v65
    %v82 = vpack.c.b16 %v68, %v67
    %v83 = vpack.c.b16 %v70, %v69
    %v84 = vpack.c.b16 %v72, %v71
    %v85 = vpack.c.b16 %v74, %v73
    %v86 = vpack.c.b16 %v76, %v75
    %v87 = vpack.c.b16 %v78, %v77
    %v88 = vpack.c.b16 %v80, %v79
    %97 = vmatpush.bf16.msra.mxu0 %v88
    %98 = vmatpush.bf16.msra.mxu0 %v87
    %99 = vmatpush.bf16.msra.mxu0 %v86
    %100 = vmatpush.bf16.msra.mxu0 %v85
    %101 = vmatpush.bf16.msra.mxu0 %v84
    %102 = vmatpush.bf16.msra.mxu0 %v83
    %103 = vmatpush.bf16.msra.mxu0 %v82
    %104 = vmatpush.bf16.msra.mxu0 %v81
    %105 = vmatmul.bf16.gmra.mxu0 %v28
    %v106 = vpop.f32.mrf.mxu0
    %v107 = vadd.f32 %v47, %v106
    %v108 = vpop.f32.mrf.mxu0
    %109 = vdwg.mxu0
    %v110 = vtanh.pop %v107
    %v111 = vpack.c.bf16 %v110, %v110
    %v112 = vld [vmem:[%s3] sm:$0xf]
    %v113 = vld [vmem:[%s3 + $0x4] sm:$0xf]
    %v114 = vld [vmem:[%s3 + $0x8] sm:$0xf]
    %v115 = vld [vmem:[%s3 + $0xc] sm:$0xf]
    %v116 = vld [vmem:[%s3 + $0x10] sm:$0xf]
    %v117 = vld [vmem:[%s3 + $0x14] sm:$0xf]
    %v118 = vld [vmem:[%s3 + $0x18] sm:$0xf]
    %v119 = vld [vmem:[%s3 + $0x1c] sm:$0xf]
    %v120 = vld [vmem:[%s3 + $0x20] sm:$0xf]
    %v121 = vld [vmem:[%s3 + $0x24] sm:$0xf]
    %v122 = vld [vmem:[%s3 + $0x28] sm:$0xf]
    %v123 = vld [vmem:[%s3 + $0x2c] sm:$0xf]
    %v124 = vld [vmem:[%s3 + $0x30] sm:$0xf]
    %v125 = vld [vmem:[%s3 + $0x34] sm:$0xf]
    %v126 = vld [vmem:[%s3 + $0x38] sm:$0xf]
    %v127 = vld [vmem:[%s3 + $0x3c] sm:$0xf]
    %v128 = vld [vmem:[%s4] sm:$0x1]
    %v130 = vperm.slane %v128, 0
    %v148 = vunpack.c.l.b16 %v112
    %v149 = vunpack.c.l.b16 %v113
    %v150 = vunpack.c.l.b16 %v114
    %v151 = vunpack.c.l.b16 %v115
    %v152 = vunpack.c.l.b16 %v116
    %v153 = vunpack.c.l.b16 %v117
    %v154 = vunpack.c.l.b16 %v118
    %v155 = vunpack.c.l.b16 %v119
    %v156 = vunpack.c.l.b16 %v120
    %v157 = vunpack.c.l.b16 %v121
    %v158 = vunpack.c.l.b16 %v122
    %v159 = vunpack.c.l.b16 %v123
    %v160 = vunpack.c.l.b16 %v124
    %v161 = vunpack.c.l.b16 %v125
    %v162 = vunpack.c.l.b16 %v126
    %v163 = vunpack.c.l.b16 %v127
    %v164 = vpack.c.b16 %v149, %v148
    %v165 = vpack.c.b16 %v151, %v150
    %v166 = vpack.c.b16 %v153, %v152
    %v167 = vpack.c.b16 %v155, %v154
    %v168 = vpack.c.b16 %v157, %v156
    %v169 = vpack.c.b16 %v159, %v158
    %v170 = vpack.c.b16 %v161, %v160
    %v171 = vpack.c.b16 %v163, %v162
    %180 = vmatpush.bf16.msra.mxu0 %v171
    %181 = vmatpush.bf16.msra.mxu0 %v170
    %182 = vmatpush.bf16.msra.mxu0 %v169
    %183 = vmatpush.bf16.msra.mxu0 %v168
    %184 = vmatpush.bf16.msra.mxu0 %v167
    %185 = vmatpush.bf16.msra.mxu0 %v166
    %186 = vmatpush.bf16.msra.mxu0 %v165
    %187 = vmatpush.bf16.msra.mxu0 %v164
    %188 = vmatmul.bf16.gmra.mxu0 %v111
    %v189 = vpop.f32.mrf.mxu0
    %v190 = vadd.f32 %v130, %v189
    %v191 = vpop.f32.mrf.mxu0
    %192 = vdwg.mxu0
    %v193 = vmax.f32 %v190, 0.0
    %v194 = vpack.c.bf16 %v193, %v193
    %v195 = vld [vmem:[%s5] sm:$0xf]
    %v196 = vld [vmem:[%s5 + $0x4] sm:$0xf]
    %v197 = vld [vmem:[%s5 + $0x8] sm:$0xf]
    %v198 = vld [vmem:[%s5 + $0xc] sm:$0xf]
    %v199 = vld [vmem:[%s5 + $0x10] sm:$0xf]
    %v200 = vld [vmem:[%s5 + $0x14] sm:$0xf]
    %v201 = vld [vmem:[%s5 + $0x18] sm:$0xf]
    %v202 = vld [vmem:[%s5 + $0x1c] sm:$0xf]
    %v203 = vld [vmem:[%s5 + $0x20] sm:$0xf]
    %v204 = vld [vmem:[%s5 + $0x24] sm:$0xf]
    %v205 = vld [vmem:[%s5 + $0x28] sm:$0xf]
    %v206 = vld [vmem:[%s5 + $0x2c] sm:$0xf]
    %v207 = vld [vmem:[%s5 + $0x30] sm:$0xf]
    %v208 = vld [vmem:[%s5 + $0x34] sm:$0xf]
    %v209 = vld [vmem:[%s5 + $0x38] sm:$0xf]
    %v210 = vld [vmem:[%s5 + $0x3c] sm:$0xf]
    %v211 = vld [vmem:[%s6] sm:$0x1]
    %v213 = vperm.slane %v211, 0
    %v231 = vunpack.c.l.b16 %v195
    %v232 = vunpack.c.l.b16 %v196
    %v233 = vunpack.c.l.b16 %v197
    %v234 = vunpack.c.l.b16 %v198
    %v235 = vunpack.c.l.b16 %v199
    %v236 = vunpack.c.l.b16 %v200
    %v237 = vunpack.c.l.b16 %v201
    %v238 = vunpack.c.l.b16 %v202
    %v239 = vunpack.c.l.b16 %v203
    %v240 = vunpack.c.l.b16 %v204
    %v241 = vunpack.c.l.b16 %v205
    %v242 = vunpack.c.l.b16 %v206
    %v243 = vunpack.c.l.b16 %v207
    %v244 = vunpack.c.l.b16 %v208
    %v245 = vunpack.c.l.b16 %v209
    %v246 = vunpack.c.l.b16 %v210
    %v247 = vpack.c.b16 %v232, %v231
    %v248 = vpack.c.b16 %v234, %v233
    %v249 = vpack.c.b16 %v236, %v235
    %v250 = vpack.c.b16 %v238, %v237
    %v251 = vpack.c.b16 %v240, %v239
    %v252 = vpack.c.b16 %v242, %v241
    %v253 = vpack.c.b16 %v244, %v243
    %v254 = vpack.c.b16 %v246, %v245
    %263 = vmatpush.bf16.msra.mxu0 %v254
    %264 = vmatpush.bf16.msra.mxu0 %v253
    %265 = vmatpush.bf16.msra.mxu0 %v252
    %266 = vmatpush.bf16.msra.mxu0 %v251
    %267 = vmatpush.bf16.msra.mxu0 %v250
    %268 = vmatpush.bf16.msra.mxu0 %v249
    %269 = vmatpush.bf16.msra.mxu0 %v248
    %270 = vmatpush.bf16.msra.mxu0 %v247
    %271 = vmatmul.bf16.gmra.mxu0 %v194
    %v272 = vpop.f32.mrf.mxu0
    %v273 = vadd.f32 %v213, %v272
    %v274 = vpop.f32.mrf.mxu0
    %275 = vdwg.mxu0
    %276 = vst [vmem:[#allocation2] sm:$0x3] %v273
    // Predicated region
    $region30: #{_lambda_.3} parent=1 // pred_check
      _
    $region31: #{_lambda_.3} parent=1 // pred_check_branch
      %278 = sbr.rel (0) target = $region33
    $region32: #{_lambda_.3} parent=1 // pred_region
      %280 = vsyncadd [#allocation3], 0
      %s282 = sshll.u32 [#allocation2], 4
      %s283 = int_to_ptr.vmem [resolvable:$true] %s282
      %s284 = sshll.u32 %s7, 4
      %s285 = int_to_ptr.hbm [resolvable:$true] %s284
      %287 = dma.vmem_to_hbm [thread:$0]  %s283, 32, %s285, [#allocation3]
    $region33: #{_lambda_.3} parent=1 // pred_fallthru
      _
    // Predicated region
    $region34: #{_lambda_.3} parent=1 // pred_check
      _
    $region35: #{_lambda_.3} parent=1 // pred_check_branch
      %289 = sbr.rel (0) target = $region37
    $region36: #{_lambda_.3} parent=1 // pred_region
      %291 = dma.done [#allocation3], 32
    $region37: #{_lambda_.3} parent=1 // pred_fallthru
      _
    %292 = vsyncpa [#allocation3], 1

// kernel: _lambda_.2
$region0: #{_lambda_.2}
  #allocation0 [shape = 'u32[]', space=smem, size = 0x4, offset = 0x4, fixed_abs, tag = 'smem constant byte address 0x4 - core index']
  #allocation1 [shape = 'u32[72,128]{1,0:T(1,128)}', space=vmem, size = 0x9000, scoped, tag = 'internal scratch']
  #allocation2 [shape = 'f32[32,384]{1,0:T(8,128)}', space=vmem, size = 0xc000, scoped, tag = 'scratch operand']
  #allocation3 [shape = 'f32[32,128]{1,0:T(8,128)}', space=vmem, size = 0x4000, scoped, tag = 'scratch operand']
  %s0 = inlined_call_operand.vmem [shape: f32[32,128], index: 0, kind: input, shape index: {}]
  %s1 = inlined_call_operand.vmem [shape: f32[32,32], index: 1, kind: input, shape index: {}]
  %s2 = inlined_call_operand.vmem [shape: f32[1,128], index: 2, kind: input, shape index: {}]
  %s3 = inlined_call_operand.vmem [shape: f32[1,128], index: 3, kind: input, shape index: {}]
  %s4 = inlined_call_operand.vmem [shape: bf16[2,128,384], index: 4, kind: input, shape index: {}]
  %s5 = inlined_call_operand.vmem [shape: f32[2,1,384], index: 5, kind: input, shape index: {}]
  %s6 = inlined_call_operand.vmem [shape: bf16[2,128,128], index: 6, kind: input, shape index: {}]
  %s7 = inlined_call_operand.vmem [shape: f32[2,1,128], index: 7, kind: input, shape index: {}]
  %s8 = inlined_call_operand.vmem [shape: f32[2,1,128], index: 8, kind: input, shape index: {}]
  %s9 = inlined_call_operand.vmem [shape: f32[2,1,128], index: 9, kind: input, shape index: {}]
  %s10 = inlined_call_operand.hbm [shape: bf16[2,128,512], index: 10, kind: input, shape index: {}]
  %s11 = inlined_call_operand.vmem [shape: f32[2,1,512], index: 11, kind: input, shape index: {}]
  %s12 = inlined_call_operand.hbm [shape: bf16[2,512,128], index: 12, kind: input, shape index: {}]
  %s13 = inlined_call_operand.vmem [shape: f32[2,1,128], index: 13, kind: input, shape index: {}]
  %s14 = inlined_call_operand.vmem [shape: f32[2,1,128], index: 14, kind: input, shape index: {}]
  %s15 = inlined_call_operand.vmem [shape: f32[2,1,128], index: 15, kind: input, shape index: {}]
  %s16 = inlined_call_operand.vmem [shape: f32[32,128], index: 16, kind: output, shape index: {}]
  %s17 = sld [smem:[#allocation0]]
  $region109: #{_lambda_.2} parent=0
    _
  %s19 = ssub.s32 1, %s17
  %s20 = scalar_select 0, %s19, %s17
  $region1: #{_lambda_.2} parent=0
    #allocation4 [shape = 'u8[262144]{0}', space=vmem, size = 0x40000, scoped, tag = 'input window, operand 10']
    #allocation5 [shape = 's32[2]{0}', space=sflag, size = 0x8, scoped, tag = 'scoped memory for _lambda_.2']
    #allocation6 [shape = 'u8[262144]{0}', space=vmem, size = 0x40000, scoped, tag = 'input window, operand 12']
    #allocation7 [shape = 's32[2]{0}', space=sflag, size = 0x8, scoped, tag = 'scoped memory for _lambda_.2']
    %21 = vsyncpa [#allocation5], 0
    %s22 = scalar_lea.sflag [#allocation5], 1
    %23 = vsyncpa %s22, 0
    %24 = vsyncpa [#allocation7], 0
    %s25 = scalar_lea.sflag [#allocation7], 1
    %26 = vsyncpa %s25, 0
    loop: start=0, step=1, limit=4
    $region2: #{_lambda_.2} parent=1 // loop_pre_header
      _
    $region3: #{_lambda_.2} parent=1 // loop_header
      %s28 = sphi 0, %s32
      %p29 = scmp.ge.s32.totalorder %s28, 4
      %s36 = sphi 0, %s36
      %s38 = sphi 0, %s36
      %s39 = sphi 0, %s38
      %s53 = sphi 0, %s39
      %s57 = sphi 0, %s57
      %s59 = sphi 0, %s57
      %s60 = sphi 0, %s59
      %s74 = sphi 0, %s60
      %s78 = sphi 0, %s78
      %s80 = sphi 0, %s78
      %s81 = sphi 0, %s80
      %s95 = sphi 0, %s81
      %s99 = sphi 0, %s99
      %s101 = sphi 0, %s99
      %s102 = sphi 0, %s101
      %s116 = sphi 0, %s102
      %s122 = sphi 0, %s124
      %s125 = sphi 0, %s122
      %s126 = sphi 0, %s125
      %s142 = sphi 0, %s126
      %s148 = sphi 0, %s150
      %s151 = sphi 0, %s148
      %s152 = sphi 0, %s151
      %s168 = sphi 0, %s152
      %s174 = sphi 0, %s176
      %s177 = sphi 0, %s174
      %s178 = sphi 0, %s177
      %s194 = sphi 0, %s178
      %s200 = sphi 0, %s202
      %s203 = sphi 0, %s200
      %s204 = sphi 0, %s203
      %s220 = sphi 0, %s204
      %s226 = sphi 0, %s228
      %s229 = sphi 0, %s226
      %s230 = sphi 0, %s229
      %s246 = sphi 0, %s230
      %s252 = sphi 0, %s254
      %s255 = sphi 0, %s252
      %s256 = sphi 0, %s255
      %s272 = sphi 0, %s256
      %s278 = sphi 0, %s280
      %s281 = sphi 0, %s278
      %s282 = sphi 0, %s281
      %s298 = sphi 0, %s282
      %s304 = sphi 0, %s306
      %s307 = sphi 0, %s304
      %s308 = sphi 0, %s307
      %s324 = sphi 0, %s308
      %s330 = sphi 0, %s332
      %s333 = sphi 0, %s330
      %s334 = sphi 0, %s333
      %s350 = sphi 0, %s334
      %s356 = sphi 0, %s358
      %s359 = sphi 0, %s356
      %s360 = sphi 0, %s359
      %s376 = sphi 0, %s360
      %s382 = sphi 0, %s384
      %s385 = sphi 0, %s382
      %s386 = sphi 0, %s385
      %s402 = sphi 0, %s386
      %s408 = sphi 0, %s410
      %s411 = sphi 0, %s408
      %s412 = sphi 0, %s411
      %s428 = sphi 0, %s412
      %s432 = sphi 0, %s432
      %s434 = sphi 0, %s432
      %s435 = sphi 0, %s434
      %s449 = sphi 0, %s435
    $region4: #{_lambda_.2} parent=1 // loop_header_branch
      %31 = sbr.rel (%p29) target = $region8
    $region5: #{_lambda_.2} parent=1 // loop_body
      %s33 = ssub.s32 %s28, 1
      %s34 = ssub.s32 %s28, 2
      %s35 = sadd.s32 %s28, 1
      %s37 = sadd.s32 %s36, 1
      %p40 = scmp.eq.s32.totalorder %s28, 1
      %p41 = scmp.ne.s32.totalorder %s36, %s38
      %p42 = scmp.eq.s32.totalorder %s28, 0
      %p43 = por %p41, %p42
      %p44 = scmp.ne.s32.totalorder %s36, %s38
      %p45 = scmp.eq.s32.totalorder %s33, 1
      %p46 = por %p44, %p45
      %p47 = scmp.ne.s32.totalorder %s38, %s39
      %p48 = scmp.eq.s32.totalorder %s33, 0
      %p49 = por %p47, %p48
      %p50 = scmp.ne.s32.totalorder %s38, %s39
      %p51 = scmp.eq.s32.totalorder %s34, 1
      %p52 = por %p50, %p51
      %p54 = scmp.ne.s32.totalorder %s39, %s53
      %p55 = scmp.eq.s32.totalorder %s34, 0
      %p56 = por %p54, %p55
      %s58 = sadd.s32 %s57, 1
      %p61 = scmp.eq.s32.totalorder %s28, 1
      %p62 = scmp.ne.s32.totalorder %s57, %s59
      %p63 = scmp.eq.s32.totalorder %s28, 0
      %p64 = por %p62, %p63
      %p65 = scmp.ne.s32.totalorder %s57, %s59
      %p66 = scmp.eq.s32.totalorder %s33, 1
      %p67 = por %p65, %p66
      %p68 = scmp.ne.s32.totalorder %s59, %s60
      %p69 = scmp.eq.s32.totalorder %s33, 0
      %p70 = por %p68, %p69
      %p71 = scmp.ne.s32.totalorder %s59, %s60
      %p72 = scmp.eq.s32.totalorder %s34, 1
      %p73 = por %p71, %p72
      %p75 = scmp.ne.s32.totalorder %s60, %s74
      %p76 = scmp.eq.s32.totalorder %s34, 0
      %p77 = por %p75, %p76
      %s79 = sadd.s32 %s78, 1
      %p82 = scmp.eq.s32.totalorder %s28, 1
      %p83 = scmp.ne.s32.totalorder %s78, %s80
      %p84 = scmp.eq.s32.totalorder %s28, 0
      %p85 = por %p83, %p84
      %p86 = scmp.ne.s32.totalorder %s78, %s80
      %p87 = scmp.eq.s32.totalorder %s33, 1
      %p88 = por %p86, %p87
      %p89 = scmp.ne.s32.totalorder %s80, %s81
      %p90 = scmp.eq.s32.totalorder %s33, 0
      %p91 = por %p89, %p90
      %p92 = scmp.ne.s32.totalorder %s80, %s81
      %p93 = scmp.eq.s32.totalorder %s34, 1
      %p94 = por %p92, %p93
      %p96 = scmp.ne.s32.totalorder %s81, %s95
      %p97 = scmp.eq.s32.totalorder %s34, 0
      %p98 = por %p96, %p97
      %s100 = sadd.s32 %s99, 1
      %p103 = scmp.eq.s32.totalorder %s28, 1
      %p104 = scmp.ne.s32.totalorder %s99, %s101
      %p105 = scmp.eq.s32.totalorder %s28, 0
      %p106 = por %p104, %p105
      %p107 = scmp.ne.s32.totalorder %s99, %s101
      %p108 = scmp.eq.s32.totalorder %s33, 1
      %p109 = por %p107, %p108
      %p110 = scmp.ne.s32.totalorder %s101, %s102
      %p111 = scmp.eq.s32.totalorder %s33, 0
      %p112 = por %p110, %p111
      %p113 = scmp.ne.s32.totalorder %s101, %s102
      %p114 = scmp.eq.s32.totalorder %s34, 1
      %p115 = por %p113, %p114
      %p117 = scmp.ne.s32.totalorder %s102, %s116
      %p118 = scmp.eq.s32.totalorder %s34, 0
      %p119 = por %p117, %p118
      %s120 = ssub.s32 %s28, %s35
      %p121 = scmp.eq.s32.totalorder %s120, 0
      %s123 = sadd.s32 %s122, 1
      %s124 = scalar_select %p121, %s122, %s123
      %p127 = pneg %p121
      %p128 = scmp.eq.s32.totalorder %s28, 1
      %p129 = por %p127, %p128
      %p130 = scmp.ne.s32.totalorder %s122, %s125
      %p131 = scmp.eq.s32.totalorder %s28, 0
      %p132 = por %p130, %p131
      %p133 = scmp.ne.s32.totalorder %s122, %s125
      %p134 = scmp.eq.s32.totalorder %s33, 1
      %p135 = por %p133, %p134
      %p136 = scmp.ne.s32.totalorder %s125, %s126
      %p137 = scmp.eq.s32.totalorder %s33, 0
      %p138 = por %p136, %p137
      %p139 = scmp.ne.s32.totalorder %s125, %s126
      %p140 = scmp.eq.s32.totalorder %s34, 1
      %p141 = por %p139, %p140
      %p143 = scmp.ne.s32.totalorder %s126, %s142
      %p144 = scmp.eq.s32.totalorder %s34, 0
      %p145 = por %p143, %p144
      %s146 = ssub.s32 %s28, %s35
      %p147 = scmp.eq.s32.totalorder %s146, 0
      %s149 = sadd.s32 %s148, 1
      %s150 = scalar_select %p147, %s148, %s149
      %p153 = pneg %p147
      %p154 = scmp.eq.s32.totalorder %s28, 1
      %p155 = por %p153, %p154
      %p156 = scmp.ne.s32.totalorder %s148, %s151
      %p157 = scmp.eq.s32.totalorder %s28, 0
      %p158 = por %p156, %p157
      %p159 = scmp.ne.s32.totalorder %s148, %s151
      %p160 = scmp.eq.s32.totalorder %s33, 1
      %p161 = por %p159, %p160
      %p162 = scmp.ne.s32.totalorder %s151, %s152
      %p163 = scmp.eq.s32.totalorder %s33, 0
      %p164 = por %p162, %p163
      %p165 = scmp.ne.s32.totalorder %s151, %s152
      %p166 = scmp.eq.s32.totalorder %s34, 1
      %p167 = por %p165, %p166
      %p169 = scmp.ne.s32.totalorder %s152, %s168
      %p170 = scmp.eq.s32.totalorder %s34, 0
      %p171 = por %p169, %p170
      %s172 = ssub.s32 %s28, %s35
      %p173 = scmp.eq.s32.totalorder %s172, 0
      %s175 = sadd.s32 %s174, 1
      %s176 = scalar_select %p173, %s174, %s175
      %p179 = pneg %p173
      %p180 = scmp.eq.s32.totalorder %s28, 1
      %p181 = por %p179, %p180
      %p182 = scmp.ne.s32.totalorder %s174, %s177
      %p183 = scmp.eq.s32.totalorder %s28, 0
      %p184 = por %p182, %p183
      %p185 = scmp.ne.s32.totalorder %s174, %s177
      %p186 = scmp.eq.s32.totalorder %s33, 1
      %p187 = por %p185, %p186
      %p188 = scmp.ne.s32.totalorder %s177, %s178
      %p189 = scmp.eq.s32.totalorder %s33, 0
      %p190 = por %p188, %p189
      %p191 = scmp.ne.s32.totalorder %s177, %s178
      %p192 = scmp.eq.s32.totalorder %s34, 1
      %p193 = por %p191, %p192
      %p195 = scmp.ne.s32.totalorder %s178, %s194
      %p196 = scmp.eq.s32.totalorder %s34, 0
      %p197 = por %p195, %p196
      %s198 = ssub.s32 %s28, %s35
      %p199 = scmp.eq.s32.totalorder %s198, 0
      %s201 = sadd.s32 %s200, 1
      %s202 = scalar_select %p199, %s200, %s201
      %p205 = pneg %p199
      %p206 = scmp.eq.s32.totalorder %s28, 1
      %p207 = por %p205, %p206
      %p208 = scmp.ne.s32.totalorder %s200, %s203
      %p209 = scmp.eq.s32.totalorder %s28, 0
      %p210 = por %p208, %p209
      %p211 = scmp.ne.s32.totalorder %s200, %s203
      %p212 = scmp.eq.s32.totalorder %s33, 1
      %p213 = por %p211, %p212
      %p214 = scmp.ne.s32.totalorder %s203, %s204
      %p215 = scmp.eq.s32.totalorder %s33, 0
      %p216 = por %p214, %p215
      %p217 = scmp.ne.s32.totalorder %s203, %s204
      %p218 = scmp.eq.s32.totalorder %s34, 1
      %p219 = por %p217, %p218
      %p221 = scmp.ne.s32.totalorder %s204, %s220
      %p222 = scmp.eq.s32.totalorder %s34, 0
      %p223 = por %p221, %p222
      %s224 = ssub.s32 %s28, %s35
      %p225 = scmp.eq.s32.totalorder %s224, 0
      %s227 = sadd.s32 %s226, 1
      %s228 = scalar_select %p225, %s226, %s227
      %p231 = pneg %p225
      %p232 = scmp.eq.s32.totalorder %s28, 1
      %p233 = por %p231, %p232
      %p234 = scmp.ne.s32.totalorder %s226, %s229
      %p235 = scmp.eq.s32.totalorder %s28, 0
      %p236 = por %p234, %p235
      %p237 = scmp.ne.s32.totalorder %s226, %s229
      %p238 = scmp.eq.s32.totalorder %s33, 1
      %p239 = por %p237, %p238
      %p240 = scmp.ne.s32.totalorder %s229, %s230
      %p241 = scmp.eq.s32.totalorder %s33, 0
      %p242 = por %p240, %p241
      %p243 = scmp.ne.s32.totalorder %s229, %s230
      %p244 = scmp.eq.s32.totalorder %s34, 1
      %p245 = por %p243, %p244
      %p247 = scmp.ne.s32.totalorder %s230, %s246
      %p248 = scmp.eq.s32.totalorder %s34, 0
      %p249 = por %p247, %p248
      %s250 = ssub.s32 %s28, %s35
      %p251 = scmp.eq.s32.totalorder %s250, 0
      %s253 = sadd.s32 %s252, 1
      %s254 = scalar_select %p251, %s252, %s253
      %p257 = pneg %p251
      %p258 = scmp.eq.s32.totalorder %s28, 1
      %p259 = por %p257, %p258
      %p260 = scmp.ne.s32.totalorder %s252, %s255
      %p261 = scmp.eq.s32.totalorder %s28, 0
      %p262 = por %p260, %p261
      %p263 = scmp.ne.s32.totalorder %s252, %s255
      %p264 = scmp.eq.s32.totalorder %s33, 1
      %p265 = por %p263, %p264
      %p266 = scmp.ne.s32.totalorder %s255, %s256
      %p267 = scmp.eq.s32.totalorder %s33, 0
      %p268 = por %p266, %p267
      %p269 = scmp.ne.s32.totalorder %s255, %s256
      %p270 = scmp.eq.s32.totalorder %s34, 1
      %p271 = por %p269, %p270
      %p273 = scmp.ne.s32.totalorder %s256, %s272
      %p274 = scmp.eq.s32.totalorder %s34, 0
      %p275 = por %p273, %p274
      %s276 = ssub.s32 %s28, %s35
      %p277 = scmp.eq.s32.totalorder %s276, 0
      %s279 = sadd.s32 %s278, 1
      %s280 = scalar_select %p277, %s278, %s279
      %p283 = pneg %p277
      %p284 = scmp.eq.s32.totalorder %s28, 1
      %p285 = por %p283, %p284
      %p286 = scmp.ne.s32.totalorder %s278, %s281
      %p287 = scmp.eq.s32.totalorder %s28, 0
      %p288 = por %p286, %p287
      %p289 = scmp.ne.s32.totalorder %s278, %s281
      %p290 = scmp.eq.s32.totalorder %s33, 1
      %p291 = por %p289, %p290
      %p292 = scmp.ne.s32.totalorder %s281, %s282
      %p293 = scmp.eq.s32.totalorder %s33, 0
      %p294 = por %p292, %p293
      %p295 = scmp.ne.s32.totalorder %s281, %s282
      %p296 = scmp.eq.s32.totalorder %s34, 1
      %p297 = por %p295, %p296
      %p299 = scmp.ne.s32.totalorder %s282, %s298
      %p300 = scmp.eq.s32.totalorder %s34, 0
      %p301 = por %p299, %p300
      %s302 = ssub.s32 %s28, %s35
      %p303 = scmp.eq.s32.totalorder %s302, 0
      %s305 = sadd.s32 %s304, 1
      %s306 = scalar_select %p303, %s304, %s305
      %p309 = pneg %p303
      %p310 = scmp.eq.s32.totalorder %s28, 1
      %p311 = por %p309, %p310
      %p312 = scmp.ne.s32.totalorder %s304, %s307
      %p313 = scmp.eq.s32.totalorder %s28, 0
      %p314 = por %p312, %p313
      %p315 = scmp.ne.s32.totalorder %s304, %s307
      %p316 = scmp.eq.s32.totalorder %s33, 1
      %p317 = por %p315, %p316
      %p318 = scmp.ne.s32.totalorder %s307, %s308
      %p319 = scmp.eq.s32.totalorder %s33, 0
      %p320 = por %p318, %p319
      %p321 = scmp.ne.s32.totalorder %s307, %s308
      %p322 = scmp.eq.s32.totalorder %s34, 1
      %p323 = por %p321, %p322
      %p325 = scmp.ne.s32.totalorder %s308, %s324
      %p326 = scmp.eq.s32.totalorder %s34, 0
      %p327 = por %p325, %p326
      %s328 = ssub.s32 %s28, %s35
      %p329 = scmp.eq.s32.totalorder %s328, 0
      %s331 = sadd.s32 %s330, 1
      %s332 = scalar_select %p329, %s330, %s331
      %p335 = pneg %p329
      %p336 = scmp.eq.s32.totalorder %s28, 1
      %p337 = por %p335, %p336
      %p338 = scmp.ne.s32.totalorder %s330, %s333
      %p339 = scmp.eq.s32.totalorder %s28, 0
      %p340 = por %p338, %p339
      %p341 = scmp.ne.s32.totalorder %s330, %s333
      %p342 = scmp.eq.s32.totalorder %s33, 1
      %p343 = por %p341, %p342
      %p344 = scmp.ne.s32.totalorder %s333, %s334
      %p345 = scmp.eq.s32.totalorder %s33, 0
      %p346 = por %p344, %p345
      %p347 = scmp.ne.s32.totalorder %s333, %s334
      %p348 = scmp.eq.s32.totalorder %s34, 1
      %p349 = por %p347, %p348
      %p351 = scmp.ne.s32.totalorder %s334, %s350
      %p352 = scmp.eq.s32.totalorder %s34, 0
      %p353 = por %p351, %p352
      %s354 = ssub.s32 %s28, %s35
      %p355 = scmp.eq.s32.totalorder %s354, 0
      %s357 = sadd.s32 %s356, 1
      %s358 = scalar_select %p355, %s356, %s357
      %p361 = pneg %p355
      %p362 = scmp.eq.s32.totalorder %s28, 1
      %p363 = por %p361, %p362
      %p364 = scmp.ne.s32.totalorder %s356, %s359
      %p365 = scmp.eq.s32.totalorder %s28, 0
      %p366 = por %p364, %p365
      %p367 = scmp.ne.s32.totalorder %s356, %s359
      %p368 = scmp.eq.s32.totalorder %s33, 1
      %p369 = por %p367, %p368
      %p370 = scmp.ne.s32.totalorder %s359, %s360
      %p371 = scmp.eq.s32.totalorder %s33, 0
      %p372 = por %p370, %p371
      %p373 = scmp.ne.s32.totalorder %s359, %s360
      %p374 = scmp.eq.s32.totalorder %s34, 1
      %p375 = por %p373, %p374
      %p377 = scmp.ne.s32.totalorder %s360, %s376
      %p378 = scmp.eq.s32.totalorder %s34, 0
      %p379 = por %p377, %p378
      %s380 = ssub.s32 %s28, %s35
      %p381 = scmp.eq.s32.totalorder %s380, 0
      %s383 = sadd.s32 %s382, 1
      %s384 = scalar_select %p381, %s382, %s383
      %p387 = pneg %p381
      %p388 = scmp.eq.s32.totalorder %s28, 1
      %p389 = por %p387, %p388
      %p390 = scmp.ne.s32.totalorder %s382, %s385
      %p391 = scmp.eq.s32.totalorder %s28, 0
      %p392 = por %p390, %p391
      %p393 = scmp.ne.s32.totalorder %s382, %s385
      %p394 = scmp.eq.s32.totalorder %s33, 1
      %p395 = por %p393, %p394
      %p396 = scmp.ne.s32.totalorder %s385, %s386
      %p397 = scmp.eq.s32.totalorder %s33, 0
      %p398 = por %p396, %p397
      %p399 = scmp.ne.s32.totalorder %s385, %s386
      %p400 = scmp.eq.s32.totalorder %s34, 1
      %p401 = por %p399, %p400
      %p403 = scmp.ne.s32.totalorder %s386, %s402
      %p404 = scmp.eq.s32.totalorder %s34, 0
      %p405 = por %p403, %p404
      %s406 = ssub.s32 %s28, %s35
      %p407 = scmp.eq.s32.totalorder %s406, 0
      %s409 = sadd.s32 %s408, 1
      %s410 = scalar_select %p407, %s408, %s409
      %p413 = pneg %p407
      %p414 = scmp.eq.s32.totalorder %s28, 1
      %p415 = por %p413, %p414
      %p416 = scmp.ne.s32.totalorder %s408, %s411
      %p417 = scmp.eq.s32.totalorder %s28, 0
      %p418 = por %p416, %p417
      %p419 = scmp.ne.s32.totalorder %s408, %s411
      %p420 = scmp.eq.s32.totalorder %s33, 1
      %p421 = por %p419, %p420
      %p422 = scmp.ne.s32.totalorder %s411, %s412
      %p423 = scmp.eq.s32.totalorder %s33, 0
      %p424 = por %p422, %p423
      %p425 = scmp.ne.s32.totalorder %s411, %s412
      %p426 = scmp.eq.s32.totalorder %s34, 1
      %p427 = por %p425, %p426
      %p429 = scmp.ne.s32.totalorder %s412, %s428
      %p430 = scmp.eq.s32.totalorder %s34, 0
      %p431 = por %p429, %p430
      %s433 = sadd.s32 %s432, 1
      %p436 = scmp.eq.s32.totalorder %s28, 1
      %p437 = scmp.ne.s32.totalorder %s432, %s434
      %p438 = scmp.eq.s32.totalorder %s28, 0
      %p439 = por %p437, %p438
      %p440 = scmp.ne.s32.totalorder %s432, %s434
      %p441 = scmp.eq.s32.totalorder %s33, 1
      %p442 = por %p440, %p441
      %p443 = scmp.ne.s32.totalorder %s434, %s435
      %p444 = scmp.eq.s32.totalorder %s33, 0
      %p445 = por %p443, %p444
      %p446 = scmp.ne.s32.totalorder %s434, %s435
      %p447 = scmp.eq.s32.totalorder %s34, 1
      %p448 = por %p446, %p447
      %p450 = scmp.ne.s32.totalorder %s435, %s449
      %p451 = scmp.eq.s32.totalorder %s34, 0
      %p452 = por %p450, %p451
      %p453 = scmp.le.s32.totalorder 1, %s28
      %p454 = scmp.lt.s32.totalorder %s28, 3
      %p455 = pnand %p453, %p454
      %p456 = pneg %p455
      // Predicated region
      $region9: #{_lambda_.2} parent=5 // pred_check
        _
      $region10: #{_lambda_.2} parent=5 // pred_check_branch
        %458 = sbr.rel (%p455) target = $region12
      $region11: #{_lambda_.2} parent=5 // pred_region
        %s459 = ssub.s32 %s28, 1
        // Predicated region
        $region13: #{_lambda_.2} parent=11 // pred_check
          %p460 = pneg %p49
        $region14: #{_lambda_.2} parent=11 // pred_check_branch
          %462 = sbr.rel (%p460) target = $region16
        $region15: #{_lambda_.2} parent=11 // pred_region
          _
        $region16: #{_lambda_.2} parent=11 // pred_fallthru
          _
        // Predicated region
        $region17: #{_lambda_.2} parent=11 // pred_check
          %p463 = pneg %p70
        $region18: #{_lambda_.2} parent=11 // pred_check_branch
          %465 = sbr.rel (%p463) target = $region20
        $region19: #{_lambda_.2} parent=11 // pred_region
          _
        $region20: #{_lambda_.2} parent=11 // pred_fallthru
          _
        // Predicated region
        $region21: #{_lambda_.2} parent=11 // pred_check
          %p466 = pneg %p91
        $region22: #{_lambda_.2} parent=11 // pred_check_branch
          %468 = sbr.rel (%p466) target = $region24
        $region23: #{_lambda_.2} parent=11 // pred_region
          _
        $region24: #{_lambda_.2} parent=11 // pred_fallthru
          _
        // Predicated region
        $region25: #{_lambda_.2} parent=11 // pred_check
          %p469 = pneg %p112
        $region26: #{_lambda_.2} parent=11 // pred_check_branch
          %471 = sbr.rel (%p469) target = $region28
        $region27: #{_lambda_.2} parent=11 // pred_region
          _
        $region28: #{_lambda_.2} parent=11 // pred_fallthru
          _
      $region12: #{_lambda_.2} parent=5 // pred_fallthru
        _
      %p472 = scmp.lt.s32.totalorder %s28, 2
      // Predicated region
      $region29: #{_lambda_.2} parent=5 // pred_check
        %p473 = pneg %p472
      $region30: #{_lambda_.2} parent=5 // pred_check_branch
        %475 = sbr.rel (%p473) target = $region32
      $region31: #{_lambda_.2} parent=5 // pred_region
        // Predicated region
        $region33: #{_lambda_.2} parent=31 // pred_check
          %p476 = pneg %p132
        $region34: #{_lambda_.2} parent=31 // pred_check_branch
          %478 = sbr.rel (%p476) target = $region36
        $region35: #{_lambda_.2} parent=31 // pred_region
          %p479 = scmp.lt.s32.totalorder %s28, 1
          %s480 = scalar_select %p479, %s28, 1
          %s481 = smul.addr %s480, 48
          %s482 = smul.addr %s481, 4
          %s483 = scalar_lea.vmem %s4, %s482
        $region36: #{_lambda_.2} parent=31 // pred_fallthru
          _
        // Predicated region
        $region37: #{_lambda_.2} parent=31 // pred_check
          %p484 = pneg %p158
        $region38: #{_lambda_.2} parent=31 // pred_check_branch
          %486 = sbr.rel (%p484) target = $region40
        $region39: #{_lambda_.2} parent=31 // pred_region
          %p487 = scmp.lt.s32.totalorder %s28, 1
          %s488 = scalar_select %p487, %s28, 1
          %s489 = smul.addr %s488, 3
          %s490 = scalar_lea.vmem %s5, %s489
        $region40: #{_lambda_.2} parent=31 // pred_fallthru
          _
        // Predicated region
        $region41: #{_lambda_.2} parent=31 // pred_check
          %p491 = pneg %p184
        $region42: #{_lambda_.2} parent=31 // pred_check_branch
          %493 = sbr.rel (%p491) target = $region44
        $region43: #{_lambda_.2} parent=31 // pred_region
          %p494 = scmp.lt.s32.totalorder %s28, 1
          %s495 = scalar_select %p494, %s28, 1
          %s496 = smul.addr %s495, 16
          %s497 = smul.addr %s496, 4
          %s498 = scalar_lea.vmem %s6, %s497
        $region44: #{_lambda_.2} parent=31 // pred_fallthru
          _
        // Predicated region
        $region45: #{_lambda_.2} parent=31 // pred_check
          %p499 = pneg %p210
        $region46: #{_lambda_.2} parent=31 // pred_check_branch
          %501 = sbr.rel (%p499) target = $region48
        $region47: #{_lambda_.2} parent=31 // pred_region
          %p502 = scmp.lt.s32.totalorder %s28, 1
          %s503 = scalar_select %p502, %s28, 1
          %s504 = scalar_lea.vmem %s7, %s503
        $region48: #{_lambda_.2} parent=31 // pred_fallthru
          _
        // Predicated region
        $region49: #{_lambda_.2} parent=31 // pred_check
          %p505 = pneg %p236
        $region50: #{_lambda_.2} parent=31 // pred_check_branch
          %507 = sbr.rel (%p505) target = $region52
        $region51: #{_lambda_.2} parent=31 // pred_region
          %p508 = scmp.lt.s32.totalorder %s28, 1
          %s509 = scalar_select %p508, %s28, 1
          %s510 = scalar_lea.vmem %s8, %s509
        $region52: #{_lambda_.2} parent=31 // pred_fallthru
          _
        // Predicated region
        $region53: #{_lambda_.2} parent=31 // pred_check
          %p511 = pneg %p262
        $region54: #{_lambda_.2} parent=31 // pred_check_branch
          %513 = sbr.rel (%p511) target = $region56
        $region55: #{_lambda_.2} parent=31 // pred_region
          %p514 = scmp.lt.s32.totalorder %s28, 1
          %s515 = scalar_select %p514, %s28, 1
          %s516 = scalar_lea.vmem %s9, %s515
        $region56: #{_lambda_.2} parent=31 // pred_fallthru
          _
        // Predicated region
        $region57: #{_lambda_.2} parent=31 // pred_check
          %p517 = pneg %p288
        $region58: #{_lambda_.2} parent=31 // pred_check_branch
          %519 = sbr.rel (%p517) target = $region60
        $region59: #{_lambda_.2} parent=31 // pred_region
          %s520 = sand.u32 %s278, 1
          %s521 = scalar_lea.sflag [#allocation5], %s520
          %s522 = sand.u32 %s278, 1
          %s523 = smul.addr %s522, 256
          %s524 = scalar_lea.vmem [#allocation4], %s523
          %526 = vsyncadd %s521, 0
          %s527 = smul.addr %s28, 64
          %s528 = smul.addr %s527, 4
          %s529 = scalar_lea.hbm %s10, %s528
          %s530 = sshll.u32 %s529, 4
          %s531 = int_to_ptr.hbm [resolvable:$true] %s530
          %s532 = sshll.u32 %s524, 4
          %s533 = int_to_ptr.vmem [resolvable:$true] %s532
          %538 = dma.hbm_to_vmem [thread:$0]  %s531, 4096, %s533, %s521, 256, 256, 16
        $region60: #{_lambda_.2} parent=31 // pred_fallthru
          _
        // Predicated region
        $region61: #{_lambda_.2} parent=31 // pred_check
          %p539 = pneg %p314
        $region62: #{_lambda_.2} parent=31 // pred_check_branch
          %541 = sbr.rel (%p539) target = $region64
        $region63: #{_lambda_.2} parent=31 // pred_region
          %p542 = scmp.lt.s32.totalorder %s28, 1
          %s543 = scalar_select %p542, %s28, 1
          %s544 = smul.addr %s543, 4
          %s545 = scalar_lea.vmem %s11, %s544
        $region64: #{_lambda_.2} parent=31 // pred_fallthru
          _
        // Predicated region
        $region65: #{_lambda_.2} parent=31 // pred_check
          %p546 = pneg %p340
        $region66: #{_lambda_.2} parent=31 // pred_check_branch
          %548 = sbr.rel (%p546) target = $region68
        $region67: #{_lambda_.2} parent=31 // pred_region
          %s549 = sand.u32 %s330, 1
          %s550 = scalar_lea.sflag [#allocation7], %s549
          %s551 = sand.u32 %s330, 1
          %s552 = smul.addr %s551, 256
          %s553 = scalar_lea.vmem [#allocation6], %s552
          %555 = vsyncadd %s550, 0
          %s556 = smul.addr %s28, 64
          %s557 = smul.addr %s556, 4
          %s558 = scalar_lea.hbm %s12, %s557
          %s559 = sshll.u32 %s558, 4
          %s560 = int_to_ptr.hbm [resolvable:$true] %s559
          %s561 = sshll.u32 %s553, 4
          %s562 = int_to_ptr.vmem [resolvable:$true] %s561
          %567 = dma.hbm_to_vmem [thread:$0]  %s560, 4096, %s562, %s550, 64, 64, 4
        $region68: #{_lambda_.2} parent=31 // pred_fallthru
          _
        // Predicated region
        $region69: #{_lambda_.2} parent=31 // pred_check
          %p568 = pneg %p366
        $region70: #{_lambda_.2} parent=31 // pred_check_branch
          %570 = sbr.rel (%p568) target = $region72
        $region71: #{_lambda_.2} parent=31 // pred_region
          %p571 = scmp.lt.s32.totalorder %s28, 1
          %s572 = scalar_select %p571, %s28, 1
          %s573 = scalar_lea.vmem %s13, %s572
        $region72: #{_lambda_.2} parent=31 // pred_fallthru
          _
        // Predicated region
        $region73: #{_lambda_.2} parent=31 // pred_check
          %p574 = pneg %p392
        $region74: #{_lambda_.2} parent=31 // pred_check_branch
          %576 = sbr.rel (%p574) target = $region76
        $region75: #{_lambda_.2} parent=31 // pred_region
          %p577 = scmp.lt.s32.totalorder %s28, 1
          %s578 = scalar_select %p577, %s28, 1
          %s579 = scalar_lea.vmem %s14, %s578
        $region76: #{_lambda_.2} parent=31 // pred_fallthru
          _
        // Predicated region
        $region77: #{_lambda_.2} parent=31 // pred_check
          %p580 = pneg %p418
        $region78: #{_lambda_.2} parent=31 // pred_check_branch
          %582 = sbr.rel (%p580) target = $region80
        $region79: #{_lambda_.2} parent=31 // pred_region
          %p583 = scmp.lt.s32.totalorder %s28, 1
          %s584 = scalar_select %p583, %s28, 1
          %s585 = scalar_lea.vmem %s15, %s584
        $region80: #{_lambda_.2} parent=31 // pred_fallthru
          _
      $region32: #{_lambda_.2} parent=5 // pred_fallthru
        _
      %p586 = scmp.le.s32.totalorder 1, %s28
      %p587 = scmp.lt.s32.totalorder %s28, 3
      %p588 = pnand %p586, %p587
      %p589 = pneg %p588
      // Predicated region
      $region81: #{_lambda_.2} parent=5 // pred_check
        _
      $region82: #{_lambda_.2} parent=5 // pred_check_branch
        %591 = sbr.rel (%p588) target = $region84
      $region83: #{_lambda_.2} parent=5 // pred_region
        %s592 = ssub.s32 %s28, 1
        %s593 = sand.u32 %s281, 1
        %s594 = scalar_lea.sflag [#allocation5], %s593
        %s595 = sand.u32 %s281, 1
        %s596 = smul.addr %s595, 256
        %s597 = scalar_lea.vmem [#allocation4], %s596
        // Predicated region
        $region85: #{_lambda_.2} parent=83 // pred_check
          %p598 = pneg %p294
        $region86: #{_lambda_.2} parent=83 // pred_check_branch
          %600 = sbr.rel (%p598) target = $region88
        $region87: #{_lambda_.2} parent=83 // pred_region
          %602 = dma.done %s594, 4096
        $region88: #{_lambda_.2} parent=83 // pred_fallthru
          _
        %s603 = sand.u32 %s333, 1
        %s604 = scalar_lea.sflag [#allocation7], %s603
        %s605 = sand.u32 %s333, 1
        %s606 = smul.addr %s605, 256
        %s607 = scalar_lea.vmem [#allocation6], %s606
        // Predicated region
        $region89: #{_lambda_.2} parent=83 // pred_check
          %p608 = pneg %p346
        $region90: #{_lambda_.2} parent=83 // pred_check_branch
          %610 = sbr.rel (%p608) target = $region92
        $region91: #{_lambda_.2} parent=83 // pred_region
          %612 = dma.done %s604, 4096
        $region92: #{_lambda_.2} parent=83 // pred_fallthru
          _
        %p613 = pneg %p49
        %p614 = pneg %p46
        %p615 = pneg %p70
        %p616 = pneg %p67
        %p617 = pneg %p91
        %p618 = pneg %p88
        %p619 = pneg %p112
        %p620 = pneg %p109
        %p621 = scmp.lt.s32.totalorder %s33, 1
        %s622 = scalar_select %p621, %s33, 1
        %s623 = smul.addr %s622, 48
        %s624 = smul.addr %s623, 4
        %s625 = scalar_lea.vmem %s4, %s624
        %p626 = pneg %p138
        %p627 = pneg %p135
        %p628 = scmp.lt.s32.totalorder %s33, 1
        %s629 = scalar_select %p628, %s33, 1
        %s630 = smul.addr %s629, 3
        %s631 = scalar_lea.vmem %s5, %s630
        %p632 = pneg %p164
        %p633 = pneg %p161
        %p634 = scmp.lt.s32.totalorder %s33, 1
        %s635 = scalar_select %p634, %s33, 1
        %s636 = smul.addr %s635, 16
        %s637 = smul.addr %s636, 4
        %s638 = scalar_lea.vmem %s6, %s637
        %p639 = pneg %p190
        %p640 = pneg %p187
        %p641 = scmp.lt.s32.totalorder %s33, 1
        %s642 = scalar_select %p641, %s33, 1
        %s643 = scalar_lea.vmem %s7, %s642
        %p644 = pneg %p216
        %p645 = pneg %p213
        %p646 = scmp.lt.s32.totalorder %s33, 1
        %s647 = scalar_select %p646, %s33, 1
        %s648 = scalar_lea.vmem %s8, %s647
        %p649 = pneg %p242
        %p650 = pneg %p239
        %p651 = scmp.lt.s32.totalorder %s33, 1
        %s652 = scalar_select %p651, %s33, 1
        %s653 = scalar_lea.vmem %s9, %s652
        %p654 = pneg %p268
        %p655 = pneg %p265
        %s656 = sand.u32 %s281, 1
        %s657 = scalar_lea.sflag [#allocation5], %s656
        %s658 = sand.u32 %s281, 1
        %s659 = smul.addr %s658, 256
        %s660 = scalar_lea.vmem [#allocation4], %s659
        %p661 = pneg %p294
        %p662 = pneg %p291
        %p663 = scmp.lt.s32.totalorder %s33, 1
        %s664 = scalar_select %p663, %s33, 1
        %s665 = smul.addr %s664, 4
        %s666 = scalar_lea.vmem %s11, %s665
        %p667 = pneg %p320
        %p668 = pneg %p317
        %s669 = sand.u32 %s333, 1
        %s670 = scalar_lea.sflag [#allocation7], %s669
        %s671 = sand.u32 %s333, 1
        %s672 = smul.addr %s671, 256
        %s673 = scalar_lea.vmem [#allocation6], %s672
        %p674 = pneg %p346
        %p675 = pneg %p343
        %p676 = scmp.lt.s32.totalorder %s33, 1
        %s677 = scalar_select %p676, %s33, 1
        %s678 = scalar_lea.vmem %s13, %s677
        %p679 = pneg %p372
        %p680 = pneg %p369
        %p681 = scmp.lt.s32.totalorder %s33, 1
        %s682 = scalar_select %p681, %s33, 1
        %s683 = scalar_lea.vmem %s14, %s682
        %p684 = pneg %p398
        %p685 = pneg %p395
        %p686 = scmp.lt.s32.totalorder %s33, 1
        %s687 = scalar_select %p686, %s33, 1
        %s688 = scalar_lea.vmem %s15, %s687
        %p689 = pneg %p424
        %p690 = pneg %p421
        %p691 = pneg %p445
        %p692 = pneg %p442
        %p693 = scmp.lt.s32.totalorder %s33, 1
        %s694 = scalar_select %p693, %s33, 1
        %s695 = smul.addr %s694, 48
        %s696 = smul.addr %s695, 4
        %s697 = scalar_lea.vmem %s4, %s696
        %p698 = scmp.lt.s32.totalorder %s33, 1
        %s699 = scalar_select %p698, %s33, 1
        %s700 = smul.addr %s699, 3
        %s701 = scalar_lea.vmem %s5, %s700
        %p702 = scmp.lt.s32.totalorder %s33, 1
        %s703 = scalar_select %p702, %s33, 1
        %s704 = smul.addr %s703, 16
        %s705 = smul.addr %s704, 4
        %s706 = scalar_lea.vmem %s6, %s705
        %p707 = scmp.lt.s32.totalorder %s33, 1
        %s708 = scalar_select %p707, %s33, 1
        %s709 = scalar_lea.vmem %s7, %s708
        %p710 = scmp.lt.s32.totalorder %s33, 1
        %s711 = scalar_select %p710, %s33, 1
        %s712 = scalar_lea.vmem %s8, %s711
        %p713 = scmp.lt.s32.totalorder %s33, 1
        %s714 = scalar_select %p713, %s33, 1
        %s715 = scalar_lea.vmem %s9, %s714
        %p716 = scmp.lt.s32.totalorder %s33, 1
        %s717 = scalar_select %p716, %s33, 1
        %s718 = smul.addr %s717, 4
        %s719 = scalar_lea.vmem %s11, %s718
        %p720 = scmp.lt.s32.totalorder %s33, 1
        %s721 = scalar_select %p720, %s33, 1
        %s722 = scalar_lea.vmem %s13, %s721
        %p723 = scmp.lt.s32.totalorder %s33, 1
        %s724 = scalar_select %p723, %s33, 1
        %s725 = scalar_lea.vmem %s14, %s724
        %p726 = scmp.lt.s32.totalorder %s33, 1
        %s727 = scalar_select %p726, %s33, 1
        %s728 = scalar_lea.vmem %s15, %s727
        %p730 = scmp.eq.s32.totalorder %s33, 0
        // Predicated region
        $region93: #{_lambda_.2} parent=83 // pred_check
          %p731 = pneg %p730
        $region94: #{_lambda_.2} parent=83 // pred_check_branch
          %733 = sbr.rel (%p731) target = $region96
        $region95: #{_lambda_.2} parent=83 // pred_region
          %v734 = vld [vmem:[%s0] sm:$0xff]
          %v735 = vld [vmem:[%s0 + $0x8] sm:$0xff]
          %v736 = vld [vmem:[%s0 + $0x10] sm:$0xff]
          %v737 = vld [vmem:[%s0 + $0x18] sm:$0xff]
          %v738 = vld [vmem:[%s2] sm:$0x1]
          %v739 = vld [vmem:[%s3] sm:$0x1]
          %740 = vadd.xlane.f32.xlu0 %v734
          %v741 = vpop.xlane.xlu0 %740
          %742 = vadd.xlane.f32.xlu0 %v735
          %v743 = vpop.xlane.xlu0 %742
          %744 = vadd.xlane.f32.xlu0 %v736
          %v745 = vpop.xlane.xlu0 %744
          %746 = vadd.xlane.f32.xlu0 %v737
          %v747 = vpop.xlane.xlu0 %746
          %v748 = vrcp.pop 128.0
          %v749 = vmul.f32 128.0, %v748
          %v750 = vsub.f32 1.0, %v749
          %v751 = vmul.f32 %v748, %v750
          %v752 = vadd.f32 %v748, %v751
          %vm753 = vweird.f32 %v748
          %v754 = vsel %vm753, %v748, %v752
          %v755 = vmul.f32 %v741, %v754
          %v756 = vmul.f32 %v743, %v754
          %v757 = vmul.f32 %v745, %v754
          %v758 = vmul.f32 %v747, %v754
          %v759 = vsub.f32 %v734, %v755
          %v760 = vsub.f32 %v735, %v756
          %v761 = vsub.f32 %v736, %v757
          %v762 = vsub.f32 %v737, %v758
          %v763 = vmul.f32 %v759, %v759
          %v764 = vmul.f32 %v760, %v760
          %v765 = vmul.f32 %v761, %v761
          %v766 = vmul.f32 %v762, %v762
          %767 = vadd.xlane.f32.xlu0 %v763
          %v768 = vpop.xlane.xlu0 %767
          %769 = vadd.xlane.f32.xlu0 %v764
          %v770 = vpop.xlane.xlu0 %769
          %771 = vadd.xlane.f32.xlu0 %v765
          %v772 = vpop.xlane.xlu0 %771
          %773 = vadd.xlane.f32.xlu0 %v766
          %v774 = vpop.xlane.xlu0 %773
          %v775 = vmul.f32 %v768, %v754
          %v776 = vmul.f32 %v770, %v754
          %v777 = vmul.f32 %v772, %v754
          %v778 = vmul.f32 %v774, %v754
          %v779 = vadd.f32 %v775, 1e-12
          %v780 = vadd.f32 %v776, 1e-12
          %v781 = vadd.f32 %v777, 1e-12
          %v782 = vadd.f32 %v778, 1e-12
          %v783 = vrsqrt.pop %v779
          %v784 = vmul.f32 %v783, %v779
          %v785 = vmul.f32 %v784, %v783
          %v786 = vmul.f32 0.5, %v785
          %v787 = vsub.f32 1.5, %v786
          %v788 = vmul.f32 %v783, %v787
          %vm789 = vweird.f32 %v779
          %vm790 = vweird.f32 %v783
          %vm791 = vmor %vm789, %vm790
          %v792 = vsel %vm791, %v783, %v788
          %v793 = vrsqrt.pop %v780
          %v794 = vmul.f32 %v793, %v780
          %v795 = vmul.f32 %v794, %v793
          %v796 = vmul.f32 0.5, %v795
          %v797 = vsub.f32 1.5, %v796
          %v798 = vmul.f32 %v793, %v797
          %vm799 = vweird.f32 %v780
          %vm800 = vweird.f32 %v793
          %vm801 = vmor %vm799, %vm800
          %v802 = vsel %vm801, %v793, %v798
          %v803 = vrsqrt.pop %v781
          %v804 = vmul.f32 %v803, %v781
          %v805 = vmul.f32 %v804, %v803
          %v806 = vmul.f32 0.5, %v805
          %v807 = vsub.f32 1.5, %v806
          %v808 = vmul.f32 %v803, %v807
          %vm809 = vweird.f32 %v781
          %vm810 = vweird.f32 %v803
          %vm811 = vmor %vm809, %vm810
          %v812 = vsel %vm811, %v803, %v808
          %v813 = vrsqrt.pop %v782
          %v814 = vmul.f32 %v813, %v782
          %v815 = vmul.f32 %v814, %v813
          %v816 = vmul.f32 0.5, %v815
          %v817 = vsub.f32 1.5, %v816
          %v818 = vmul.f32 %v813, %v817
          %vm819 = vweird.f32 %v782
          %vm820 = vweird.f32 %v813
          %vm821 = vmor %vm819, %vm820
          %v822 = vsel %vm821, %v813, %v818
          %v823 = vmul.f32 %v759, %v792
          %v824 = vmul.f32 %v760, %v802
          %v825 = vmul.f32 %v761, %v812
          %v826 = vmul.f32 %v762, %v822
          %v828 = vperm.slane %v738, 0
          %v830 = vmul.f32 %v823, %v828
          %v831 = vmul.f32 %v824, %v828
          %v832 = vmul.f32 %v825, %v828
          %v833 = vmul.f32 %v826, %v828
          %v835 = vperm.slane %v739, 0
          %v837 = vadd.f32 %v830, %v835
          %v838 = vadd.f32 %v831, %v835
          %v839 = vadd.f32 %v832, %v835
          %v840 = vadd.f32 %v833, %v835
          %841 = vst [vmem:[%s16] sm:$0xff] %v837
          %842 = vst [vmem:[%s16 + $0x8] sm:$0xff] %v838
          %843 = vst [vmem:[%s16 + $0x10] sm:$0xff] %v839
          %844 = vst [vmem:[%s16 + $0x18] sm:$0xff] %v840
        $region96: #{_lambda_.2} parent=83 // pred_fallthru
          _
        %v845 = vld [vmem:[%s16] sm:$0xff]
        %v846 = vld [vmem:[%s16 + $0x8] sm:$0xff]
        %v847 = vld [vmem:[%s16 + $0x10] sm:$0xff]
        %v848 = vld [vmem:[%s16 + $0x18] sm:$0xff]
        %v849 = vpack.c.bf16 %v846, %v845
        %v850 = vpack.c.bf16 %v848, %v847
        %v851 = vld [vmem:[%s697] sm:$0xff]
        %v852 = vld [vmem:[%s697 + $0x8] sm:$0xf]
        %v853 = vld [vmem:[%s697 + $0xc] sm:$0xff]
        %v854 = vld [vmem:[%s697 + $0x14] sm:$0xf]
        %v855 = vld [vmem:[%s697 + $0x18] sm:$0xff]
        %v856 = vld [vmem:[%s697 + $0x20] sm:$0xf]
        %v857 = vld [vmem:[%s697 + $0x24] sm:$0xff]
        %v858 = vld [vmem:[%s697 + $0x2c] sm:$0xf]
        %v859 = vld [vmem:[%s697 + $0x30] sm:$0xff]
        %v860 = vld [vmem:[%s697 + $0x38] sm:$0xf]
        %v861 = vld [vmem:[%s697 + $0x3c] sm:$0xff]
        %v862 = vld [vmem:[%s697 + $0x44] sm:$0xf]
        %v863 = vld [vmem:[%s697 + $0x48] sm:$0xff]
        %v864 = vld [vmem:[%s697 + $0x50] sm:$0xf]
        %v865 = vld [vmem:[%s697 + $0x54] sm:$0xff]
        %v866 = vld [vmem:[%s697 + $0x5c] sm:$0xf]
        %v867 = vld [vmem:[%s697 + $0x60] sm:$0xff]
        %v868 = vld [vmem:[%s697 + $0x68] sm:$0xf]
        %v869 = vld [vmem:[%s697 + $0x6c] sm:$0xff]
        %v870 = vld [vmem:[%s697 + $0x74] sm:$0xf]
        %v871 = vld [vmem:[%s697 + $0x78] sm:$0xff]
        %v872 = vld [vmem:[%s697 + $0x80] sm:$0xf]
        %v873 = vld [vmem:[%s697 + $0x84] sm:$0xff]
        %v874 = vld [vmem:[%s697 + $0x8c] sm:$0xf]
        %v875 = vld [vmem:[%s697 + $0x90] sm:$0xff]
        %v876 = vld [vmem:[%s697 + $0x98] sm:$0xf]
        %v877 = vld [vmem:[%s697 + $0x9c] sm:$0xff]
        %v878 = vld [vmem:[%s697 + $0xa4] sm:$0xf]
        %v879 = vld [vmem:[%s697 + $0xa8] sm:$0xff]
        %v880 = vld [vmem:[%s697 + $0xb0] sm:$0xf]
        %v881 = vld [vmem:[%s697 + $0xb4] sm:$0xff]
        %v882 = vld [vmem:[%s697 + $0xbc] sm:$0xf]
        %v883 = vld [vmem:[%s701] sm:$0x7]
        %v885 = vperm.slane %v883, 0
        %v886 = vperm.slane %v883, 1
        %v887 = vperm.slane %v883, 2
        %v923 = vunpack.c.l.b16 %v851
        %v924 = vunpack.c.h.b16 %v851
        %v925 = vunpack.c.l.b16 %v852
        %v926 = vunpack.c.l.b16 %v853
        %v927 = vunpack.c.h.b16 %v853
        %v928 = vunpack.c.l.b16 %v854
        %v929 = vunpack.c.l.b16 %v855
        %v930 = vunpack.c.h.b16 %v855
        %v931 = vunpack.c.l.b16 %v856
        %v932 = vunpack.c.l.b16 %v857
        %v933 = vunpack.c.h.b16 %v857
        %v934 = vunpack.c.l.b16 %v858
        %v935 = vunpack.c.l.b16 %v859
        %v936 = vunpack.c.h.b16 %v859
        %v937 = vunpack.c.l.b16 %v860
        %v938 = vunpack.c.l.b16 %v861
        %v939 = vunpack.c.h.b16 %v861
        %v940 = vunpack.c.l.b16 %v862
        %v941 = vunpack.c.l.b16 %v863
        %v942 = vunpack.c.h.b16 %v863
        %v943 = vunpack.c.l.b16 %v864
        %v944 = vunpack.c.l.b16 %v865
        %v945 = vunpack.c.h.b16 %v865
        %v946 = vunpack.c.l.b16 %v866
        %v947 = vunpack.c.l.b16 %v867
        %v948 = vunpack.c.h.b16 %v867
        %v949 = vunpack.c.l.b16 %v868
        %v950 = vunpack.c.l.b16 %v869
        %v951 = vunpack.c.h.b16 %v869
        %v952 = vunpack.c.l.b16 %v870
        %v953 = vunpack.c.l.b16 %v871
        %v954 = vunpack.c.h.b16 %v871
        %v955 = vunpack.c.l.b16 %v872
        %v956 = vunpack.c.l.b16 %v873
        %v957 = vunpack.c.h.b16 %v873
        %v958 = vunpack.c.l.b16 %v874
        %v959 = vunpack.c.l.b16 %v875
        %v960 = vunpack.c.h.b16 %v875
        %v961 = vunpack.c.l.b16 %v876
        %v962 = vunpack.c.l.b16 %v877
        %v963 = vunpack.c.h.b16 %v877
        %v964 = vunpack.c.l.b16 %v878
        %v965 = vunpack.c.l.b16 %v879
        %v966 = vunpack.c.h.b16 %v879
        %v967 = vunpack.c.l.b16 %v880
        %v968 = vunpack.c.l.b16 %v881
        %v969 = vunpack.c.h.b16 %v881
        %v970 = vunpack.c.l.b16 %v882
        %v971 = vpack.c.b16 %v926, %v923
        %v972 = vpack.c.b16 %v927, %v924
        %v973 = vpack.c.b16 %v928, %v925
        %v974 = vpack.c.b16 %v932, %v929
        %v975 = vpack.c.b16 %v933, %v930
        %v976 = vpack.c.b16 %v934, %v931
        %v977 = vpack.c.b16 %v938, %v935
        %v978 = vpack.c.b16 %v939, %v936
        %v979 = vpack.c.b16 %v940, %v937
        %v980 = vpack.c.b16 %v944, %v941
        %v981 = vpack.c.b16 %v945, %v942
        %v982 = vpack.c.b16 %v946, %v943
        %v983 = vpack.c.b16 %v950, %v947
        %v984 = vpack.c.b16 %v951, %v948
        %v985 = vpack.c.b16 %v952, %v949
        %v986 = vpack.c.b16 %v956, %v953
        %v987 = vpack.c.b16 %v957, %v954
        %v988 = vpack.c.b16 %v958, %v955
        %v989 = vpack.c.b16 %v962, %v959
        %v990 = vpack.c.b16 %v963, %v960
        %v991 = vpack.c.b16 %v964, %v961
        %v992 = vpack.c.b16 %v968, %v965
        %v993 = vpack.c.b16 %v969, %v966
        %v994 = vpack.c.b16 %v970, %v967
        %1019 = vmatpush.bf16.msra.mxu0 %v992
        %1020 = vmatpush.bf16.msra.mxu0 %v989
        %1021 = vmatpush.bf16.msra.mxu0 %v986
        %1022 = vmatpush.bf16.msra.mxu0 %v983
        %1023 = vmatpush.bf16.msra.mxu0 %v980
        %1024 = vmatpush.bf16.msra.mxu0 %v977
        %1025 = vmatpush.bf16.msra.mxu0 %v974
        %1026 = vmatpush.bf16.msra.mxu0 %v971
        %1027 = vmatmul.bf16.gmra.mxu0 %v849
        %v1028 = vpop.f32.mrf.mxu0
        %v1029 = vadd.f32 %v885, %v1028
        %v1030 = vpop.f32.mrf.mxu0
        %v1031 = vadd.f32 %v885, %v1030
        %1032 = vmatmul.bf16.gmra.mxu0 %v850
        %v1033 = vpop.f32.mrf.mxu0
        %v1034 = vadd.f32 %v885, %v1033
        %v1035 = vpop.f32.mrf.mxu0
        %v1036 = vadd.f32 %v885, %v1035
        %1037 = vdwg.mxu0
        %1038 = vmatpush.bf16.msra.mxu0 %v993
        %1039 = vmatpush.bf16.msra.mxu0 %v990
        %1040 = vmatpush.bf16.msra.mxu0 %v987
        %1041 = vmatpush.bf16.msra.mxu0 %v984
        %1042 = vmatpush.bf16.msra.mxu0 %v981
        %1043 = vmatpush.bf16.msra.mxu0 %v978
        %1044 = vmatpush.bf16.msra.mxu0 %v975
        %1045 = vmatpush.bf16.msra.mxu0 %v972
        %1046 = vmatmul.bf16.gmra.mxu0 %v849
        %v1047 = vpop.f32.mrf.mxu0
        %v1048 = vadd.f32 %v886, %v1047
        %v1049 = vpop.f32.mrf.mxu0
        %v1050 = vadd.f32 %v886, %v1049
        %1051 = vmatmul.bf16.gmra.mxu0 %v850
        %v1052 = vpop.f32.mrf.mxu0
        %v1053 = vadd.f32 %v886, %v1052
        %v1054 = vpop.f32.mrf.mxu0
        %v1055 = vadd.f32 %v886, %v1054
        %1056 = vdwg.mxu0
        %1057 = vmatpush.bf16.msra.mxu0 %v994
        %1058 = vmatpush.bf16.msra.mxu0 %v991
        %1059 = vmatpush.bf16.msra.mxu0 %v988
        %1060 = vmatpush.bf16.msra.mxu0 %v985
        %1061 = vmatpush.bf16.msra.mxu0 %v982
        %1062 = vmatpush.bf16.msra.mxu0 %v979
        %1063 = vmatpush.bf16.msra.mxu0 %v976
        %1064 = vmatpush.bf16.msra.mxu0 %v973
        %1065 = vmatmul.bf16.gmra.mxu0 %v849
        %v1066 = vpop.f32.mrf.mxu0
        %v1067 = vadd.f32 %v887, %v1066
        %v1068 = vpop.f32.mrf.mxu0
        %v1069 = vadd.f32 %v887, %v1068
        %1070 = vmatmul.bf16.gmra.mxu0 %v850
        %v1071 = vpop.f32.mrf.mxu0
        %v1072 = vadd.f32 %v887, %v1071
        %v1073 = vpop.f32.mrf.mxu0
        %v1074 = vadd.f32 %v887, %v1073
        %1075 = vdwg.mxu0
        %1076 = vst [vmem:[#allocation2] sm:$0xff] %v1029
        %1077 = vst [vmem:[#allocation2 + $0x8] sm:$0xff] %v1048
        %1078 = vst [vmem:[#allocation2 + $0x10] sm:$0xff] %v1067
        %1079 = vst [vmem:[#allocation2 + $0x18] sm:$0xff] %v1031
        %1080 = vst [vmem:[#allocation2 + $0x20] sm:$0xff] %v1050
        %1081 = vst [vmem:[#allocation2 + $0x28] sm:$0xff] %v1069
        %1082 = vst [vmem:[#allocation2 + $0x30] sm:$0xff] %v1034
        %1083 = vst [vmem:[#allocation2 + $0x38] sm:$0xff] %v1053
        %1084 = vst [vmem:[#allocation2 + $0x40] sm:$0xff] %v1072
        %1085 = vst [vmem:[#allocation2 + $0x48] sm:$0xff] %v1036
        %1086 = vst [vmem:[#allocation2 + $0x50] sm:$0xff] %v1055
        %1087 = vst [vmem:[#allocation2 + $0x58] sm:$0xff] %v1074
        %v1088 = vld [vmem:[%s1] sm:$0xff]
        %v1089 = vld [vmem:[%s1 + $0x8] sm:$0xff]
        %v1090 = vld [vmem:[%s1 + $0x10] sm:$0xff]
        %v1091 = vld [vmem:[%s1 + $0x18] sm:$0xff]
        %v1092 = vld [vmem:[#allocation2] sm:$0xff]
        %v1093 = vld [vmem:[#allocation2 + $0x18] sm:$0xff]
        %v1094 = vld [vmem:[#allocation2 + $0x30] sm:$0xff]
        %v1095 = vld [vmem:[#allocation2 + $0x48] sm:$0xff]
        %v1096 = vpack.c.bf16 %v1093, %v1092
        %v1097 = vpack.c.bf16 %v1095, %v1094
        %v1098 = vld [vmem:[#allocation2 + $0x8] sm:$0xff]
        %v1099 = vld [vmem:[#allocation2 + $0x20] sm:$0xff]
        %v1100 = vld [vmem:[#allocation2 + $0x38] sm:$0xff]
        %v1101 = vld [vmem:[#allocation2 + $0x50] sm:$0xff]
        %v1102 = vpack.c.bf16 %v1099, %v1098
        %v1103 = vpack.c.bf16 %v1101, %v1100
        %v1104 = vld [vmem:[#allocation2 + $0x10] sm:$0xff]
        %v1105 = vld [vmem:[#allocation2 + $0x28] sm:$0xff]
        %v1106 = vld [vmem:[#allocation2 + $0x40] sm:$0xff]
        %v1107 = vld [vmem:[#allocation2 + $0x58] sm:$0xff]
        %v1108 = vpack.c.bf16 %v1105, %v1104
        %v1109 = vpack.c.bf16 %v1107, %v1106
        %vm1110 = vcmask 261120
        %v1112 = vsel %vm1110, %v1096, 0
        %v1115 = vsel %vm1110, %v1097, 0
        %v1118 = vsel %vm1110, %v1102, 0
        %v1121 = vsel %vm1110, %v1103, 0
        %1123 = vmatpush.bf16.xpose.msra.mxu0 0
        %1124 = vmatpush.bf16.xpose.msra.mxu0 0
        %1125 = vmatpush.bf16.xpose.msra.mxu0 0
        %1126 = vmatpush.bf16.xpose.msra.mxu0 0
        %1127 = vmatpush.bf16.xpose.msra.mxu0 0
        %1128 = vmatpush.bf16.xpose.msra.mxu0 0
        %1129 = vmatpush.bf16.xpose.msra.mxu0 %v1121
        %1130 = vmatpush.bf16.xpose.msra.mxu0 %v1118
        %1131 = vmatmul.bf16.gmra.mxu0 %v1112
        %v1132 = vpop.f32.mrf.mxu0
        %v1133 = vadd.f32 0.0, %v1132
        %v1134 = vpop.f32.mrf.mxu0
        %v1135 = vadd.f32 0.0, %v1134
        %1136 = vmatmul.bf16.gmra.mxu0 %v1115
        %v1137 = vpop.f32.mrf.mxu0
        %v1138 = vadd.f32 0.0, %v1137
        %v1139 = vpop.f32.mrf.mxu0
        %v1140 = vadd.f32 0.0, %v1139
        %1141 = vdwg.mxu0
        %v1142 = vmul.f32 %v1133, 0.17677669
        %v1143 = vmul.f32 %v1135, 0.17677669
        %v1144 = vmul.f32 %v1138, 0.17677669
        %v1145 = vmul.f32 %v1140, 0.17677669
        %v1146 = vadd.f32 %v1142, %v1088
        %v1147 = vadd.f32 %v1143, %v1089
        %v1148 = vadd.f32 %v1144, %v1090
        %v1149 = vadd.f32 %v1145, %v1091
        %v1150 = vsel %vm1110, %v1146, -inf
        %1151 = vmax.xlane.f32.xlu0 %v1150
        %v1152 = vpop.xlane.xlu0 %1151
        %v1153 = vsel %vm1110, %v1147, -inf
        %1154 = vmax.xlane.f32.xlu0 %v1153
        %v1155 = vpop.xlane.xlu0 %1154
        %v1156 = vsel %vm1110, %v1148, -inf
        %1157 = vmax.xlane.f32.xlu0 %v1156
        %v1158 = vpop.xlane.xlu0 %1157
        %v1159 = vsel %vm1110, %v1149, -inf
        %1160 = vmax.xlane.f32.xlu0 %v1159
        %v1161 = vpop.xlane.xlu0 %1160
        %v1162 = vsub.f32 %v1146, %v1152
        %v1163 = vsub.f32 %v1147, %v1155
        %v1164 = vsub.f32 %v1148, %v1158
        %v1165 = vsub.f32 %v1149, %v1161
        %v1166 = vmul.f32 %v1162, 1.442695
        %v1167 = vpow.pop %v1166
        %v1168 = vmul.f32 %v1163, 1.442695
        %v1169 = vpow.pop %v1168
        %v1170 = vmul.f32 %v1164, 1.442695
        %v1171 = vpow.pop %v1170
        %v1172 = vmul.f32 %v1165, 1.442695
        %v1173 = vpow.pop %v1172
        %v1174 = vsel %vm1110, %v1167, 0.0
        %1175 = vadd.xlane.f32.xlu0 %v1174
        %v1176 = vpop.xlane.xlu0 %1175
        %v1177 = vsel %vm1110, %v1169, 0.0
        %1178 = vadd.xlane.f32.xlu0 %v1177
        %v1179 = vpop.xlane.xlu0 %1178
        %v1180 = vsel %vm1110, %v1171, 0.0
        %1181 = vadd.xlane.f32.xlu0 %v1180
        %v1182 = vpop.xlane.xlu0 %1181
        %v1183 = vsel %vm1110, %v1173, 0.0
        %1184 = vadd.xlane.f32.xlu0 %v1183
        %v1185 = vpop.xlane.xlu0 %1184
        %v1186 = vrcp.pop %v1176
        %v1187 = vrcp.pop %v1179
        %v1188 = vrcp.pop %v1182
        %v1189 = vrcp.pop %v1185
        %v1190 = vmul.f32 %v1167, %v1186
        %v1191 = vmul.f32 %v1169, %v1187
        %v1192 = vmul.f32 %v1171, %v1188
        %v1193 = vmul.f32 %v1173, %v1189
        %v1194 = vpack.c.bf16 %v1191, %v1190
        %v1195 = vpack.c.bf16 %v1193, %v1192
        %v1197 = vsel %vm1110, %v1194, 0
        %v1200 = vsel %vm1110, %v1195, 0
        %1202 = vmatpush.bf16.msra.mxu0 0
        %1203 = vmatpush.bf16.msra.mxu0 0
        %1204 = vmatpush.bf16.msra.mxu0 0
        %1205 = vmatpush.bf16.msra.mxu0 0
        %1206 = vmatpush.bf16.msra.mxu0 0
        %1207 = vmatpush.bf16.msra.mxu0 0
        %1208 = vmatpush.bf16.msra.mxu0 %v1109
        %1209 = vmatpush.bf16.msra.mxu0 %v1108
        %1210 = vmatmul.bf16.gmra.mxu0 %v1197
        %v1211 = vpop.f32.mrf.mxu0
        %v1212 = vadd.f32 0.0, %v1211
        %v1213 = vpop.f32.mrf.mxu0
        %v1214 = vadd.f32 0.0, %v1213
        %1215 = vmatmul.bf16.gmra.mxu0 %v1200
        %v1216 = vpop.f32.mrf.mxu0
        %v1217 = vadd.f32 0.0, %v1216
        %v1218 = vpop.f32.mrf.mxu0
        %v1219 = vadd.f32 0.0, %v1218
        %1220 = vdwg.mxu0
        %1221 = vst.msk [vmem:[#allocation3] sm:$0xff] %vm1110, %v1212
        %1222 = vst.msk [vmem:[#allocation3 + $0x8] sm:$0xff] %vm1110, %v1214
        %1223 = vst.msk [vmem:[#allocation3 + $0x10] sm:$0xff] %vm1110, %v1217
        %1224 = vst.msk [vmem:[#allocation3 + $0x18] sm:$0xff] %vm1110, %v1219
        %v1225 = vld [vmem:[#allocation2] sm:$0xff]
        %v1226 = vld [vmem:[#allocation2 + $0x18] sm:$0xff]
        %v1227 = vld [vmem:[#allocation2 + $0x30] sm:$0xff]
        %v1228 = vld [vmem:[#allocation2 + $0x48] sm:$0xff]
        %v1229 = vpack.c.bf16 %v1226, %v1225
        %v1230 = vpack.c.bf16 %v1228, %v1227
        %v1231 = vld [vmem:[#allocation2 + $0x8] sm:$0xff]
        %v1232 = vld [vmem:[#allocation2 + $0x20] sm:$0xff]
        %v1233 = vld [vmem:[#allocation2 + $0x38] sm:$0xff]
        %v1234 = vld [vmem:[#allocation2 + $0x50] sm:$0xff]
        %v1235 = vpack.c.bf16 %v1232, %v1231
        %v1236 = vpack.c.bf16 %v1234, %v1233
        %v1237 = vld [vmem:[#allocation2 + $0x10] sm:$0xff]
        %v1238 = vld [vmem:[#allocation2 + $0x28] sm:$0xff]
        %v1239 = vld [vmem:[#allocation2 + $0x40] sm:$0xff]
        %v1240 = vld [vmem:[#allocation2 + $0x58] sm:$0xff]
        %v1241 = vpack.c.bf16 %v1238, %v1237
        %v1242 = vpack.c.bf16 %v1240, %v1239
        %1245 = vrot.lane.b32.xlu0 %v1229, 96
        %v1246 = vpop.permute.xlu0 %1245
        %1247 = vrot.lane.b32.xlu0 %v1230, 96
        %v1248 = vpop.permute.xlu0 %1247
        %1251 = vrot.lane.b32.xlu0 %v1235, 96
        %v1252 = vpop.permute.xlu0 %1251
        %1253 = vrot.lane.b32.xlu0 %v1236, 96
        %v1254 = vpop.permute.xlu0 %1253
        %v1256 = vsel %vm1110, %v1246, 0
        %v1259 = vsel %vm1110, %v1248, 0
        %v1262 = vsel %vm1110, %v1252, 0
        %v1265 = vsel %vm1110, %v1254, 0
        %1267 = vmatpush.bf16.xpose.msra.mxu0 0
        %1268 = vmatpush.bf16.xpose.msra.mxu0 0
        %1269 = vmatpush.bf16.xpose.msra.mxu0 0
        %1270 = vmatpush.bf16.xpose.msra.mxu0 0
        %1271 = vmatpush.bf16.xpose.msra.mxu0 0
        %1272 = vmatpush.bf16.xpose.msra.mxu0 0
        %1273 = vmatpush.bf16.xpose.msra.mxu0 %v1265
        %1274 = vmatpush.bf16.xpose.msra.mxu0 %v1262
        %1275 = vmatmul.bf16.gmra.mxu0 %v1256
        %v1276 = vpop.f32.mrf.mxu0
        %v1277 = vadd.f32 0.0, %v1276
        %v1278 = vpop.f32.mrf.mxu0
        %v1279 = vadd.f32 0.0, %v1278
        %1280 = vmatmul.bf16.gmra.mxu0 %v1259
        %v1281 = vpop.f32.mrf.mxu0
        %v1282 = vadd.f32 0.0, %v1281
        %v1283 = vpop.f32.mrf.mxu0
        %v1284 = vadd.f32 0.0, %v1283
        %1285 = vdwg.mxu0
        %v1286 = vmul.f32 %v1277, 0.17677669
        %v1287 = vmul.f32 %v1279, 0.17677669
        %v1288 = vmul.f32 %v1282, 0.17677669
        %v1289 = vmul.f32 %v1284, 0.17677669
        %v1290 = vadd.f32 %v1286, %v1088
        %v1291 = vadd.f32 %v1287, %v1089
        %v1292 = vadd.f32 %v1288, %v1090
        %v1293 = vadd.f32 %v1289, %v1091
        %v1294 = vsel %vm1110, %v1290, -inf
        %1295 = vmax.xlane.f32.xlu0 %v1294
        %v1296 = vpop.xlane.xlu0 %1295
        %v1297 = vsel %vm1110, %v1291, -inf
        %1298 = vmax.xlane.f32.xlu0 %v1297
        %v1299 = vpop.xlane.xlu0 %1298
        %v1300 = vsel %vm1110, %v1292, -inf
        %1301 = vmax.xlane.f32.xlu0 %v1300
        %v1302 = vpop.xlane.xlu0 %1301
        %v1303 = vsel %vm1110, %v1293, -inf
        %1304 = vmax.xlane.f32.xlu0 %v1303
        %v1305 = vpop.xlane.xlu0 %1304
        %v1306 = vsub.f32 %v1290, %v1296
        %v1307 = vsub.f32 %v1291, %v1299
        %v1308 = vsub.f32 %v1292, %v1302
        %v1309 = vsub.f32 %v1293, %v1305
        %v1310 = vmul.f32 %v1306, 1.442695
        %v1311 = vpow.pop %v1310
        %v1312 = vmul.f32 %v1307, 1.442695
        %v1313 = vpow.pop %v1312
        %v1314 = vmul.f32 %v1308, 1.442695
        %v1315 = vpow.pop %v1314
        %v1316 = vmul.f32 %v1309, 1.442695
        %v1317 = vpow.pop %v1316
        %v1318 = vsel %vm1110, %v1311, 0.0
        %1319 = vadd.xlane.f32.xlu0 %v1318
        %v1320 = vpop.xlane.xlu0 %1319
        %v1321 = vsel %vm1110, %v1313, 0.0
        %1322 = vadd.xlane.f32.xlu0 %v1321
        %v1323 = vpop.xlane.xlu0 %1322
        %v1324 = vsel %vm1110, %v1315, 0.0
        %1325 = vadd.xlane.f32.xlu0 %v1324
        %v1326 = vpop.xlane.xlu0 %1325
        %v1327 = vsel %vm1110, %v1317, 0.0
        %1328 = vadd.xlane.f32.xlu0 %v1327
        %v1329 = vpop.xlane.xlu0 %1328
        %v1330 = vrcp.pop %v1320
        %v1331 = vrcp.pop %v1323
        %v1332 = vrcp.pop %v1326
        %v1333 = vrcp.pop %v1329
        %v1334 = vmul.f32 %v1311, %v1330
        %v1335 = vmul.f32 %v1313, %v1331
        %v1336 = vmul.f32 %v1315, %v1332
        %v1337 = vmul.f32 %v1317, %v1333
        %v1338 = vpack.c.bf16 %v1335, %v1334
        %v1339 = vpack.c.bf16 %v1337, %v1336
        %1342 = vrot.lane.b32.xlu0 %v1241, 96
        %v1343 = vpop.permute.xlu0 %1342
        %1344 = vrot.lane.b32.xlu0 %v1242, 96
        %v1345 = vpop.permute.xlu0 %1344
        %v1349 = vsel %vm1110, %v1338, 0
        %v1352 = vsel %vm1110, %v1339, 0
        %1354 = vmatpush.bf16.msra.mxu0 0
        %1355 = vmatpush.bf16.msra.mxu0 0
        %1356 = vmatpush.bf16.msra.mxu0 0
        %1357 = vmatpush.bf16.msra.mxu0 0
        %1358 = vmatpush.bf16.msra.mxu0 0
        %1359 = vmatpush.bf16.msra.mxu0 0
        %1360 = vmatpush.bf16.msra.mxu0 %v1345
        %1361 = vmatpush.bf16.msra.mxu0 %v1343
        %1362 = vmatmul.bf16.gmra.mxu0 %v1349
        %v1363 = vpop.f32.mrf.mxu0
        %v1364 = vadd.f32 0.0, %v1363
        %v1365 = vpop.f32.mrf.mxu0
        %v1366 = vadd.f32 0.0, %v1365
        %1367 = vmatmul.bf16.gmra.mxu0 %v1352
        %v1368 = vpop.f32.mrf.mxu0
        %v1369 = vadd.f32 0.0, %v1368
        %v1370 = vpop.f32.mrf.mxu0
        %v1371 = vadd.f32 0.0, %v1370
        %1372 = vdwg.mxu0
        %1377 = vrot.lane.b32.xlu0 %v1364, 32
        %v1378 = vpop.permute.xlu0 %1377
        %1379 = vrot.lane.b32.xlu0 %v1366, 32
        %v1380 = vpop.permute.xlu0 %1379
        %1381 = vrot.lane.b32.xlu0 %v1369, 32
        %v1382 = vpop.permute.xlu0 %1381
        %1383 = vrot.lane.b32.xlu0 %v1371, 32
        %v1384 = vpop.permute.xlu0 %1383
        %vm1389 = vcmask 523520
        %1390 = vst.msk [vmem:[#allocation3] sm:$0xff] %vm1389, %v1378
        %1391 = vst.msk [vmem:[#allocation3 + $0x8] sm:$0xff] %vm1389, %v1380
        %1392 = vst.msk [vmem:[#allocation3 + $0x10] sm:$0xff] %vm1389, %v1382
        %1393 = vst.msk [vmem:[#allocation3 + $0x18] sm:$0xff] %vm1389, %v1384
        %v1394 = vld [vmem:[#allocation2] sm:$0xff]
        %v1395 = vld [vmem:[#allocation2 + $0x18] sm:$0xff]
        %v1396 = vld [vmem:[#allocation2 + $0x30] sm:$0xff]
        %v1397 = vld [vmem:[#allocation2 + $0x48] sm:$0xff]
        %v1398 = vpack.c.bf16 %v1395, %v1394
        %v1399 = vpack.c.bf16 %v1397, %v1396
        %v1400 = vld [vmem:[#allocation2 + $0x8] sm:$0xff]
        %v1401 = vld [vmem:[#allocation2 + $0x20] sm:$0xff]
        %v1402 = vld [vmem:[#allocation2 + $0x38] sm:$0xff]
        %v1403 = vld [vmem:[#allocation2 + $0x50] sm:$0xff]
        %v1404 = vpack.c.bf16 %v1401, %v1400
        %v1405 = vpack.c.bf16 %v1403, %v1402
        %v1406 = vld [vmem:[#allocation2 + $0x10] sm:$0xff]
        %v1407 = vld [vmem:[#allocation2 + $0x28] sm:$0xff]
        %v1408 = vld [vmem:[#allocation2 + $0x40] sm:$0xff]
        %v1409 = vld [vmem:[#allocation2 + $0x58] sm:$0xff]
        %v1410 = vpack.c.bf16 %v1407, %v1406
        %v1411 = vpack.c.bf16 %v1409, %v1408
        %1414 = vrot.lane.b32.xlu0 %v1398, 64
        %v1415 = vpop.permute.xlu0 %1414
        %1416 = vrot.lane.b32.xlu0 %v1399, 64
        %v1417 = vpop.permute.xlu0 %1416
        %1420 = vrot.lane.b32.xlu0 %v1404, 64
        %v1421 = vpop.permute.xlu0 %1420
        %1422 = vrot.lane.b32.xlu0 %v1405, 64
        %v1423 = vpop.permute.xlu0 %1422
        %v1425 = vsel %vm1110, %v1415, 0
        %v1428 = vsel %vm1110, %v1417, 0
        %v1431 = vsel %vm1110, %v1421, 0
        %v1434 = vsel %vm1110, %v1423, 0
        %1436 = vmatpush.bf16.xpose.msra.mxu0 0
        %1437 = vmatpush.bf16.xpose.msra.mxu0 0
        %1438 = vmatpush.bf16.xpose.msra.mxu0 0
        %1439 = vmatpush.bf16.xpose.msra.mxu0 0
        %1440 = vmatpush.bf16.xpose.msra.mxu0 0
        %1441 = vmatpush.bf16.xpose.msra.mxu0 0
        %1442 = vmatpush.bf16.xpose.msra.mxu0 %v1434
        %1443 = vmatpush.bf16.xpose.msra.mxu0 %v1431
        %1444 = vmatmul.bf16.gmra.mxu0 %v1425
        %v1445 = vpop.f32.mrf.mxu0
        %v1446 = vadd.f32 0.0, %v1445
        %v1447 = vpop.f32.mrf.mxu0
        %v1448 = vadd.f32 0.0, %v1447
        %1449 = vmatmul.bf16.gmra.mxu0 %v1428
        %v1450 = vpop.f32.mrf.mxu0
        %v1451 = vadd.f32 0.0, %v1450
        %v1452 = vpop.f32.mrf.mxu0
        %v1453 = vadd.f32 0.0, %v1452
        %1454 = vdwg.mxu0
        %v1455 = vmul.f32 %v1446, 0.17677669
        %v1456 = vmul.f32 %v1448, 0.17677669
        %v1457 = vmul.f32 %v1451, 0.17677669
        %v1458 = vmul.f32 %v1453, 0.17677669
        %v1459 = vadd.f32 %v1455, %v1088
        %v1460 = vadd.f32 %v1456, %v1089
        %v1461 = vadd.f32 %v1457, %v1090
        %v1462 = vadd.f32 %v1458, %v1091
        %v1463 = vsel %vm1110, %v1459, -inf
        %1464 = vmax.xlane.f32.xlu0 %v1463
        %v1465 = vpop.xlane.xlu0 %1464
        %v1466 = vsel %vm1110, %v1460, -inf
        %1467 = vmax.xlane.f32.xlu0 %v1466
        %v1468 = vpop.xlane.xlu0 %1467
        %v1469 = vsel %vm1110, %v1461, -inf
        %1470 = vmax.xlane.f32.xlu0 %v1469
        %v1471 = vpop.xlane.xlu0 %1470
        %v1472 = vsel %vm1110, %v1462, -inf
        %1473 = vmax.xlane.f32.xlu0 %v1472
        %v1474 = vpop.xlane.xlu0 %1473
        %v1475 = vsub.f32 %v1459, %v1465
        %v1476 = vsub.f32 %v1460, %v1468
        %v1477 = vsub.f32 %v1461, %v1471
        %v1478 = vsub.f32 %v1462, %v1474
        %v1479 = vmul.f32 %v1475, 1.442695
        %v1480 = vpow.pop %v1479
        %v1481 = vmul.f32 %v1476, 1.442695
        %v1482 = vpow.pop %v1481
        %v1483 = vmul.f32 %v1477, 1.442695
        %v1484 = vpow.pop %v1483
        %v1485 = vmul.f32 %v1478, 1.442695
        %v1486 = vpow.pop %v1485
        %v1487 = vsel %vm1110, %v1480, 0.0
        %1488 = vadd.xlane.f32.xlu0 %v1487
        %v1489 = vpop.xlane.xlu0 %1488
        %v1490 = vsel %vm1110, %v1482, 0.0
        %1491 = vadd.xlane.f32.xlu0 %v1490
        %v1492 = vpop.xlane.xlu0 %1491
        %v1493 = vsel %vm1110, %v1484, 0.0
        %1494 = vadd.xlane.f32.xlu0 %v1493
        %v1495 = vpop.xlane.xlu0 %1494
        %v1496 = vsel %vm1110, %v1486, 0.0
        %1497 = vadd.xlane.f32.xlu0 %v1496
        %v1498 = vpop.xlane.xlu0 %1497
        %v1499 = vrcp.pop %v1489
        %v1500 = vrcp.pop %v1492
        %v1501 = vrcp.pop %v1495
        %v1502 = vrcp.pop %v1498
        %v1503 = vmul.f32 %v1480, %v1499
        %v1504 = vmul.f32 %v1482, %v1500
        %v1505 = vmul.f32 %v1484, %v1501
        %v1506 = vmul.f32 %v1486, %v1502
        %v1507 = vpack.c.bf16 %v1504, %v1503
        %v1508 = vpack.c.bf16 %v1506, %v1505
        %1511 = vrot.lane.b32.xlu0 %v1410, 64
        %v1512 = vpop.permute.xlu0 %1511
        %1513 = vrot.lane.b32.xlu0 %v1411, 64
        %v1514 = vpop.permute.xlu0 %1513
        %v1518 = vsel %vm1110, %v1507, 0
        %v1521 = vsel %vm1110, %v1508, 0
        %1523 = vmatpush.bf16.msra.mxu0 0
        %1524 = vmatpush.bf16.msra.mxu0 0
        %1525 = vmatpush.bf16.msra.mxu0 0
        %1526 = vmatpush.bf16.msra.mxu0 0
        %1527 = vmatpush.bf16.msra.mxu0 0
        %1528 = vmatpush.bf16.msra.mxu0 0
        %1529 = vmatpush.bf16.msra.mxu0 %v1514
        %1530 = vmatpush.bf16.msra.mxu0 %v1512
        %1531 = vmatmul.bf16.gmra.mxu0 %v1518
        %v1532 = vpop.f32.mrf.mxu0
        %v1533 = vadd.f32 0.0, %v1532
        %v1534 = vpop.f32.mrf.mxu0
        %v1535 = vadd.f32 0.0, %v1534
        %1536 = vmatmul.bf16.gmra.mxu0 %v1521
        %v1537 = vpop.f32.mrf.mxu0
        %v1538 = vadd.f32 0.0, %v1537
        %v1539 = vpop.f32.mrf.mxu0
        %v1540 = vadd.f32 0.0, %v1539
        %1541 = vdwg.mxu0
        %1546 = vrot.lane.b32.xlu0 %v1533, 64
        %v1547 = vpop.permute.xlu0 %1546
        %1548 = vrot.lane.b32.xlu0 %v1535, 64
        %v1549 = vpop.permute.xlu0 %1548
        %1550 = vrot.lane.b32.xlu0 %v1538, 64
        %v1551 = vpop.permute.xlu0 %1550
        %1552 = vrot.lane.b32.xlu0 %v1540, 64
        %v1553 = vpop.permute.xlu0 %1552
        %vm1558 = vcmask 785920
        %1559 = vst.msk [vmem:[#allocation3] sm:$0xff] %vm1558, %v1547
        %1560 = vst.msk [vmem:[#allocation3 + $0x8] sm:$0xff] %vm1558, %v1549
        %1561 = vst.msk [vmem:[#allocation3 + $0x10] sm:$0xff] %vm1558, %v1551
        %1562 = vst.msk [vmem:[#allocation3 + $0x18] sm:$0xff] %vm1558, %v1553
        %v1563 = vld [vmem:[#allocation2] sm:$0xff]
        %v1564 = vld [vmem:[#allocation2 + $0x18] sm:$0xff]
        %v1565 = vld [vmem:[#allocation2 + $0x30] sm:$0xff]
        %v1566 = vld [vmem:[#allocation2 + $0x48] sm:$0xff]
        %v1567 = vpack.c.bf16 %v1564, %v1563
        %v1568 = vpack.c.bf16 %v1566, %v1565
        %v1569 = vld [vmem:[#allocation2 + $0x8] sm:$0xff]
        %v1570 = vld [vmem:[#allocation2 + $0x20] sm:$0xff]
        %v1571 = vld [vmem:[#allocation2 + $0x38] sm:$0xff]
        %v1572 = vld [vmem:[#allocation2 + $0x50] sm:$0xff]
        %v1573 = vpack.c.bf16 %v1570, %v1569
        %v1574 = vpack.c.bf16 %v1572, %v1571
        %v1575 = vld [vmem:[#allocation2 + $0x10] sm:$0xff]
        %v1576 = vld [vmem:[#allocation2 + $0x28] sm:$0xff]
        %v1577 = vld [vmem:[#allocation2 + $0x40] sm:$0xff]
        %v1578 = vld [vmem:[#allocation2 + $0x58] sm:$0xff]
        %v1579 = vpack.c.bf16 %v1576, %v1575
        %v1580 = vpack.c.bf16 %v1578, %v1577
        %1583 = vrot.lane.b32.xlu0 %v1567, 32
        %v1584 = vpop.permute.xlu0 %1583
        %1585 = vrot.lane.b32.xlu0 %v1568, 32
        %v1586 = vpop.permute.xlu0 %1585
        %1589 = vrot.lane.b32.xlu0 %v1573, 32
        %v1590 = vpop.permute.xlu0 %1589
        %1591 = vrot.lane.b32.xlu0 %v1574, 32
        %v1592 = vpop.permute.xlu0 %1591
        %v1594 = vsel %vm1110, %v1584, 0
        %v1597 = vsel %vm1110, %v1586, 0
        %v1600 = vsel %vm1110, %v1590, 0
        %v1603 = vsel %vm1110, %v1592, 0
        %1605 = vmatpush.bf16.xpose.msra.mxu0 0
        %1606 = vmatpush.bf16.xpose.msra.mxu0 0
        %1607 = vmatpush.bf16.xpose.msra.mxu0 0
        %1608 = vmatpush.bf16.xpose.msra.mxu0 0
        %1609 = vmatpush.bf16.xpose.msra.mxu0 0
        %1610 = vmatpush.bf16.xpose.msra.mxu0 0
        %1611 = vmatpush.bf16.xpose.msra.mxu0 %v1603
        %1612 = vmatpush.bf16.xpose.msra.mxu0 %v1600
        %1613 = vmatmul.bf16.gmra.mxu0 %v1594
        %v1614 = vpop.f32.mrf.mxu0
        %v1615 = vadd.f32 0.0, %v1614
        %v1616 = vpop.f32.mrf.mxu0
        %v1617 = vadd.f32 0.0, %v1616
        %1618 = vmatmul.bf16.gmra.mxu0 %v1597
        %v1619 = vpop.f32.mrf.mxu0
        %v1620 = vadd.f32 0.0, %v1619
        %v1621 = vpop.f32.mrf.mxu0
        %v1622 = vadd.f32 0.0, %v1621
        %1623 = vdwg.mxu0
        %v1624 = vmul.f32 %v1615, 0.17677669
        %v1625 = vmul.f32 %v1617, 0.17677669
        %v1626 = vmul.f32 %v1620, 0.17677669
        %v1627 = vmul.f32 %v1622, 0.17677669
        %v1628 = vadd.f32 %v1624, %v1088
        %v1629 = vadd.f32 %v1625, %v1089
        %v1630 = vadd.f32 %v1626, %v1090
        %v1631 = vadd.f32 %v1627, %v1091
        %v1632 = vsel %vm1110, %v1628, -inf
        %1633 = vmax.xlane.f32.xlu0 %v1632
        %v1634 = vpop.xlane.xlu0 %1633
        %v1635 = vsel %vm1110, %v1629, -inf
        %1636 = vmax.xlane.f32.xlu0 %v1635
        %v1637 = vpop.xlane.xlu0 %1636
        %v1638 = vsel %vm1110, %v1630, -inf
        %1639 = vmax.xlane.f32.xlu0 %v1638
        %v1640 = vpop.xlane.xlu0 %1639
        %v1641 = vsel %vm1110, %v1631, -inf
        %1642 = vmax.xlane.f32.xlu0 %v1641
        %v1643 = vpop.xlane.xlu0 %1642
        %v1644 = vsub.f32 %v1628, %v1634
        %v1645 = vsub.f32 %v1629, %v1637
        %v1646 = vsub.f32 %v1630, %v1640
        %v1647 = vsub.f32 %v1631, %v1643
        %v1648 = vmul.f32 %v1644, 1.442695
        %v1649 = vpow.pop %v1648
        %v1650 = vmul.f32 %v1645, 1.442695
        %v1651 = vpow.pop %v1650
        %v1652 = vmul.f32 %v1646, 1.442695
        %v1653 = vpow.pop %v1652
        %v1654 = vmul.f32 %v1647, 1.442695
        %v1655 = vpow.pop %v1654
        %v1656 = vsel %vm1110, %v1649, 0.0
        %1657 = vadd.xlane.f32.xlu0 %v1656
        %v1658 = vpop.xlane.xlu0 %1657
        %v1659 = vsel %vm1110, %v1651, 0.0
        %1660 = vadd.xlane.f32.xlu0 %v1659
        %v1661 = vpop.xlane.xlu0 %1660
        %v1662 = vsel %vm1110, %v1653, 0.0
        %1663 = vadd.xlane.f32.xlu0 %v1662
        %v1664 = vpop.xlane.xlu0 %1663
        %v1665 = vsel %vm1110, %v1655, 0.0
        %1666 = vadd.xlane.f32.xlu0 %v1665
        %v1667 = vpop.xlane.xlu0 %1666
        %v1668 = vrcp.pop %v1658
        %v1669 = vrcp.pop %v1661
        %v1670 = vrcp.pop %v1664
        %v1671 = vrcp.pop %v1667
        %v1672 = vmul.f32 %v1649, %v1668
        %v1673 = vmul.f32 %v1651, %v1669
        %v1674 = vmul.f32 %v1653, %v1670
        %v1675 = vmul.f32 %v1655, %v1671
        %v1676 = vpack.c.bf16 %v1673, %v1672
        %v1677 = vpack.c.bf16 %v1675, %v1674
        %1680 = vrot.lane.b32.xlu0 %v1579, 32
        %v1681 = vpop.permute.xlu0 %1680
        %1682 = vrot.lane.b32.xlu0 %v1580, 32
        %v1683 = vpop.permute.xlu0 %1682
        %v1687 = vsel %vm1110, %v1676, 0
        %v1690 = vsel %vm1110, %v1677, 0
        %1692 = vmatpush.bf16.msra.mxu0 0
        %1693 = vmatpush.bf16.msra.mxu0 0
        %1694 = vmatpush.bf16.msra.mxu0 0
        %1695 = vmatpush.bf16.msra.mxu0 0
        %1696 = vmatpush.bf16.msra.mxu0 0
        %1697 = vmatpush.bf16.msra.mxu0 0
        %1698 = vmatpush.bf16.msra.mxu0 %v1683
        %1699 = vmatpush.bf16.msra.mxu0 %v1681
        %1700 = vmatmul.bf16.gmra.mxu0 %v1687
        %v1701 = vpop.f32.mrf.mxu0
        %v1702 = vadd.f32 0.0, %v1701
        %v1703 = vpop.f32.mrf.mxu0
        %v1704 = vadd.f32 0.0, %v1703
        %1705 = vmatmul.bf16.gmra.mxu0 %v1690
        %v1706 = vpop.f32.mrf.mxu0
        %v1707 = vadd.f32 0.0, %v1706
        %v1708 = vpop.f32.mrf.mxu0
        %v1709 = vadd.f32 0.0, %v1708
        %1710 = vdwg.mxu0
        %1715 = vrot.lane.b32.xlu0 %v1702, 96
        %v1716 = vpop.permute.xlu0 %1715
        %1717 = vrot.lane.b32.xlu0 %v1704, 96
        %v1718 = vpop.permute.xlu0 %1717
        %1719 = vrot.lane.b32.xlu0 %v1707, 96
        %v1720 = vpop.permute.xlu0 %1719
        %1721 = vrot.lane.b32.xlu0 %v1709, 96
        %v1722 = vpop.permute.xlu0 %1721
        %vm1727 = vcmask 1048320
        %1728 = vst.msk [vmem:[#allocation3] sm:$0xff] %vm1727, %v1716
        %1729 = vst.msk [vmem:[#allocation3 + $0x8] sm:$0xff] %vm1727, %v1718
        %1730 = vst.msk [vmem:[#allocation3 + $0x10] sm:$0xff] %vm1727, %v1720
        %1731 = vst.msk [vmem:[#allocation3 + $0x18] sm:$0xff] %vm1727, %v1722
        %v1732 = vld [vmem:[#allocation3] sm:$0xff]
        %v1733 = vld [vmem:[#allocation3 + $0x8] sm:$0xff]
        %v1734 = vld [vmem:[#allocation3 + $0x10] sm:$0xff]
        %v1735 = vld [vmem:[#allocation3 + $0x18] sm:$0xff]
        %v1736 = vpack.c.bf16 %v1733, %v1732
        %v1737 = vpack.c.bf16 %v1735, %v1734
        %v1738 = vld [vmem:[%s706] sm:$0xf]
        %v1739 = vld [vmem:[%s706 + $0x4] sm:$0xf]
        %v1740 = vld [vmem:[%s706 + $0x8] sm:$0xf]
        %v1741 = vld [vmem:[%s706 + $0xc] sm:$0xf]
        %v1742 = vld [vmem:[%s706 + $0x10] sm:$0xf]
        %v1743 = vld [vmem:[%s706 + $0x14] sm:$0xf]
        %v1744 = vld [vmem:[%s706 + $0x18] sm:$0xf]
        %v1745 = vld [vmem:[%s706 + $0x1c] sm:$0xf]
        %v1746 = vld [vmem:[%s706 + $0x20] sm:$0xf]
        %v1747 = vld [vmem:[%s706 + $0x24] sm:$0xf]
        %v1748 = vld [vmem:[%s706 + $0x28] sm:$0xf]
        %v1749 = vld [vmem:[%s706 + $0x2c] sm:$0xf]
        %v1750 = vld [vmem:[%s706 + $0x30] sm:$0xf]
        %v1751 = vld [vmem:[%s706 + $0x34] sm:$0xf]
        %v1752 = vld [vmem:[%s706 + $0x38] sm:$0xf]
        %v1753 = vld [vmem:[%s706 + $0x3c] sm:$0xf]
        %v1754 = vld [vmem:[%s709] sm:$0x1]
        %v1756 = vperm.slane %v1754, 0
        %v1774 = vunpack.c.l.b16 %v1738
        %v1775 = vunpack.c.l.b16 %v1739
        %v1776 = vunpack.c.l.b16 %v1740
        %v1777 = vunpack.c.l.b16 %v1741
        %v1778 = vunpack.c.l.b16 %v1742
        %v1779 = vunpack.c.l.b16 %v1743
        %v1780 = vunpack.c.l.b16 %v1744
        %v1781 = vunpack.c.l.b16 %v1745
        %v1782 = vunpack.c.l.b16 %v1746
        %v1783 = vunpack.c.l.b16 %v1747
        %v1784 = vunpack.c.l.b16 %v1748
        %v1785 = vunpack.c.l.b16 %v1749
        %v1786 = vunpack.c.l.b16 %v1750
        %v1787 = vunpack.c.l.b16 %v1751
        %v1788 = vunpack.c.l.b16 %v1752
        %v1789 = vunpack.c.l.b16 %v1753
        %v1790 = vpack.c.b16 %v1775, %v1774
        %v1791 = vpack.c.b16 %v1777, %v1776
        %v1792 = vpack.c.b16 %v1779, %v1778
        %v1793 = vpack.c.b16 %v1781, %v1780
        %v1794 = vpack.c.b16 %v1783, %v1782
        %v1795 = vpack.c.b16 %v1785, %v1784
        %v1796 = vpack.c.b16 %v1787, %v1786
        %v1797 = vpack.c.b16 %v1789, %v1788
        %1806 = vmatpush.bf16.msra.mxu0 %v1797
        %1807 = vmatpush.bf16.msra.mxu0 %v1796
        %1808 = vmatpush.bf16.msra.mxu0 %v1795
        %1809 = vmatpush.bf16.msra.mxu0 %v1794
        %1810 = vmatpush.bf16.msra.mxu0 %v1793
        %1811 = vmatpush.bf16.msra.mxu0 %v1792
        %1812 = vmatpush.bf16.msra.mxu0 %v1791
        %1813 = vmatpush.bf16.msra.mxu0 %v1790
        %1814 = vmatmul.bf16.gmra.mxu0 %v1736
        %v1815 = vpop.f32.mrf.mxu0
        %v1816 = vadd.f32 %v1756, %v1815
        %v1817 = vpop.f32.mrf.mxu0
        %v1818 = vadd.f32 %v1756, %v1817
        %1819 = vmatmul.bf16.gmra.mxu0 %v1737
        %v1820 = vpop.f32.mrf.mxu0
        %v1821 = vadd.f32 %v1756, %v1820
        %v1822 = vpop.f32.mrf.mxu0
        %v1823 = vadd.f32 %v1756, %v1822
        %1824 = vdwg.mxu0
        %v1825 = vadd.f32 %v845, %v1816
        %v1826 = vadd.f32 %v846, %v1818
        %v1827 = vadd.f32 %v847, %v1821
        %v1828 = vadd.f32 %v848, %v1823
        %v1829 = vld [vmem:[%s712] sm:$0x1]
        %v1830 = vld [vmem:[%s715] sm:$0x1]
        %1831 = vadd.xlane.f32.xlu0 %v1825
        %v1832 = vpop.xlane.xlu0 %1831
        %1833 = vadd.xlane.f32.xlu0 %v1826
        %v1834 = vpop.xlane.xlu0 %1833
        %1835 = vadd.xlane.f32.xlu0 %v1827
        %v1836 = vpop.xlane.xlu0 %1835
        %1837 = vadd.xlane.f32.xlu0 %v1828
        %v1838 = vpop.xlane.xlu0 %1837
        %v1839 = vrcp.pop 128.0
        %v1840 = vmul.f32 128.0, %v1839
        %v1841 = vsub.f32 1.0, %v1840
        %v1842 = vmul.f32 %v1839, %v1841
        %v1843 = vadd.f32 %v1839, %v1842
        %vm1844 = vweird.f32 %v1839
        %v1845 = vsel %vm1844, %v1839, %v1843
        %v1846 = vmul.f32 %v1832, %v1845
        %v1847 = vmul.f32 %v1834, %v1845
        %v1848 = vmul.f32 %v1836, %v1845
        %v1849 = vmul.f32 %v1838, %v1845
        %v1850 = vsub.f32 %v1825, %v1846
        %v1851 = vsub.f32 %v1826, %v1847
        %v1852 = vsub.f32 %v1827, %v1848
        %v1853 = vsub.f32 %v1828, %v1849
        %v1854 = vmul.f32 %v1850, %v1850
        %v1855 = vmul.f32 %v1851, %v1851
        %v1856 = vmul.f32 %v1852, %v1852
        %v1857 = vmul.f32 %v1853, %v1853
        %1858 = vadd.xlane.f32.xlu0 %v1854
        %v1859 = vpop.xlane.xlu0 %1858
        %1860 = vadd.xlane.f32.xlu0 %v1855
        %v1861 = vpop.xlane.xlu0 %1860
        %1862 = vadd.xlane.f32.xlu0 %v1856
        %v1863 = vpop.xlane.xlu0 %1862
        %1864 = vadd.xlane.f32.xlu0 %v1857
        %v1865 = vpop.xlane.xlu0 %1864
        %v1866 = vmul.f32 %v1859, %v1845
        %v1867 = vmul.f32 %v1861, %v1845
        %v1868 = vmul.f32 %v1863, %v1845
        %v1869 = vmul.f32 %v1865, %v1845
        %v1870 = vadd.f32 %v1866, 1e-12
        %v1871 = vadd.f32 %v1867, 1e-12
        %v1872 = vadd.f32 %v1868, 1e-12
        %v1873 = vadd.f32 %v1869, 1e-12
        %v1874 = vrsqrt.pop %v1870
        %v1875 = vmul.f32 %v1874, %v1870
        %v1876 = vmul.f32 %v1875, %v1874
        %v1877 = vmul.f32 0.5, %v1876
        %v1878 = vsub.f32 1.5, %v1877
        %v1879 = vmul.f32 %v1874, %v1878
        %vm1880 = vweird.f32 %v1870
        %vm1881 = vweird.f32 %v1874
        %vm1882 = vmor %vm1880, %vm1881
        %v1883 = vsel %vm1882, %v1874, %v1879
        %v1884 = vrsqrt.pop %v1871
        %v1885 = vmul.f32 %v1884, %v1871
        %v1886 = vmul.f32 %v1885, %v1884
        %v1887 = vmul.f32 0.5, %v1886
        %v1888 = vsub.f32 1.5, %v1887
        %v1889 = vmul.f32 %v1884, %v1888
        %vm1890 = vweird.f32 %v1871
        %vm1891 = vweird.f32 %v1884
        %vm1892 = vmor %vm1890, %vm1891
        %v1893 = vsel %vm1892, %v1884, %v1889
        %v1894 = vrsqrt.pop %v1872
        %v1895 = vmul.f32 %v1894, %v1872
        %v1896 = vmul.f32 %v1895, %v1894
        %v1897 = vmul.f32 0.5, %v1896
        %v1898 = vsub.f32 1.5, %v1897
        %v1899 = vmul.f32 %v1894, %v1898
        %vm1900 = vweird.f32 %v1872
        %vm1901 = vweird.f32 %v1894
        %vm1902 = vmor %vm1900, %vm1901
        %v1903 = vsel %vm1902, %v1894, %v1899
        %v1904 = vrsqrt.pop %v1873
        %v1905 = vmul.f32 %v1904, %v1873
        %v1906 = vmul.f32 %v1905, %v1904
        %v1907 = vmul.f32 0.5, %v1906
        %v1908 = vsub.f32 1.5, %v1907
        %v1909 = vmul.f32 %v1904, %v1908
        %vm1910 = vweird.f32 %v1873
        %vm1911 = vweird.f32 %v1904
        %vm1912 = vmor %vm1910, %vm1911
        %v1913 = vsel %vm1912, %v1904, %v1909
        %v1914 = vmul.f32 %v1850, %v1883
        %v1915 = vmul.f32 %v1851, %v1893
        %v1916 = vmul.f32 %v1852, %v1903
        %v1917 = vmul.f32 %v1853, %v1913
        %v1919 = vperm.slane %v1829, 0
        %v1921 = vmul.f32 %v1914, %v1919
        %v1922 = vmul.f32 %v1915, %v1919
        %v1923 = vmul.f32 %v1916, %v1919
        %v1924 = vmul.f32 %v1917, %v1919
        %v1926 = vperm.slane %v1830, 0
        %v1928 = vadd.f32 %v1921, %v1926
        %v1929 = vadd.f32 %v1922, %v1926
        %v1930 = vadd.f32 %v1923, %v1926
        %v1931 = vadd.f32 %v1924, %v1926
        %v1932 = vpack.c.bf16 %v1929, %v1928
        %v1933 = vpack.c.bf16 %v1931, %v1930
        %v1934 = vld [vmem:[%s597] sm:$0xff]
        %v1935 = vld [vmem:[%s597 + $0x8] sm:$0xff]
        %v1936 = vld [vmem:[%s597 + $0x10] sm:$0xff]
        %v1937 = vld [vmem:[%s597 + $0x18] sm:$0xff]
        %v1938 = vld [vmem:[%s597 + $0x20] sm:$0xff]
        %v1939 = vld [vmem:[%s597 + $0x28] sm:$0xff]
        %v1940 = vld [vmem:[%s597 + $0x30] sm:$0xff]
        %v1941 = vld [vmem:[%s597 + $0x38] sm:$0xff]
        %v1942 = vld [vmem:[%s597 + $0x40] sm:$0xff]
        %v1943 = vld [vmem:[%s597 + $0x48] sm:$0xff]
        %v1944 = vld [vmem:[%s597 + $0x50] sm:$0xff]
        %v1945 = vld [vmem:[%s597 + $0x58] sm:$0xff]
        %v1946 = vld [vmem:[%s597 + $0x60] sm:$0xff]
        %v1947 = vld [vmem:[%s597 + $0x68] sm:$0xff]
        %v1948 = vld [vmem:[%s597 + $0x70] sm:$0xff]
        %v1949 = vld [vmem:[%s597 + $0x78] sm:$0xff]
        %v1950 = vld [vmem:[%s597 + $0x80] sm:$0xff]
        %v1951 = vld [vmem:[%s597 + $0x88] sm:$0xff]
        %v1952 = vld [vmem:[%s597 + $0x90] sm:$0xff]
        %v1953 = vld [vmem:[%s597 + $0x98] sm:$0xff]
        %v1954 = vld [vmem:[%s597 + $0xa0] sm:$0xff]
        %v1955 = vld [vmem:[%s597 + $0xa8] sm:$0xff]
        %v1956 = vld [vmem:[%s597 + $0xb0] sm:$0xff]
        %v1957 = vld [vmem:[%s597 + $0xb8] sm:$0xff]
        %v1958 = vld [vmem:[%s597 + $0xc0] sm:$0xff]
        %v1959 = vld [vmem:[%s597 + $0xc8] sm:$0xff]
        %v1960 = vld [vmem:[%s597 + $0xd0] sm:$0xff]
        %v1961 = vld [vmem:[%s597 + $0xd8] sm:$0xff]
        %v1962 = vld [vmem:[%s597 + $0xe0] sm:$0xff]
        %v1963 = vld [vmem:[%s597 + $0xe8] sm:$0xff]
        %v1964 = vld [vmem:[%s597 + $0xf0] sm:$0xff]
        %v1965 = vld [vmem:[%s597 + $0xf8] sm:$0xff]
        %v1966 = vld [vmem:[%s719] sm:$0xf]
        %v1968 = vperm.slane %v1966, 0
        %v1969 = vperm.slane %v1966, 1
        %v1970 = vperm.slane %v1966, 2
        %v1971 = vperm.slane %v1966, 3
        %v2008 = vunpack.c.l.b16 %v1934
        %v2009 = vunpack.c.h.b16 %v1934
        %v2010 = vunpack.c.l.b16 %v1935
        %v2011 = vunpack.c.h.b16 %v1935
        %v2012 = vunpack.c.l.b16 %v1936
        %v2013 = vunpack.c.h.b16 %v1936
        %v2014 = vunpack.c.l.b16 %v1937
        %v2015 = vunpack.c.h.b16 %v1937
        %v2016 = vunpack.c.l.b16 %v1938
        %v2017 = vunpack.c.h.b16 %v1938
        %v2018 = vunpack.c.l.b16 %v1939
        %v2019 = vunpack.c.h.b16 %v1939
        %v2020 = vunpack.c.l.b16 %v1940
        %v2021 = vunpack.c.h.b16 %v1940
        %v2022 = vunpack.c.l.b16 %v1941
        %v2023 = vunpack.c.h.b16 %v1941
        %v2024 = vunpack.c.l.b16 %v1942
        %v2025 = vunpack.c.h.b16 %v1942
        %v2026 = vunpack.c.l.b16 %v1943
        %v2027 = vunpack.c.h.b16 %v1943
        %v2028 = vunpack.c.l.b16 %v1944
        %v2029 = vunpack.c.h.b16 %v1944
        %v2030 = vunpack.c.l.b16 %v1945
        %v2031 = vunpack.c.h.b16 %v1945
        %v2032 = vunpack.c.l.b16 %v1946
        %v2033 = vunpack.c.h.b16 %v1946
        %v2034 = vunpack.c.l.b16 %v1947
        %v2035 = vunpack.c.h.b16 %v1947
        %v2036 = vunpack.c.l.b16 %v1948
        %v2037 = vunpack.c.h.b16 %v1948
        %v2038 = vunpack.c.l.b16 %v1949
        %v2039 = vunpack.c.h.b16 %v1949
        %v2040 = vunpack.c.l.b16 %v1950
        %v2041 = vunpack.c.h.b16 %v1950
        %v2042 = vunpack.c.l.b16 %v1951
        %v2043 = vunpack.c.h.b16 %v1951
        %v2044 = vunpack.c.l.b16 %v1952
        %v2045 = vunpack.c.h.b16 %v1952
        %v2046 = vunpack.c.l.b16 %v1953
        %v2047 = vunpack.c.h.b16 %v1953
        %v2048 = vunpack.c.l.b16 %v1954
        %v2049 = vunpack.c.h.b16 %v1954
        %v2050 = vunpack.c.l.b16 %v1955
        %v2051 = vunpack.c.h.b16 %v1955
        %v2052 = vunpack.c.l.b16 %v1956
        %v2053 = vunpack.c.h.b16 %v1956
        %v2054 = vunpack.c.l.b16 %v1957
        %v2055 = vunpack.c.h.b16 %v1957
        %v2056 = vunpack.c.l.b16 %v1958
        %v2057 = vunpack.c.h.b16 %v1958
        %v2058 = vunpack.c.l.b16 %v1959
        %v2059 = vunpack.c.h.b16 %v1959
        %v2060 = vunpack.c.l.b16 %v1960
        %v2061 = vunpack.c.h.b16 %v1960
        %v2062 = vunpack.c.l.b16 %v1961
        %v2063 = vunpack.c.h.b16 %v1961
        %v2064 = vunpack.c.l.b16 %v1962
        %v2065 = vunpack.c.h.b16 %v1962
        %v2066 = vunpack.c.l.b16 %v1963
        %v2067 = vunpack.c.h.b16 %v1963
        %v2068 = vunpack.c.l.b16 %v1964
        %v2069 = vunpack.c.h.b16 %v1964
        %v2070 = vunpack.c.l.b16 %v1965
        %v2071 = vunpack.c.h.b16 %v1965
        %v2072 = vpack.c.b16 %v2012, %v2008
        %v2073 = vpack.c.b16 %v2013, %v2009
        %v2074 = vpack.c.b16 %v2014, %v2010
        %v2075 = vpack.c.b16 %v2015, %v2011
        %v2076 = vpack.c.b16 %v2020, %v2016
        %v2077 = vpack.c.b16 %v2021, %v2017
        %v2078 = vpack.c.b16 %v2022, %v2018
        %v2079 = vpack.c.b16 %v2023, %v2019
        %v2080 = vpack.c.b16 %v2028, %v2024
        %v2081 = vpack.c.b16 %v2029, %v2025
        %v2082 = vpack.c.b16 %v2030, %v2026
        %v2083 = vpack.c.b16 %v2031, %v2027
        %v2084 = vpack.c.b16 %v2036, %v2032
        %v2085 = vpack.c.b16 %v2037, %v2033
        %v2086 = vpack.c.b16 %v2038, %v2034
        %v2087 = vpack.c.b16 %v2039, %v2035
        %v2088 = vpack.c.b16 %v2044, %v2040
        %v2089 = vpack.c.b16 %v2045, %v2041
        %v2090 = vpack.c.b16 %v2046, %v2042
        %v2091 = vpack.c.b16 %v2047, %v2043
        %v2092 = vpack.c.b16 %v2052, %v2048
        %v2093 = vpack.c.b16 %v2053, %v2049
        %v2094 = vpack.c.b16 %v2054, %v2050
        %v2095 = vpack.c.b16 %v2055, %v2051
        %v2096 = vpack.c.b16 %v2060, %v2056
        %v2097 = vpack.c.b16 %v2061, %v2057
        %v2098 = vpack.c.b16 %v2062, %v2058
        %v2099 = vpack.c.b16 %v2063, %v2059
        %v2100 = vpack.c.b16 %v2068, %v2064
        %v2101 = vpack.c.b16 %v2069, %v2065
        %v2102 = vpack.c.b16 %v2070, %v2066
        %v2103 = vpack.c.b16 %v2071, %v2067
        %2136 = vmatpush.bf16.msra.mxu0 %v2100
        %2137 = vmatpush.bf16.msra.mxu0 %v2096
        %2138 = vmatpush.bf16.msra.mxu0 %v2092
        %2139 = vmatpush.bf16.msra.mxu0 %v2088
        %2140 = vmatpush.bf16.msra.mxu0 %v2084
        %2141 = vmatpush.bf16.msra.mxu0 %v2080
        %2142 = vmatpush.bf16.msra.mxu0 %v2076
        %2143 = vmatpush.bf16.msra.mxu0 %v2072
        %2144 = vmatmul.bf16.gmra.mxu0 %v1932
        %v2145 = vpop.f32.mrf.mxu0
        %v2146 = vadd.f32 %v1968, %v2145
        %v2147 = vpop.f32.mrf.mxu0
        %v2148 = vadd.f32 %v1968, %v2147
        %2149 = vmatmul.bf16.gmra.mxu0 %v1933
        %v2150 = vpop.f32.mrf.mxu0
        %v2151 = vadd.f32 %v1968, %v2150
        %v2152 = vpop.f32.mrf.mxu0
        %v2153 = vadd.f32 %v1968, %v2152
        %2154 = vdwg.mxu0
        %2155 = vmatpush.bf16.msra.mxu0 %v2101
        %2156 = vmatpush.bf16.msra.mxu0 %v2097
        %2157 = vmatpush.bf16.msra.mxu0 %v2093
        %2158 = vmatpush.bf16.msra.mxu0 %v2089
        %2159 = vmatpush.bf16.msra.mxu0 %v2085
        %2160 = vmatpush.bf16.msra.mxu0 %v2081
        %2161 = vmatpush.bf16.msra.mxu0 %v2077
        %2162 = vmatpush.bf16.msra.mxu0 %v2073
        %2163 = vmatmul.bf16.gmra.mxu0 %v1932
        %v2164 = vpop.f32.mrf.mxu0
        %v2165 = vadd.f32 %v1969, %v2164
        %v2166 = vpop.f32.mrf.mxu0
        %v2167 = vadd.f32 %v1969, %v2166
        %2168 = vmatmul.bf16.gmra.mxu0 %v1933
        %v2169 = vpop.f32.mrf.mxu0
        %v2170 = vadd.f32 %v1969, %v2169
        %v2171 = vpop.f32.mrf.mxu0
        %v2172 = vadd.f32 %v1969, %v2171
        %2173 = vdwg.mxu0
        %2174 = vmatpush.bf16.msra.mxu0 %v2102
        %2175 = vmatpush.bf16.msra.mxu0 %v2098
        %2176 = vmatpush.bf16.msra.mxu0 %v2094
        %2177 = vmatpush.bf16.msra.mxu0 %v2090
        %2178 = vmatpush.bf16.msra.mxu0 %v2086
        %2179 = vmatpush.bf16.msra.mxu0 %v2082
        %2180 = vmatpush.bf16.msra.mxu0 %v2078
        %2181 = vmatpush.bf16.msra.mxu0 %v2074
        %2182 = vmatmul.bf16.gmra.mxu0 %v1932
        %v2183 = vpop.f32.mrf.mxu0
        %v2184 = vadd.f32 %v1970, %v2183
        %v2185 = vpop.f32.mrf.mxu0
        %v2186 = vadd.f32 %v1970, %v2185
        %2187 = vmatmul.bf16.gmra.mxu0 %v1933
        %v2188 = vpop.f32.mrf.mxu0
        %v2189 = vadd.f32 %v1970, %v2188
        %v2190 = vpop.f32.mrf.mxu0
        %v2191 = vadd.f32 %v1970, %v2190
        %2192 = vdwg.mxu0
        %2193 = vmatpush.bf16.msra.mxu0 %v2103
        %2194 = vmatpush.bf16.msra.mxu0 %v2099
        %2195 = vmatpush.bf16.msra.mxu0 %v2095
        %2196 = vmatpush.bf16.msra.mxu0 %v2091
        %2197 = vmatpush.bf16.msra.mxu0 %v2087
        %2198 = vmatpush.bf16.msra.mxu0 %v2083
        %2199 = vmatpush.bf16.msra.mxu0 %v2079
        %2200 = vmatpush.bf16.msra.mxu0 %v2075
        %2201 = vmatmul.bf16.gmra.mxu0 %v1932
        %v2202 = vpop.f32.mrf.mxu0
        %v2203 = vadd.f32 %v1971, %v2202
        %v2204 = vpop.f32.mrf.mxu0
        %v2205 = vadd.f32 %v1971, %v2204
        %2206 = vmatmul.bf16.gmra.mxu0 %v1933
        %v2207 = vpop.f32.mrf.mxu0
        %v2208 = vadd.f32 %v1971, %v2207
        %v2209 = vpop.f32.mrf.mxu0
        %v2210 = vadd.f32 %v1971, %v2209
        %2211 = vdwg.mxu0
        %v2212 = vmul.f32 %v2146, 0.5
        %v2213 = vmul.f32 %v2165, 0.5
        %v2214 = vmul.f32 %v2184, 0.5
        %v2215 = vmul.f32 %v2203, 0.5
        %v2216 = vmul.f32 %v2148, 0.5
        %v2217 = vmul.f32 %v2167, 0.5
        %v2218 = vmul.f32 %v2186, 0.5
        %v2219 = vmul.f32 %v2205, 0.5
        %v2220 = vmul.f32 %v2151, 0.5
        %v2221 = vmul.f32 %v2170, 0.5
        %v2222 = vmul.f32 %v2189, 0.5
        %v2223 = vmul.f32 %v2208, 0.5
        %v2224 = vmul.f32 %v2153, 0.5
        %v2225 = vmul.f32 %v2172, 0.5
        %v2226 = vmul.f32 %v2191, 0.5
        %v2227 = vmul.f32 %v2210, 0.5
        %v2228 = vmul.f32 %v2146, 0.70710677
        %v2229 = vmul.f32 %v2165, 0.70710677
        %v2230 = vmul.f32 %v2184, 0.70710677
        %v2231 = vmul.f32 %v2203, 0.70710677
        %v2232 = vmul.f32 %v2148, 0.70710677
        %v2233 = vmul.f32 %v2167, 0.70710677
        %v2234 = vmul.f32 %v2186, 0.70710677
        %v2235 = vmul.f32 %v2205, 0.70710677
        %v2236 = vmul.f32 %v2151, 0.70710677
        %v2237 = vmul.f32 %v2170, 0.70710677
        %v2238 = vmul.f32 %v2189, 0.70710677
        %v2239 = vmul.f32 %v2208, 0.70710677
        %v2240 = vmul.f32 %v2153, 0.70710677
        %v2241 = vmul.f32 %v2172, 0.70710677
        %v2242 = vmul.f32 %v2191, 0.70710677
        %v2243 = vmul.f32 %v2210, 0.70710677
        %vm2244 = vcmp.ge.f32.partialorder %v2228, 0.0
        %vm2245 = vcmp.ge.f32.partialorder %v2229, 0.0
        %vm2246 = vcmp.ge.f32.partialorder %v2230, 0.0
        %vm2247 = vcmp.ge.f32.partialorder %v2231, 0.0
        %vm2248 = vcmp.ge.f32.partialorder %v2232, 0.0
        %vm2249 = vcmp.ge.f32.partialorder %v2233, 0.0
        %vm2250 = vcmp.ge.f32.partialorder %v2234, 0.0
        %vm2251 = vcmp.ge.f32.partialorder %v2235, 0.0
        %vm2252 = vcmp.ge.f32.partialorder %v2236, 0.0
        %vm2253 = vcmp.ge.f32.partialorder %v2237, 0.0
        %vm2254 = vcmp.ge.f32.partialorder %v2238, 0.0
        %vm2255 = vcmp.ge.f32.partialorder %v2239, 0.0
        %vm2256 = vcmp.ge.f32.partialorder %v2240, 0.0
        %vm2257 = vcmp.ge.f32.partialorder %v2241, 0.0
        %vm2258 = vcmp.ge.f32.partialorder %v2242, 0.0
        %vm2259 = vcmp.ge.f32.partialorder %v2243, 0.0
        %v2260 = vsel %vm2244, 1.0, -1.0
        %v2261 = vsel %vm2245, 1.0, -1.0
        %v2262 = vsel %vm2246, 1.0, -1.0
        %v2263 = vsel %vm2247, 1.0, -1.0
        %v2264 = vsel %vm2248, 1.0, -1.0
        %v2265 = vsel %vm2249, 1.0, -1.0
        %v2266 = vsel %vm2250, 1.0, -1.0
        %v2267 = vsel %vm2251, 1.0, -1.0
        %v2268 = vsel %vm2252, 1.0, -1.0
        %v2269 = vsel %vm2253, 1.0, -1.0
        %v2270 = vsel %vm2254, 1.0, -1.0
        %v2271 = vsel %vm2255, 1.0, -1.0
        %v2272 = vsel %vm2256, 1.0, -1.0
        %v2273 = vsel %vm2257, 1.0, -1.0
        %v2274 = vsel %vm2258, 1.0, -1.0
        %v2275 = vsel %vm2259, 1.0, -1.0
        %v2276 = vand.u32 2147483647, %v2228
        %v2277 = vand.u32 2147483647, %v2229
        %v2278 = vand.u32 2147483647, %v2230
        %v2279 = vand.u32 2147483647, %v2231
        %v2280 = vand.u32 2147483647, %v2232
        %v2281 = vand.u32 2147483647, %v2233
        %v2282 = vand.u32 2147483647, %v2234
        %v2283 = vand.u32 2147483647, %v2235
        %v2284 = vand.u32 2147483647, %v2236
        %v2285 = vand.u32 2147483647, %v2237
        %v2286 = vand.u32 2147483647, %v2238
        %v2287 = vand.u32 2147483647, %v2239
        %v2288 = vand.u32 2147483647, %v2240
        %v2289 = vand.u32 2147483647, %v2241
        %v2290 = vand.u32 2147483647, %v2242
        %v2291 = vand.u32 2147483647, %v2243
        %v2292 = vmul.f32 %v2276, 0.3275911
        %v2293 = vmul.f32 %v2277, 0.3275911
        %v2294 = vmul.f32 %v2278, 0.3275911
        %v2295 = vmul.f32 %v2279, 0.3275911
        %v2296 = vmul.f32 %v2280, 0.3275911
        %v2297 = vmul.f32 %v2281, 0.3275911
        %v2298 = vmul.f32 %v2282, 0.3275911
        %v2299 = vmul.f32 %v2283, 0.3275911
        %v2300 = vmul.f32 %v2284, 0.3275911
        %v2301 = vmul.f32 %v2285, 0.3275911
        %v2302 = vmul.f32 %v2286, 0.3275911
        %v2303 = vmul.f32 %v2287, 0.3275911
        %v2304 = vmul.f32 %v2288, 0.3275911
        %v2305 = vmul.f32 %v2289, 0.3275911
        %v2306 = vmul.f32 %v2290, 0.3275911
        %v2307 = vmul.f32 %v2291, 0.3275911
        %v2308 = vadd.f32 %v2292, 1.0
        %v2309 = vadd.f32 %v2293, 1.0
        %v2310 = vadd.f32 %v2294, 1.0
        %v2311 = vadd.f32 %v2295, 1.0
        %v2312 = vadd.f32 %v2296, 1.0
        %v2313 = vadd.f32 %v2297, 1.0
        %v2314 = vadd.f32 %v2298, 1.0
        %v2315 = vadd.f32 %v2299, 1.0
        %v2316 = vadd.f32 %v2300, 1.0
        %v2317 = vadd.f32 %v2301, 1.0
        %v2318 = vadd.f32 %v2302, 1.0
        %v2319 = vadd.f32 %v2303, 1.0
        %v2320 = vadd.f32 %v2304, 1.0
        %v2321 = vadd.f32 %v2305, 1.0
        %v2322 = vadd.f32 %v2306, 1.0
        %v2323 = vadd.f32 %v2307, 1.0
        %v2324 = vrcp.pop %v2308
        %v2325 = vmul.f32 %v2308, %v2324
        %v2326 = vsub.f32 1.0, %v2325
        %v2327 = vmul.f32 %v2324, %v2326
        %v2328 = vadd.f32 %v2324, %v2327
        %vm2329 = vweird.f32 %v2308
        %vm2330 = vweird.f32 %v2324
        %vm2331 = vmor %vm2329, %vm2330
        %v2332 = vsel %vm2331, %v2324, %v2328
        %v2333 = vand.u32 2147483647, %v2308
        %vm2334 = vcmp.eq.f32.partialorder %v2333, 8.507059e+37
        %v2335 = vand.u32 %v2308, 2147483648
        %v2336 = vor.u32 1.1754944e-38, %v2335
        %v2337 = vsel %vm2334, %v2336, %v2332
        %v2338 = vmul.f32 1.0, %v2337
        %v2339 = vrcp.pop %v2309
        %v2340 = vmul.f32 %v2309, %v2339
        %v2341 = vsub.f32 1.0, %v2340
        %v2342 = vmul.f32 %v2339, %v2341
        %v2343 = vadd.f32 %v2339, %v2342
        %vm2344 = vweird.f32 %v2309
        %vm2345 = vweird.f32 %v2339
        %vm2346 = vmor %vm2344, %vm2345
        %v2347 = vsel %vm2346, %v2339, %v2343
        %v2348 = vand.u32 2147483647, %v2309
        %vm2349 = vcmp.eq.f32.partialorder %v2348, 8.507059e+37
        %v2350 = vand.u32 %v2309, 2147483648
        %v2351 = vor.u32 1.1754944e-38, %v2350
        %v2352 = vsel %vm2349, %v2351, %v2347
        %v2353 = vmul.f32 1.0, %v2352
        %v2354 = vrcp.pop %v2310
        %v2355 = vmul.f32 %v2310, %v2354
        %v2356 = vsub.f32 1.0, %v2355
        %v2357 = vmul.f32 %v2354, %v2356
        %v2358 = vadd.f32 %v2354, %v2357
        %vm2359 = vweird.f32 %v2310
        %vm2360 = vweird.f32 %v2354
        %vm2361 = vmor %vm2359, %vm2360
        %v2362 = vsel %vm2361, %v2354, %v2358
        %v2363 = vand.u32 2147483647, %v2310
        %vm2364 = vcmp.eq.f32.partialorder %v2363, 8.507059e+37
        %v2365 = vand.u32 %v2310, 2147483648
        %v2366 = vor.u32 1.1754944e-38, %v2365
        %v2367 = vsel %vm2364, %v2366, %v2362
        %v2368 = vmul.f32 1.0, %v2367
        %v2369 = vrcp.pop %v2311
        %v2370 = vmul.f32 %v2311, %v2369
        %v2371 = vsub.f32 1.0, %v2370
        %v2372 = vmul.f32 %v2369, %v2371
        %v2373 = vadd.f32 %v2369, %v2372
        %vm2374 = vweird.f32 %v2311
        %vm2375 = vweird.f32 %v2369
        %vm2376 = vmor %vm2374, %vm2375
        %v2377 = vsel %vm2376, %v2369, %v2373
        %v2378 = vand.u32 2147483647, %v2311
        %vm2379 = vcmp.eq.f32.partialorder %v2378, 8.507059e+37
        %v2380 = vand.u32 %v2311, 2147483648
        %v2381 = vor.u32 1.1754944e-38, %v2380
        %v2382 = vsel %vm2379, %v2381, %v2377
        %v2383 = vmul.f32 1.0, %v2382
        %v2384 = vrcp.pop %v2312
        %v2385 = vmul.f32 %v2312, %v2384
        %v2386 = vsub.f32 1.0, %v2385
        %v2387 = vmul.f32 %v2384, %v2386
        %v2388 = vadd.f32 %v2384, %v2387
        %vm2389 = vweird.f32 %v2312
        %vm2390 = vweird.f32 %v2384
        %vm2391 = vmor %vm2389, %vm2390
        %v2392 = vsel %vm2391, %v2384, %v2388
        %v2393 = vand.u32 2147483647, %v2312
        %vm2394 = vcmp.eq.f32.partialorder %v2393, 8.507059e+37
        %v2395 = vand.u32 %v2312, 2147483648
        %v2396 = vor.u32 1.1754944e-38, %v2395
        %v2397 = vsel %vm2394, %v2396, %v2392
        %v2398 = vmul.f32 1.0, %v2397
        %v2399 = vrcp.pop %v2313
        %v2400 = vmul.f32 %v2313, %v2399
        %v2401 = vsub.f32 1.0, %v2400
        %v2402 = vmul.f32 %v2399, %v2401
        %v2403 = vadd.f32 %v2399, %v2402
        %vm2404 = vweird.f32 %v2313
        %vm2405 = vweird.f32 %v2399
        %vm2406 = vmor %vm2404, %vm2405
        %v2407 = vsel %vm2406, %v2399, %v2403
        %v2408 = vand.u32 2147483647, %v2313
        %vm2409 = vcmp.eq.f32.partialorder %v2408, 8.507059e+37
        %v2410 = vand.u32 %v2313, 2147483648
        %v2411 = vor.u32 1.1754944e-38, %v2410
        %v2412 = vsel %vm2409, %v2411, %v2407
        %v2413 = vmul.f32 1.0, %v2412
        %v2414 = vrcp.pop %v2314
        %v2415 = vmul.f32 %v2314, %v2414
        %v2416 = vsub.f32 1.0, %v2415
        %v2417 = vmul.f32 %v2414, %v2416
        %v2418 = vadd.f32 %v2414, %v2417
        %vm2419 = vweird.f32 %v2314
        %vm2420 = vweird.f32 %v2414
        %vm2421 = vmor %vm2419, %vm2420
        %v2422 = vsel %vm2421, %v2414, %v2418
        %v2423 = vand.u32 2147483647, %v2314
        %vm2424 = vcmp.eq.f32.partialorder %v2423, 8.507059e+37
        %v2425 = vand.u32 %v2314, 2147483648
        %v2426 = vor.u32 1.1754944e-38, %v2425
        %v2427 = vsel %vm2424, %v2426, %v2422
        %v2428 = vmul.f32 1.0, %v2427
        %v2429 = vrcp.pop %v2315
        %v2430 = vmul.f32 %v2315, %v2429
        %v2431 = vsub.f32 1.0, %v2430
        %v2432 = vmul.f32 %v2429, %v2431
        %v2433 = vadd.f32 %v2429, %v2432
        %vm2434 = vweird.f32 %v2315
        %vm2435 = vweird.f32 %v2429
        %vm2436 = vmor %vm2434, %vm2435
        %v2437 = vsel %vm2436, %v2429, %v2433
        %v2438 = vand.u32 2147483647, %v2315
        %vm2439 = vcmp.eq.f32.partialorder %v2438, 8.507059e+37
        %v2440 = vand.u32 %v2315, 2147483648
        %v2441 = vor.u32 1.1754944e-38, %v2440
        %v2442 = vsel %vm2439, %v2441, %v2437
        %v2443 = vmul.f32 1.0, %v2442
        %v2444 = vrcp.pop %v2316
        %v2445 = vmul.f32 %v2316, %v2444
        %v2446 = vsub.f32 1.0, %v2445
        %v2447 = vmul.f32 %v2444, %v2446
        %v2448 = vadd.f32 %v2444, %v2447
        %vm2449 = vweird.f32 %v2316
        %vm2450 = vweird.f32 %v2444
        %vm2451 = vmor %vm2449, %vm2450
        %v2452 = vsel %vm2451, %v2444, %v2448
        %v2453 = vand.u32 2147483647, %v2316
        %vm2454 = vcmp.eq.f32.partialorder %v2453, 8.507059e+37
        %v2455 = vand.u32 %v2316, 2147483648
        %v2456 = vor.u32 1.1754944e-38, %v2455
        %v2457 = vsel %vm2454, %v2456, %v2452
        %v2458 = vmul.f32 1.0, %v2457
        %v2459 = vrcp.pop %v2317
        %v2460 = vmul.f32 %v2317, %v2459
        %v2461 = vsub.f32 1.0, %v2460
        %v2462 = vmul.f32 %v2459, %v2461
        %v2463 = vadd.f32 %v2459, %v2462
        %vm2464 = vweird.f32 %v2317
        %vm2465 = vweird.f32 %v2459
        %vm2466 = vmor %vm2464, %vm2465
        %v2467 = vsel %vm2466, %v2459, %v2463
        %v2468 = vand.u32 2147483647, %v2317
        %vm2469 = vcmp.eq.f32.partialorder %v2468, 8.507059e+37
        %v2470 = vand.u32 %v2317, 2147483648
        %v2471 = vor.u32 1.1754944e-38, %v2470
        %v2472 = vsel %vm2469, %v2471, %v2467
        %v2473 = vmul.f32 1.0, %v2472
        %v2474 = vrcp.pop %v2318
        %v2475 = vmul.f32 %v2318, %v2474
        %v2476 = vsub.f32 1.0, %v2475
        %v2477 = vmul.f32 %v2474, %v2476
        %v2478 = vadd.f32 %v2474, %v2477
        %vm2479 = vweird.f32 %v2318
        %vm2480 = vweird.f32 %v2474
        %vm2481 = vmor %vm2479, %vm2480
        %v2482 = vsel %vm2481, %v2474, %v2478
        %v2483 = vand.u32 2147483647, %v2318
        %vm2484 = vcmp.eq.f32.partialorder %v2483, 8.507059e+37
        %v2485 = vand.u32 %v2318, 2147483648
        %v2486 = vor.u32 1.1754944e-38, %v2485
        %v2487 = vsel %vm2484, %v2486, %v2482
        %v2488 = vmul.f32 1.0, %v2487
        %v2489 = vrcp.pop %v2319
        %v2490 = vmul.f32 %v2319, %v2489
        %v2491 = vsub.f32 1.0, %v2490
        %v2492 = vmul.f32 %v2489, %v2491
        %v2493 = vadd.f32 %v2489, %v2492
        %vm2494 = vweird.f32 %v2319
        %vm2495 = vweird.f32 %v2489
        %vm2496 = vmor %vm2494, %vm2495
        %v2497 = vsel %vm2496, %v2489, %v2493
        %v2498 = vand.u32 2147483647, %v2319
        %vm2499 = vcmp.eq.f32.partialorder %v2498, 8.507059e+37
        %v2500 = vand.u32 %v2319, 2147483648
        %v2501 = vor.u32 1.1754944e-38, %v2500
        %v2502 = vsel %vm2499, %v2501, %v2497
        %v2503 = vmul.f32 1.0, %v2502
        %v2504 = vrcp.pop %v2320
        %v2505 = vmul.f32 %v2320, %v2504
        %v2506 = vsub.f32 1.0, %v2505
        %v2507 = vmul.f32 %v2504, %v2506
        %v2508 = vadd.f32 %v2504, %v2507
        %vm2509 = vweird.f32 %v2320
        %vm2510 = vweird.f32 %v2504
        %vm2511 = vmor %vm2509, %vm2510
        %v2512 = vsel %vm2511, %v2504, %v2508
        %v2513 = vand.u32 2147483647, %v2320
        %vm2514 = vcmp.eq.f32.partialorder %v2513, 8.507059e+37
        %v2515 = vand.u32 %v2320, 2147483648
        %v2516 = vor.u32 1.1754944e-38, %v2515
        %v2517 = vsel %vm2514, %v2516, %v2512
        %v2518 = vmul.f32 1.0, %v2517
        %v2519 = vrcp.pop %v2321
        %v2520 = vmul.f32 %v2321, %v2519
        %v2521 = vsub.f32 1.0, %v2520
        %v2522 = vmul.f32 %v2519, %v2521
        %v2523 = vadd.f32 %v2519, %v2522
        %vm2524 = vweird.f32 %v2321
        %vm2525 = vweird.f32 %v2519
        %vm2526 = vmor %vm2524, %vm2525
        %v2527 = vsel %vm2526, %v2519, %v2523
        %v2528 = vand.u32 2147483647, %v2321
        %vm2529 = vcmp.eq.f32.partialorder %v2528, 8.507059e+37
        %v2530 = vand.u32 %v2321, 2147483648
        %v2531 = vor.u32 1.1754944e-38, %v2530
        %v2532 = vsel %vm2529, %v2531, %v2527
        %v2533 = vmul.f32 1.0, %v2532
        %v2534 = vrcp.pop %v2322
        %v2535 = vmul.f32 %v2322, %v2534
        %v2536 = vsub.f32 1.0, %v2535
        %v2537 = vmul.f32 %v2534, %v2536
        %v2538 = vadd.f32 %v2534, %v2537
        %vm2539 = vweird.f32 %v2322
        %vm2540 = vweird.f32 %v2534
        %vm2541 = vmor %vm2539, %vm2540
        %v2542 = vsel %vm2541, %v2534, %v2538
        %v2543 = vand.u32 2147483647, %v2322
        %vm2544 = vcmp.eq.f32.partialorder %v2543, 8.507059e+37
        %v2545 = vand.u32 %v2322, 2147483648
        %v2546 = vor.u32 1.1754944e-38, %v2545
        %v2547 = vsel %vm2544, %v2546, %v2542
        %v2548 = vmul.f32 1.0, %v2547
        %v2549 = vrcp.pop %v2323
        %v2550 = vmul.f32 %v2323, %v2549
        %v2551 = vsub.f32 1.0, %v2550
        %v2552 = vmul.f32 %v2549, %v2551
        %v2553 = vadd.f32 %v2549, %v2552
        %vm2554 = vweird.f32 %v2323
        %vm2555 = vweird.f32 %v2549
        %vm2556 = vmor %vm2554, %vm2555
        %v2557 = vsel %vm2556, %v2549, %v2553
        %v2558 = vand.u32 2147483647, %v2323
        %vm2559 = vcmp.eq.f32.partialorder %v2558, 8.507059e+37
        %v2560 = vand.u32 %v2323, 2147483648
        %v2561 = vor.u32 1.1754944e-38, %v2560
        %v2562 = vsel %vm2559, %v2561, %v2557
        %v2563 = vmul.f32 1.0, %v2562
        %v2564 = vmul.f32 %v2338, 1.0614054
        %v2565 = vmul.f32 %v2353, 1.0614054
        %v2566 = vmul.f32 %v2368, 1.0614054
        %v2567 = vmul.f32 %v2383, 1.0614054
        %v2568 = vmul.f32 %v2398, 1.0614054
        %v2569 = vmul.f32 %v2413, 1.0614054
        %v2570 = vmul.f32 %v2428, 1.0614054
        %v2571 = vmul.f32 %v2443, 1.0614054
        %v2572 = vmul.f32 %v2458, 1.0614054
        %v2573 = vmul.f32 %v2473, 1.0614054
        %v2574 = vmul.f32 %v2488, 1.0614054
        %v2575 = vmul.f32 %v2503, 1.0614054
        %v2576 = vmul.f32 %v2518, 1.0614054
        %v2577 = vmul.f32 %v2533, 1.0614054
        %v2578 = vmul.f32 %v2548, 1.0614054
        %v2579 = vmul.f32 %v2563, 1.0614054
        %v2580 = vadd.f32 %v2564, -1.4531521
        %v2581 = vadd.f32 %v2565, -1.4531521
        %v2582 = vadd.f32 %v2566, -1.4531521
        %v2583 = vadd.f32 %v2567, -1.4531521
        %v2584 = vadd.f32 %v2568, -1.4531521
        %v2585 = vadd.f32 %v2569, -1.4531521
        %v2586 = vadd.f32 %v2570, -1.4531521
        %v2587 = vadd.f32 %v2571, -1.4531521
        %v2588 = vadd.f32 %v2572, -1.4531521
        %v2589 = vadd.f32 %v2573, -1.4531521
        %v2590 = vadd.f32 %v2574, -1.4531521
        %v2591 = vadd.f32 %v2575, -1.4531521
        %v2592 = vadd.f32 %v2576, -1.4531521
        %v2593 = vadd.f32 %v2577, -1.4531521
        %v2594 = vadd.f32 %v2578, -1.4531521
        %v2595 = vadd.f32 %v2579, -1.4531521
        %v2596 = vmul.f32 %v2580, %v2338
        %v2597 = vmul.f32 %v2581, %v2353
        %v2598 = vmul.f32 %v2582, %v2368
        %v2599 = vmul.f32 %v2583, %v2383
        %v2600 = vmul.f32 %v2584, %v2398
        %v2601 = vmul.f32 %v2585, %v2413
        %v2602 = vmul.f32 %v2586, %v2428
        %v2603 = vmul.f32 %v2587, %v2443
        %v2604 = vmul.f32 %v2588, %v2458
        %v2605 = vmul.f32 %v2589, %v2473
        %v2606 = vmul.f32 %v2590, %v2488
        %v2607 = vmul.f32 %v2591, %v2503
        %v2608 = vmul.f32 %v2592, %v2518
        %v2609 = vmul.f32 %v2593, %v2533
        %v2610 = vmul.f32 %v2594, %v2548
        %v2611 = vmul.f32 %v2595, %v2563
        %v2612 = vadd.f32 %v2596, 1.4214138
        %v2613 = vadd.f32 %v2597, 1.4214138
        %v2614 = vadd.f32 %v2598, 1.4214138
        %v2615 = vadd.f32 %v2599, 1.4214138
        %v2616 = vadd.f32 %v2600, 1.4214138
        %v2617 = vadd.f32 %v2601, 1.4214138
        %v2618 = vadd.f32 %v2602, 1.4214138
        %v2619 = vadd.f32 %v2603, 1.4214138
        %v2620 = vadd.f32 %v2604, 1.4214138
        %v2621 = vadd.f32 %v2605, 1.4214138
        %v2622 = vadd.f32 %v2606, 1.4214138
        %v2623 = vadd.f32 %v2607, 1.4214138
        %v2624 = vadd.f32 %v2608, 1.4214138
        %v2625 = vadd.f32 %v2609, 1.4214138
        %v2626 = vadd.f32 %v2610, 1.4214138
        %v2627 = vadd.f32 %v2611, 1.4214138
        %v2628 = vmul.f32 %v2612, %v2338
        %v2629 = vmul.f32 %v2613, %v2353
        %v2630 = vmul.f32 %v2614, %v2368
        %v2631 = vmul.f32 %v2615, %v2383
        %v2632 = vmul.f32 %v2616, %v2398
        %v2633 = vmul.f32 %v2617, %v2413
        %v2634 = vmul.f32 %v2618, %v2428
        %v2635 = vmul.f32 %v2619, %v2443
        %v2636 = vmul.f32 %v2620, %v2458
        %v2637 = vmul.f32 %v2621, %v2473
        %v2638 = vmul.f32 %v2622, %v2488
        %v2639 = vmul.f32 %v2623, %v2503
        %v2640 = vmul.f32 %v2624, %v2518
        %v2641 = vmul.f32 %v2625, %v2533
        %v2642 = vmul.f32 %v2626, %v2548
        %v2643 = vmul.f32 %v2627, %v2563
        %v2644 = vadd.f32 %v2628, -0.28449672
        %v2645 = vadd.f32 %v2629, -0.28449672
        %v2646 = vadd.f32 %v2630, -0.28449672
        %v2647 = vadd.f32 %v2631, -0.28449672
        %v2648 = vadd.f32 %v2632, -0.28449672
        %v2649 = vadd.f32 %v2633, -0.28449672
        %v2650 = vadd.f32 %v2634, -0.28449672
        %v2651 = vadd.f32 %v2635, -0.28449672
        %v2652 = vadd.f32 %v2636, -0.28449672
        %v2653 = vadd.f32 %v2637, -0.28449672
        %v2654 = vadd.f32 %v2638, -0.28449672
        %v2655 = vadd.f32 %v2639, -0.28449672
        %v2656 = vadd.f32 %v2640, -0.28449672
        %v2657 = vadd.f32 %v2641, -0.28449672
        %v2658 = vadd.f32 %v2642, -0.28449672
        %v2659 = vadd.f32 %v2643, -0.28449672
        %v2660 = vmul.f32 %v2644, %v2338
        %v2661 = vmul.f32 %v2645, %v2353
        %v2662 = vmul.f32 %v2646, %v2368
        %v2663 = vmul.f32 %v2647, %v2383
        %v2664 = vmul.f32 %v2648, %v2398
        %v2665 = vmul.f32 %v2649, %v2413
        %v2666 = vmul.f32 %v2650, %v2428
        %v2667 = vmul.f32 %v2651, %v2443
        %v2668 = vmul.f32 %v2652, %v2458
        %v2669 = vmul.f32 %v2653, %v2473
        %v2670 = vmul.f32 %v2654, %v2488
        %v2671 = vmul.f32 %v2655, %v2503
        %v2672 = vmul.f32 %v2656, %v2518
        %v2673 = vmul.f32 %v2657, %v2533
        %v2674 = vmul.f32 %v2658, %v2548
        %v2675 = vmul.f32 %v2659, %v2563
        %v2676 = vadd.f32 %v2660, 0.2548296
        %v2677 = vadd.f32 %v2661, 0.2548296
        %v2678 = vadd.f32 %v2662, 0.2548296
        %v2679 = vadd.f32 %v2663, 0.2548296
        %v2680 = vadd.f32 %v2664, 0.2548296
        %v2681 = vadd.f32 %v2665, 0.2548296
        %v2682 = vadd.f32 %v2666, 0.2548296
        %v2683 = vadd.f32 %v2667, 0.2548296
        %v2684 = vadd.f32 %v2668, 0.2548296
        %v2685 = vadd.f32 %v2669, 0.2548296
        %v2686 = vadd.f32 %v2670, 0.2548296
        %v2687 = vadd.f32 %v2671, 0.2548296
        %v2688 = vadd.f32 %v2672, 0.2548296
        %v2689 = vadd.f32 %v2673, 0.2548296
        %v2690 = vadd.f32 %v2674, 0.2548296
        %v2691 = vadd.f32 %v2675, 0.2548296
        %v2692 = vmul.f32 %v2676, %v2338
        %v2693 = vmul.f32 %v2677, %v2353
        %v2694 = vmul.f32 %v2678, %v2368
        %v2695 = vmul.f32 %v2679, %v2383
        %v2696 = vmul.f32 %v2680, %v2398
        %v2697 = vmul.f32 %v2681, %v2413
        %v2698 = vmul.f32 %v2682, %v2428
        %v2699 = vmul.f32 %v2683, %v2443
        %v2700 = vmul.f32 %v2684, %v2458
        %v2701 = vmul.f32 %v2685, %v2473
        %v2702 = vmul.f32 %v2686, %v2488
        %v2703 = vmul.f32 %v2687, %v2503
        %v2704 = vmul.f32 %v2688, %v2518
        %v2705 = vmul.f32 %v2689, %v2533
        %v2706 = vmul.f32 %v2690, %v2548
        %v2707 = vmul.f32 %v2691, %v2563
        %v2708 = vsub.f32 0.0, %v2276
        %v2709 = vsub.f32 0.0, %v2277
        %v2710 = vsub.f32 0.0, %v2278
        %v2711 = vsub.f32 0.0, %v2279
        %v2712 = vsub.f32 0.0, %v2280
        %v2713 = vsub.f32 0.0, %v2281
        %v2714 = vsub.f32 0.0, %v2282
        %v2715 = vsub.f32 0.0, %v2283
        %v2716 = vsub.f32 0.0, %v2284
        %v2717 = vsub.f32 0.0, %v2285
        %v2718 = vsub.f32 0.0, %v2286
        %v2719 = vsub.f32 0.0, %v2287
        %v2720 = vsub.f32 0.0, %v2288
        %v2721 = vsub.f32 0.0, %v2289
        %v2722 = vsub.f32 0.0, %v2290
        %v2723 = vsub.f32 0.0, %v2291
        %v2724 = vmul.f32 %v2708, %v2276
        %v2725 = vmul.f32 %v2709, %v2277
        %v2726 = vmul.f32 %v2710, %v2278
        %v2727 = vmul.f32 %v2711, %v2279
        %v2728 = vmul.f32 %v2712, %v2280
        %v2729 = vmul.f32 %v2713, %v2281
        %v2730 = vmul.f32 %v2714, %v2282
        %v2731 = vmul.f32 %v2715, %v2283
        %v2732 = vmul.f32 %v2716, %v2284
        %v2733 = vmul.f32 %v2717, %v2285
        %v2734 = vmul.f32 %v2718, %v2286
        %v2735 = vmul.f32 %v2719, %v2287
        %v2736 = vmul.f32 %v2720, %v2288
        %v2737 = vmul.f32 %v2721, %v2289
        %v2738 = vmul.f32 %v2722, %v2290
        %v2739 = vmul.f32 %v2723, %v2291
        %v2740 = vmul.f32 %v2724, 1.442695
        %v2741 = vpow.pop %v2740
        %v2742 = vmul.f32 %v2725, 1.442695
        %v2743 = vpow.pop %v2742
        %v2744 = vmul.f32 %v2726, 1.442695
        %v2745 = vpow.pop %v2744
        %v2746 = vmul.f32 %v2727, 1.442695
        %v2747 = vpow.pop %v2746
        %v2748 = vmul.f32 %v2728, 1.442695
        %v2749 = vpow.pop %v2748
        %v2750 = vmul.f32 %v2729, 1.442695
        %v2751 = vpow.pop %v2750
        %v2752 = vmul.f32 %v2730, 1.442695
        %v2753 = vpow.pop %v2752
        %v2754 = vmul.f32 %v2731, 1.442695
        %v2755 = vpow.pop %v2754
        %v2756 = vmul.f32 %v2732, 1.442695
        %v2757 = vpow.pop %v2756
        %v2758 = vmul.f32 %v2733, 1.442695
        %v2759 = vpow.pop %v2758
        %v2760 = vmul.f32 %v2734, 1.442695
        %v2761 = vpow.pop %v2760
        %v2762 = vmul.f32 %v2735, 1.442695
        %v2763 = vpow.pop %v2762
        %v2764 = vmul.f32 %v2736, 1.442695
        %v2765 = vpow.pop %v2764
        %v2766 = vmul.f32 %v2737, 1.442695
        %v2767 = vpow.pop %v2766
        %v2768 = vmul.f32 %v2738, 1.442695
        %v2769 = vpow.pop %v2768
        %v2770 = vmul.f32 %v2739, 1.442695
        %v2771 = vpow.pop %v2770
        %v2772 = vmul.f32 %v2692, %v2741
        %v2773 = vmul.f32 %v2693, %v2743
        %v2774 = vmul.f32 %v2694, %v2745
        %v2775 = vmul.f32 %v2695, %v2747
        %v2776 = vmul.f32 %v2696, %v2749
        %v2777 = vmul.f32 %v2697, %v2751
        %v2778 = vmul.f32 %v2698, %v2753
        %v2779 = vmul.f32 %v2699, %v2755
        %v2780 = vmul.f32 %v2700, %v2757
        %v2781 = vmul.f32 %v2701, %v2759
        %v2782 = vmul.f32 %v2702, %v2761
        %v2783 = vmul.f32 %v2703, %v2763
        %v2784 = vmul.f32 %v2704, %v2765
        %v2785 = vmul.f32 %v2705, %v2767
        %v2786 = vmul.f32 %v2706, %v2769
        %v2787 = vmul.f32 %v2707, %v2771
        %v2788 = vsub.f32 1.0, %v2772
        %v2789 = vsub.f32 1.0, %v2773
        %v2790 = vsub.f32 1.0, %v2774
        %v2791 = vsub.f32 1.0, %v2775
        %v2792 = vsub.f32 1.0, %v2776
        %v2793 = vsub.f32 1.0, %v2777
        %v2794 = vsub.f32 1.0, %v2778
        %v2795 = vsub.f32 1.0, %v2779
        %v2796 = vsub.f32 1.0, %v2780
        %v2797 = vsub.f32 1.0, %v2781
        %v2798 = vsub.f32 1.0, %v2782
        %v2799 = vsub.f32 1.0, %v2783
        %v2800 = vsub.f32 1.0, %v2784
        %v2801 = vsub.f32 1.0, %v2785
        %v2802 = vsub.f32 1.0, %v2786
        %v2803 = vsub.f32 1.0, %v2787
        %v2804 = vmul.f32 %v2260, %v2788
        %v2805 = vmul.f32 %v2261, %v2789
        %v2806 = vmul.f32 %v2262, %v2790
        %v2807 = vmul.f32 %v2263, %v2791
        %v2808 = vmul.f32 %v2264, %v2792
        %v2809 = vmul.f32 %v2265, %v2793
        %v2810 = vmul.f32 %v2266, %v2794
        %v2811 = vmul.f32 %v2267, %v2795
        %v2812 = vmul.f32 %v2268, %v2796
        %v2813 = vmul.f32 %v2269, %v2797
        %v2814 = vmul.f32 %v2270, %v2798
        %v2815 = vmul.f32 %v2271, %v2799
        %v2816 = vmul.f32 %v2272, %v2800
        %v2817 = vmul.f32 %v2273, %v2801
        %v2818 = vmul.f32 %v2274, %v2802
        %v2819 = vmul.f32 %v2275, %v2803
        %v2820 = vadd.f32 %v2804, 1.0
        %v2821 = vadd.f32 %v2805, 1.0
        %v2822 = vadd.f32 %v2806, 1.0
        %v2823 = vadd.f32 %v2807, 1.0
        %v2824 = vadd.f32 %v2808, 1.0
        %v2825 = vadd.f32 %v2809, 1.0
        %v2826 = vadd.f32 %v2810, 1.0
        %v2827 = vadd.f32 %v2811, 1.0
        %v2828 = vadd.f32 %v2812, 1.0
        %v2829 = vadd.f32 %v2813, 1.0
        %v2830 = vadd.f32 %v2814, 1.0
        %v2831 = vadd.f32 %v2815, 1.0
        %v2832 = vadd.f32 %v2816, 1.0
        %v2833 = vadd.f32 %v2817, 1.0
        %v2834 = vadd.f32 %v2818, 1.0
        %v2835 = vadd.f32 %v2819, 1.0
        %v2836 = vmul.f32 %v2212, %v2820
        %v2837 = vmul.f32 %v2213, %v2821
        %v2838 = vmul.f32 %v2214, %v2822
        %v2839 = vmul.f32 %v2215, %v2823
        %v2840 = vmul.f32 %v2216, %v2824
        %v2841 = vmul.f32 %v2217, %v2825
        %v2842 = vmul.f32 %v2218, %v2826
        %v2843 = vmul.f32 %v2219, %v2827
        %v2844 = vmul.f32 %v2220, %v2828
        %v2845 = vmul.f32 %v2221, %v2829
        %v2846 = vmul.f32 %v2222, %v2830
        %v2847 = vmul.f32 %v2223, %v2831
        %v2848 = vmul.f32 %v2224, %v2832
        %v2849 = vmul.f32 %v2225, %v2833
        %v2850 = vmul.f32 %v2226, %v2834
        %v2851 = vmul.f32 %v2227, %v2835
        %v2852 = vpack.c.bf16 %v2840, %v2836
        %v2853 = vpack.c.bf16 %v2841, %v2837
        %v2854 = vpack.c.bf16 %v2842, %v2838
        %v2855 = vpack.c.bf16 %v2843, %v2839
        %v2856 = vpack.c.bf16 %v2848, %v2844
        %v2857 = vpack.c.bf16 %v2849, %v2845
        %v2858 = vpack.c.bf16 %v2850, %v2846
        %v2859 = vpack.c.bf16 %v2851, %v2847
        %v2860 = vld [vmem:[%s607] sm:$0xf]
        %v2861 = vld [vmem:[%s607 + $0x4] sm:$0xf]
        %v2862 = vld [vmem:[%s607 + $0x8] sm:$0xf]
        %v2863 = vld [vmem:[%s607 + $0xc] sm:$0xf]
        %v2864 = vld [vmem:[%s607 + $0x10] sm:$0xf]
        %v2865 = vld [vmem:[%s607 + $0x14] sm:$0xf]
        %v2866 = vld [vmem:[%s607 + $0x18] sm:$0xf]
        %v2867 = vld [vmem:[%s607 + $0x1c] sm:$0xf]
        %v2868 = vld [vmem:[%s607 + $0x20] sm:$0xf]
        %v2869 = vld [vmem:[%s607 + $0x24] sm:$0xf]
        %v2870 = vld [vmem:[%s607 + $0x28] sm:$0xf]
        %v2871 = vld [vmem:[%s607 + $0x2c] sm:$0xf]
        %v2872 = vld [vmem:[%s607 + $0x30] sm:$0xf]
        %v2873 = vld [vmem:[%s607 + $0x34] sm:$0xf]
        %v2874 = vld [vmem:[%s607 + $0x38] sm:$0xf]
        %v2875 = vld [vmem:[%s607 + $0x3c] sm:$0xf]
        %v2876 = vld [vmem:[%s607 + $0x40] sm:$0xf]
        %v2877 = vld [vmem:[%s607 + $0x44] sm:$0xf]
        %v2878 = vld [vmem:[%s607 + $0x48] sm:$0xf]
        %v2879 = vld [vmem:[%s607 + $0x4c] sm:$0xf]
        %v2880 = vld [vmem:[%s607 + $0x50] sm:$0xf]
        %v2881 = vld [vmem:[%s607 + $0x54] sm:$0xf]
        %v2882 = vld [vmem:[%s607 + $0x58] sm:$0xf]
        %v2883 = vld [vmem:[%s607 + $0x5c] sm:$0xf]
        %v2884 = vld [vmem:[%s607 + $0x60] sm:$0xf]
        %v2885 = vld [vmem:[%s607 + $0x64] sm:$0xf]
        %v2886 = vld [vmem:[%s607 + $0x68] sm:$0xf]
        %v2887 = vld [vmem:[%s607 + $0x6c] sm:$0xf]
        %v2888 = vld [vmem:[%s607 + $0x70] sm:$0xf]
        %v2889 = vld [vmem:[%s607 + $0x74] sm:$0xf]
        %v2890 = vld [vmem:[%s607 + $0x78] sm:$0xf]
        %v2891 = vld [vmem:[%s607 + $0x7c] sm:$0xf]
        %v2892 = vld [vmem:[%s607 + $0x80] sm:$0xf]
        %v2893 = vld [vmem:[%s607 + $0x84] sm:$0xf]
        %v2894 = vld [vmem:[%s607 + $0x88] sm:$0xf]
        %v2895 = vld [vmem:[%s607 + $0x8c] sm:$0xf]
        %v2896 = vld [vmem:[%s607 + $0x90] sm:$0xf]
        %v2897 = vld [vmem:[%s607 + $0x94] sm:$0xf]
        %v2898 = vld [vmem:[%s607 + $0x98] sm:$0xf]
        %v2899 = vld [vmem:[%s607 + $0x9c] sm:$0xf]
        %v2900 = vld [vmem:[%s607 + $0xa0] sm:$0xf]
        %v2901 = vld [vmem:[%s607 + $0xa4] sm:$0xf]
        %v2902 = vld [vmem:[%s607 + $0xa8] sm:$0xf]
        %v2903 = vld [vmem:[%s607 + $0xac] sm:$0xf]
        %v2904 = vld [vmem:[%s607 + $0xb0] sm:$0xf]
        %v2905 = vld [vmem:[%s607 + $0xb4] sm:$0xf]
        %v2906 = vld [vmem:[%s607 + $0xb8] sm:$0xf]
        %v2907 = vld [vmem:[%s607 + $0xbc] sm:$0xf]
        %v2908 = vld [vmem:[%s607 + $0xc0] sm:$0xf]
        %v2909 = vld [vmem:[%s607 + $0xc4] sm:$0xf]
        %v2910 = vld [vmem:[%s607 + $0xc8] sm:$0xf]
        %v2911 = vld [vmem:[%s607 + $0xcc] sm:$0xf]
        %v2912 = vld [vmem:[%s607 + $0xd0] sm:$0xf]
        %v2913 = vld [vmem:[%s607 + $0xd4] sm:$0xf]
        %v2914 = vld [vmem:[%s607 + $0xd8] sm:$0xf]
        %v2915 = vld [vmem:[%s607 + $0xdc] sm:$0xf]
        %v2916 = vld [vmem:[%s607 + $0xe0] sm:$0xf]
        %v2917 = vld [vmem:[%s607 + $0xe4] sm:$0xf]
        %v2918 = vld [vmem:[%s607 + $0xe8] sm:$0xf]
        %v2919 = vld [vmem:[%s607 + $0xec] sm:$0xf]
        %v2920 = vld [vmem:[%s607 + $0xf0] sm:$0xf]
        %v2921 = vld [vmem:[%s607 + $0xf4] sm:$0xf]
        %v2922 = vld [vmem:[%s607 + $0xf8] sm:$0xf]
        %v2923 = vld [vmem:[%s607 + $0xfc] sm:$0xf]
        %v2924 = vld [vmem:[%s722] sm:$0x1]
        %v2926 = vperm.slane %v2924, 0
        %v2992 = vunpack.c.l.b16 %v2860
        %v2993 = vunpack.c.l.b16 %v2861
        %v2994 = vunpack.c.l.b16 %v2862
        %v2995 = vunpack.c.l.b16 %v2863
        %v2996 = vunpack.c.l.b16 %v2864
        %v2997 = vunpack.c.l.b16 %v2865
        %v2998 = vunpack.c.l.b16 %v2866
        %v2999 = vunpack.c.l.b16 %v2867
        %v3000 = vunpack.c.l.b16 %v2868
        %v3001 = vunpack.c.l.b16 %v2869
        %v3002 = vunpack.c.l.b16 %v2870
        %v3003 = vunpack.c.l.b16 %v2871
        %v3004 = vunpack.c.l.b16 %v2872
        %v3005 = vunpack.c.l.b16 %v2873
        %v3006 = vunpack.c.l.b16 %v2874
        %v3007 = vunpack.c.l.b16 %v2875
        %v3008 = vunpack.c.l.b16 %v2876
        %v3009 = vunpack.c.l.b16 %v2877
        %v3010 = vunpack.c.l.b16 %v2878
        %v3011 = vunpack.c.l.b16 %v2879
        %v3012 = vunpack.c.l.b16 %v2880
        %v3013 = vunpack.c.l.b16 %v2881
        %v3014 = vunpack.c.l.b16 %v2882
        %v3015 = vunpack.c.l.b16 %v2883
        %v3016 = vunpack.c.l.b16 %v2884
        %v3017 = vunpack.c.l.b16 %v2885
        %v3018 = vunpack.c.l.b16 %v2886
        %v3019 = vunpack.c.l.b16 %v2887
        %v3020 = vunpack.c.l.b16 %v2888
        %v3021 = vunpack.c.l.b16 %v2889
        %v3022 = vunpack.c.l.b16 %v2890
        %v3023 = vunpack.c.l.b16 %v2891
        %v3024 = vunpack.c.l.b16 %v2892
        %v3025 = vunpack.c.l.b16 %v2893
        %v3026 = vunpack.c.l.b16 %v2894
        %v3027 = vunpack.c.l.b16 %v2895
        %v3028 = vunpack.c.l.b16 %v2896
        %v3029 = vunpack.c.l.b16 %v2897
        %v3030 = vunpack.c.l.b16 %v2898
        %v3031 = vunpack.c.l.b16 %v2899
        %v3032 = vunpack.c.l.b16 %v2900
        %v3033 = vunpack.c.l.b16 %v2901
        %v3034 = vunpack.c.l.b16 %v2902
        %v3035 = vunpack.c.l.b16 %v2903
        %v3036 = vunpack.c.l.b16 %v2904
        %v3037 = vunpack.c.l.b16 %v2905
        %v3038 = vunpack.c.l.b16 %v2906
        %v3039 = vunpack.c.l.b16 %v2907
        %v3040 = vunpack.c.l.b16 %v2908
        %v3041 = vunpack.c.l.b16 %v2909
        %v3042 = vunpack.c.l.b16 %v2910
        %v3043 = vunpack.c.l.b16 %v2911
        %v3044 = vunpack.c.l.b16 %v2912
        %v3045 = vunpack.c.l.b16 %v2913
        %v3046 = vunpack.c.l.b16 %v2914
        %v3047 = vunpack.c.l.b16 %v2915
        %v3048 = vunpack.c.l.b16 %v2916
        %v3049 = vunpack.c.l.b16 %v2917
        %v3050 = vunpack.c.l.b16 %v2918
        %v3051 = vunpack.c.l.b16 %v2919
        %v3052 = vunpack.c.l.b16 %v2920
        %v3053 = vunpack.c.l.b16 %v2921
        %v3054 = vunpack.c.l.b16 %v2922
        %v3055 = vunpack.c.l.b16 %v2923
        %v3056 = vpack.c.b16 %v2993, %v2992
        %v3057 = vpack.c.b16 %v2995, %v2994
        %v3058 = vpack.c.b16 %v2997, %v2996
        %v3059 = vpack.c.b16 %v2999, %v2998
        %v3060 = vpack.c.b16 %v3001, %v3000
        %v3061 = vpack.c.b16 %v3003, %v3002
        %v3062 = vpack.c.b16 %v3005, %v3004
        %v3063 = vpack.c.b16 %v3007, %v3006
        %v3064 = vpack.c.b16 %v3009, %v3008
        %v3065 = vpack.c.b16 %v3011, %v3010
        %v3066 = vpack.c.b16 %v3013, %v3012
        %v3067 = vpack.c.b16 %v3015, %v3014
        %v3068 = vpack.c.b16 %v3017, %v3016
        %v3069 = vpack.c.b16 %v3019, %v3018
        %v3070 = vpack.c.b16 %v3021, %v3020
        %v3071 = vpack.c.b16 %v3023, %v3022
        %v3072 = vpack.c.b16 %v3025, %v3024
        %v3073 = vpack.c.b16 %v3027, %v3026
        %v3074 = vpack.c.b16 %v3029, %v3028
        %v3075 = vpack.c.b16 %v3031, %v3030
        %v3076 = vpack.c.b16 %v3033, %v3032
        %v3077 = vpack.c.b16 %v3035, %v3034
        %v3078 = vpack.c.b16 %v3037, %v3036
        %v3079 = vpack.c.b16 %v3039, %v3038
        %v3080 = vpack.c.b16 %v3041, %v3040
        %v3081 = vpack.c.b16 %v3043, %v3042
        %v3082 = vpack.c.b16 %v3045, %v3044
        %v3083 = vpack.c.b16 %v3047, %v3046
        %v3084 = vpack.c.b16 %v3049, %v3048
        %v3085 = vpack.c.b16 %v3051, %v3050
        %v3086 = vpack.c.b16 %v3053, %v3052
        %v3087 = vpack.c.b16 %v3055, %v3054
        %3120 = vmatpush.bf16.msra.mxu0 %v3063
        %3121 = vmatpush.bf16.msra.mxu0 %v3062
        %3122 = vmatpush.bf16.msra.mxu0 %v3061
        %3123 = vmatpush.bf16.msra.mxu0 %v3060
        %3124 = vmatpush.bf16.msra.mxu0 %v3059
        %3125 = vmatpush.bf16.msra.mxu0 %v3058
        %3126 = vmatpush.bf16.msra.mxu0 %v3057
        %3127 = vmatpush.bf16.msra.mxu0 %v3056
        %3128 = vmatmul.bf16.gmra.mxu0 %v2852
        %v3129 = vpop.f32.mrf.mxu0
        %v3130 = vadd.f32 %v2926, %v3129
        %v3131 = vpop.f32.mrf.mxu0
        %v3132 = vadd.f32 %v2926, %v3131
        %3133 = vmatmul.bf16.gmra.mxu0 %v2856
        %v3134 = vpop.f32.mrf.mxu0
        %v3135 = vadd.f32 %v2926, %v3134
        %v3136 = vpop.f32.mrf.mxu0
        %v3137 = vadd.f32 %v2926, %v3136
        %3138 = vdwg.mxu0
        %3139 = vmatpush.bf16.msra.mxu0 %v3071
        %3140 = vmatpush.bf16.msra.mxu0 %v3070
        %3141 = vmatpush.bf16.msra.mxu0 %v3069
        %3142 = vmatpush.bf16.msra.mxu0 %v3068
        %3143 = vmatpush.bf16.msra.mxu0 %v3067
        %3144 = vmatpush.bf16.msra.mxu0 %v3066
        %3145 = vmatpush.bf16.msra.mxu0 %v3065
        %3146 = vmatpush.bf16.msra.mxu0 %v3064
        %3147 = vmatmul.bf16.gmra.mxu0 %v2853
        %v3148 = vpop.f32.mrf.mxu0
        %v3149 = vadd.f32 %v3130, %v3148
        %v3150 = vpop.f32.mrf.mxu0
        %v3151 = vadd.f32 %v3132, %v3150
        %3152 = vmatmul.bf16.gmra.mxu0 %v2857
        %v3153 = vpop.f32.mrf.mxu0
        %v3154 = vadd.f32 %v3135, %v3153
        %v3155 = vpop.f32.mrf.mxu0
        %v3156 = vadd.f32 %v3137, %v3155
        %3157 = vdwg.mxu0
        %3158 = vmatpush.bf16.msra.mxu0 %v3079
        %3159 = vmatpush.bf16.msra.mxu0 %v3078
        %3160 = vmatpush.bf16.msra.mxu0 %v3077
        %3161 = vmatpush.bf16.msra.mxu0 %v3076
        %3162 = vmatpush.bf16.msra.mxu0 %v3075
        %3163 = vmatpush.bf16.msra.mxu0 %v3074
        %3164 = vmatpush.bf16.msra.mxu0 %v3073
        %3165 = vmatpush.bf16.msra.mxu0 %v3072
        %3166 = vmatmul.bf16.gmra.mxu0 %v2854
        %v3167 = vpop.f32.mrf.mxu0
        %v3168 = vadd.f32 %v3149, %v3167
        %v3169 = vpop.f32.mrf.mxu0
        %v3170 = vadd.f32 %v3151, %v3169
        %3171 = vmatmul.bf16.gmra.mxu0 %v2858
        %v3172 = vpop.f32.mrf.mxu0
        %v3173 = vadd.f32 %v3154, %v3172
        %v3174 = vpop.f32.mrf.mxu0
        %v3175 = vadd.f32 %v3156, %v3174
        %3176 = vdwg.mxu0
        %3177 = vmatpush.bf16.msra.mxu0 %v3087
        %3178 = vmatpush.bf16.msra.mxu0 %v3086
        %3179 = vmatpush.bf16.msra.mxu0 %v3085
        %3180 = vmatpush.bf16.msra.mxu0 %v3084
        %3181 = vmatpush.bf16.msra.mxu0 %v3083
        %3182 = vmatpush.bf16.msra.mxu0 %v3082
        %3183 = vmatpush.bf16.msra.mxu0 %v3081
        %3184 = vmatpush.bf16.msra.mxu0 %v3080
        %3185 = vmatmul.bf16.gmra.mxu0 %v2855
        %v3186 = vpop.f32.mrf.mxu0
        %v3187 = vadd.f32 %v3168, %v3186
        %v3188 = vpop.f32.mrf.mxu0
        %v3189 = vadd.f32 %v3170, %v3188
        %3190 = vmatmul.bf16.gmra.mxu0 %v2859
        %v3191 = vpop.f32.mrf.mxu0
        %v3192 = vadd.f32 %v3173, %v3191
        %v3193 = vpop.f32.mrf.mxu0
        %v3194 = vadd.f32 %v3175, %v3193
        %3195 = vdwg.mxu0
        %v3196 = vadd.f32 %v1928, %v3187
        %v3197 = vadd.f32 %v1929, %v3189
        %v3198 = vadd.f32 %v1930, %v3192
        %v3199 = vadd.f32 %v1931, %v3194
        %v3200 = vld [vmem:[%s725] sm:$0x1]
        %v3201 = vld [vmem:[%s728] sm:$0x1]
        %3202 = vadd.xlane.f32.xlu0 %v3196
        %v3203 = vpop.xlane.xlu0 %3202
        %3204 = vadd.xlane.f32.xlu0 %v3197
        %v3205 = vpop.xlane.xlu0 %3204
        %3206 = vadd.xlane.f32.xlu0 %v3198
        %v3207 = vpop.xlane.xlu0 %3206
        %3208 = vadd.xlane.f32.xlu0 %v3199
        %v3209 = vpop.xlane.xlu0 %3208
        %v3210 = vmul.f32 %v3203, %v1845
        %v3211 = vmul.f32 %v3205, %v1845
        %v3212 = vmul.f32 %v3207, %v1845
        %v3213 = vmul.f32 %v3209, %v1845
        %v3214 = vsub.f32 %v3196, %v3210
        %v3215 = vsub.f32 %v3197, %v3211
        %v3216 = vsub.f32 %v3198, %v3212
        %v3217 = vsub.f32 %v3199, %v3213
        %v3218 = vmul.f32 %v3214, %v3214
        %v3219 = vmul.f32 %v3215, %v3215
        %v3220 = vmul.f32 %v3216, %v3216
        %v3221 = vmul.f32 %v3217, %v3217
        %3222 = vadd.xlane.f32.xlu0 %v3218
        %v3223 = vpop.xlane.xlu0 %3222
        %3224 = vadd.xlane.f32.xlu0 %v3219
        %v3225 = vpop.xlane.xlu0 %3224
        %3226 = vadd.xlane.f32.xlu0 %v3220
        %v3227 = vpop.xlane.xlu0 %3226
        %3228 = vadd.xlane.f32.xlu0 %v3221
        %v3229 = vpop.xlane.xlu0 %3228
        %v3230 = vmul.f32 %v3223, %v1845
        %v3231 = vmul.f32 %v3225, %v1845
        %v3232 = vmul.f32 %v3227, %v1845
        %v3233 = vmul.f32 %v3229, %v1845
        %v3234 = vadd.f32 %v3230, 1e-12
        %v3235 = vadd.f32 %v3231, 1e-12
        %v3236 = vadd.f32 %v3232, 1e-12
        %v3237 = vadd.f32 %v3233, 1e-12
        %v3238 = vrsqrt.pop %v3234
        %v3239 = vmul.f32 %v3238, %v3234
        %v3240 = vmul.f32 %v3239, %v3238
        %v3241 = vmul.f32 0.5, %v3240
        %v3242 = vsub.f32 1.5, %v3241
        %v3243 = vmul.f32 %v3238, %v3242
        %vm3244 = vweird.f32 %v3234
        %vm3245 = vweird.f32 %v3238
        %vm3246 = vmor %vm3244, %vm3245
        %v3247 = vsel %vm3246, %v3238, %v3243
        %v3248 = vrsqrt.pop %v3235
        %v3249 = vmul.f32 %v3248, %v3235
        %v3250 = vmul.f32 %v3249, %v3248
        %v3251 = vmul.f32 0.5, %v3250
        %v3252 = vsub.f32 1.5, %v3251
        %v3253 = vmul.f32 %v3248, %v3252
        %vm3254 = vweird.f32 %v3235
        %vm3255 = vweird.f32 %v3248
        %vm3256 = vmor %vm3254, %vm3255
        %v3257 = vsel %vm3256, %v3248, %v3253
        %v3258 = vrsqrt.pop %v3236
        %v3259 = vmul.f32 %v3258, %v3236
        %v3260 = vmul.f32 %v3259, %v3258
        %v3261 = vmul.f32 0.5, %v3260
        %v3262 = vsub.f32 1.5, %v3261
        %v3263 = vmul.f32 %v3258, %v3262
        %vm3264 = vweird.f32 %v3236
        %vm3265 = vweird.f32 %v3258
        %vm3266 = vmor %vm3264, %vm3265
        %v3267 = vsel %vm3266, %v3258, %v3263
        %v3268 = vrsqrt.pop %v3237
        %v3269 = vmul.f32 %v3268, %v3237
        %v3270 = vmul.f32 %v3269, %v3268
        %v3271 = vmul.f32 0.5, %v3270
        %v3272 = vsub.f32 1.5, %v3271
        %v3273 = vmul.f32 %v3268, %v3272
        %vm3274 = vweird.f32 %v3237
        %vm3275 = vweird.f32 %v3268
        %vm3276 = vmor %vm3274, %vm3275
        %v3277 = vsel %vm3276, %v3268, %v3273
        %v3278 = vmul.f32 %v3214, %v3247
        %v3279 = vmul.f32 %v3215, %v3257
        %v3280 = vmul.f32 %v3216, %v3267
        %v3281 = vmul.f32 %v3217, %v3277
        %v3283 = vperm.slane %v3200, 0
        %v3285 = vmul.f32 %v3278, %v3283
        %v3286 = vmul.f32 %v3279, %v3283
        %v3287 = vmul.f32 %v3280, %v3283
        %v3288 = vmul.f32 %v3281, %v3283
        %v3290 = vperm.slane %v3201, 0
        %v3292 = vadd.f32 %v3285, %v3290
        %v3293 = vadd.f32 %v3286, %v3290
        %v3294 = vadd.f32 %v3287, %v3290
        %v3295 = vadd.f32 %v3288, %v3290
        %3296 = vst [vmem:[%s16] sm:$0xff] %v3292
        %3297 = vst [vmem:[%s16 + $0x8] sm:$0xff] %v3293
        %3298 = vst [vmem:[%s16 + $0x10] sm:$0xff] %v3294
        %3299 = vst [vmem:[%s16 + $0x18] sm:$0xff] %v3295
        // Predicated region
        $region97: #{_lambda_.2} parent=83 // pred_check
          %p3300 = pneg %p442
        $region98: #{_lambda_.2} parent=83 // pred_check_branch
          %3302 = sbr.rel (%p3300) target = $region100
        $region99: #{_lambda_.2} parent=83 // pred_region
          _
        $region100: #{_lambda_.2} parent=83 // pred_fallthru
          _
        // Predicated region
        $region101: #{_lambda_.2} parent=83 // pred_check
          %p3303 = pneg %p442
        $region102: #{_lambda_.2} parent=83 // pred_check_branch
          %3305 = sbr.rel (%p3303) target = $region104
        $region103: #{_lambda_.2} parent=83 // pred_region
          _
        $region104: #{_lambda_.2} parent=83 // pred_fallthru
          _
      $region84: #{_lambda_.2} parent=5 // pred_fallthru
        _
      %p3306 = scmp.le.s32.totalorder 2, %s28
      // Predicated region
      $region105: #{_lambda_.2} parent=5 // pred_check
        %p3307 = pneg %p3306
      $region106: #{_lambda_.2} parent=5 // pred_check_branch
        %3309 = sbr.rel (%p3307) target = $region108
      $region107: #{_lambda_.2} parent=5 // pred_region
        %s3310 = ssub.s32 %s28, 2
      $region108: #{_lambda_.2} parent=5 // pred_fallthru
        _
    $region6: #{_lambda_.2} parent=1 // loop_footer
      %s32 = sadd.s32 1, %s28
    $region7: #{_lambda_.2} parent=1 // loop_footer_branch
      %27 = sbr.rel target = $region3
    $region8: #{_lambda_.2} parent=1 // loop_exit
      _
    %3311 = vsyncpa [#allocation5], 1
    %s3312 = scalar_lea.sflag [#allocation5], 1
    %3313 = vsyncpa %s3312, 1
    %3314 = vsyncpa [#allocation7], 1
    %s3315 = scalar_lea.sflag [#allocation7], 1
    %3316 = vsyncpa %s3315, 1

</llo_original>
